<compile_context>
chip_gen: v7x
topology: tpu7x:2x2x1
jax: 0.10.0
libtpu: 0.0.40
codegen_flags: <defaults>
</compile_context>

<pallas_src>
import functools

import jax
import jax.numpy as jnp
from jax.experimental import pallas as pl
from jax.experimental.pallas import tpu as pltpu

# ---------------- static configuration (SPD defaults) ----------------
DIM_FEAT = 512
UP_FACTOR = 2
I_STEP = 0
RADIUS = 1
BOUNDING = True
GLOBAL_FEAT = True
POINT_DIM = 4
PS_DIM = 32 if GLOBAL_FEAT else 64
ST_DIM = 64            # SkipTransformer internal dim
N_KNN = 16
ATTN_HIDDEN = ST_DIM * 4
F32 = jnp.float32
BF16 = jnp.bfloat16


# ---------------- small helpers ----------------
def _wspec(shape):
    """Whole-array (weight/bias) spec, constant across the grid (stays VMEM-resident)."""
    nd = len(shape)
    return pl.BlockSpec(shape, lambda *_: (0,) * nd)


def _mm(a, w):
    """MXU matmul: bf16 operands, f32 accumulation."""
    return jnp.dot(a.astype(BF16), w.astype(BF16), preferred_element_type=F32)


def _tile(n):
    """Largest point-tile dividing n (second-minor must be /8 or full dim)."""
    for t in (128, 64, 32, 16, 8):
        if n % t == 0:
            return t
    return n


# ---------------- kernel 1: fused prologue (per batch) ----------------
def _prologue_kernel(*refs, has_kprev):
    val_out, keyf_out, qf_out, vf_out = refs[-4:]
    ins = refs[:-4]
    x_ref, fg_ref = ins[0], ins[1]
    kp_ref = ins[2] if has_kprev else None
    (m1_w1, m1_b1, m1_w2, m1_b2,
     m2_w1a, m2_w1b, m2_w1c, m2_b1, m2_w2, m2_b2,
     v_w1a, v_w1b, v_b1, v_w2, v_b2, v_wsa, v_wsb, v_bs,
     k_w, k_b, q_w, q_b, vv_w, vv_b) = ins[(3 if has_kprev else 2):]

    x = x_ref[0]                                            # (N, P)
    g = fg_ref[0]                                           # (1, dim_feat)

    # mlp_1
    h1 = jnp.maximum(_mm(x, m1_w1[...]) + m1_b1[...], 0.0)
    f1 = _mm(h1, m1_w2[...]) + m1_b2[...]                   # (N, 128)
    fmax = jnp.max(f1, axis=0, keepdims=True)               # (1, 128)

    # mlp_2 with the [f1 | max(f1) | feat_global] concat folded into a weight split
    h2 = jnp.maximum(_mm(f1, m2_w1a[...]) + _mm(fmax, m2_w1b[...])
                     + _mm(g, m2_w1c[...]) + m2_b1[...], 0.0)
    Q = _mm(h2, m2_w2[...]) + m2_b2[...]                    # (N, 128)

    key_in = kp_ref[0] if has_kprev else Q

    # SkipTransformer.mlp_v = MLP_Res(concat([key_in, Q])) via weight split
    hv = jnp.maximum(_mm(key_in, v_w1a[...]) + _mm(Q, v_w1b[...]) + v_b1[...], 0.0)
    value = (_mm(hv, v_w2[...]) + v_b2[...]
             + _mm(key_in, v_wsa[...]) + _mm(Q, v_wsb[...]) + v_bs[...])

    val_out[0] = value                                      # identity for conv_end
    keyf_out[0] = _mm(key_in, k_w[...]) + k_b[...]
    qf_out[0] = _mm(Q, q_w[...]) + q_b[...]
    vf_out[0] = _mm(value, vv_w[...]) + vv_b[...]


def prologue(x, fg, p, key_prev=None):
    B, N, P = x.shape
    has_kprev = key_prev is not None
    wnames = ['m1_w1', 'm1_b1', 'm1_w2', 'm1_b2',
              'm2_w1a', 'm2_w1b', 'm2_w1c', 'm2_b1', 'm2_w2', 'm2_b2',
              'v_w1a', 'v_w1b', 'v_b1', 'v_w2', 'v_b2', 'v_wsa', 'v_wsb', 'v_bs',
              'k_w', 'k_b', 'q_w', 'q_b', 'val_w', 'val_b']
    weights = [p[n] for n in wnames]
    tensors = [x, fg] + ([key_prev] if has_kprev else [])
    in_specs = ([pl.BlockSpec((1, N, P), lambda b: (b, 0, 0)),
                 pl.BlockSpec((1, 1, fg.shape[-1]), lambda b: (b, 0, 0))]
                + ([pl.BlockSpec((1, N, 128), lambda b: (b, 0, 0))] if has_kprev else [])
                + [_wspec(w.shape) for w in weights])
    out_shape = (jax.ShapeDtypeStruct((B, N, 128), F32),
                 jax.ShapeDtypeStruct((B, N, ST_DIM), F32),
                 jax.ShapeDtypeStruct((B, N, ST_DIM), F32),
                 jax.ShapeDtypeStruct((B, N, ST_DIM), F32))
    out_specs = (pl.BlockSpec((1, N, 128), lambda b: (b, 0, 0)),
                 pl.BlockSpec((1, N, ST_DIM), lambda b: (b, 0, 0)),
                 pl.BlockSpec((1, N, ST_DIM), lambda b: (b, 0, 0)),
                 pl.BlockSpec((1, N, ST_DIM), lambda b: (b, 0, 0)))
    kern = functools.partial(_prologue_kernel, has_kprev=has_kprev)
    return pl.pallas_call(
        kern,
        out_shape=out_shape,
        grid=(B,),
        in_specs=in_specs,
        out_specs=out_specs,
        compiler_params=pltpu.CompilerParams(dimension_semantics=("parallel",)),
    )(*tensors, *weights)


# ---------------- kernel 2: fused SkipTransformer attention + tail ----------------
def _attn_tail_kernel(q_ref, kg_ref, pr_ref, v_ref, idn_ref, x_ref,
                      wp1, bp1, wp2, bp2, wa1, ba1, wa2, ba2,
                      e_w, e_b, ps_w1, ps_b1, ps_w2, ps_b2, psT_w,
                      df_w1a, df_w1b, df_b1, df_w2, df_b2,
                      df_wsa, df_wsb, df_bs,
                      d_w1, d_b1, d_w2, d_b2,
                      k_out, p_out, *, tn, k, up, scale, bounding):
    d = q_ref.shape[-1]
    q = q_ref[0]                                            # (tn, d)
    v = v_ref[0]                                            # (tn, d)
    kg = kg_ref[0]                                          # (tn*k, d)
    pr = pr_ref[0]                                          # (tn*k, p)
    x = x_ref[0]                                            # (tn, pdim)
    pdim = x.shape[-1]

    # --- SkipTransformer core ---
    # pos_mlp over tn*k rows at once (fills MXU rows)
    pe = jnp.maximum(_mm(pr, wp1[...]) + bp1[...], 0.0)
    pe = _mm(pe, wp2[...]) + bp2[...]                       # (tn*k, d)
    pe3 = pe.reshape(tn, k, d)

    attn_in = q[:, None, :] - kg.reshape(tn, k, d) + pe3    # (tn, k, d)

    # attn_mlp
    h = jnp.maximum(_mm(attn_in.reshape(tn * k, d), wa1[...]) + ba1[...], 0.0)
    logits = (_mm(h, wa2[...]) + ba2[...]).reshape(tn, k, d)

    # softmax over the k neighbors (per point, per channel)
    m = jnp.max(logits, axis=1, keepdims=True)
    e = jnp.exp(logits - m)
    attn = e * pl.reciprocal(jnp.sum(e, axis=1, keepdims=True), approx=True)

    val = v[:, None, :] + pe3                               # (tn, k, d)
    agg = jnp.sum(attn * val, axis=1)                       # (tn, d)

    # --- tail ---
    # conv_end + identity residual
    H = _mm(agg, e_w[...]) + e_b[...] + idn_ref[0]          # (tn, 128)

    # mlp_ps
    fh = jnp.maximum(_mm(H, ps_w1[...]) + ps_b1[...], 0.0)
    fch = _mm(fh, ps_w2[...]) + ps_b2[...]                  # (tn, ps_dim)

    # H contribution to mlp_delta_feature (shared by all up copies)
    h_w1b = _mm(H, df_w1b[...])
    h_wsb = _mm(H, df_wsb[...])

    w1a, b1 = df_w1a[...], df_b1[...]
    w2, b2 = df_w2[...], df_b2[...]
    wsa, bs = df_wsa[...], df_bs[...]
    dw1, db1 = d_w1[...], d_b1[...]
    dw2, db2 = d_w2[...], d_b2[...]

    for r in range(up):
        # ConvTranspose1d (stride == kernel == up, no bias): output point n*up + r
        fc_r = _mm(fch, psT_w[r])                           # (tn, 128)
        # mlp_delta_feature = MLP_Res(concat([fc, H_up])) via weight split
        h_r = jnp.maximum(_mm(fc_r, w1a) + h_w1b + b1, 0.0)
        k_r = _mm(h_r, w2) + b2 + _mm(fc_r, wsa) + h_wsb + bs
        k_out[0, :, r * 128:(r + 1) * 128] = k_r
        # mlp_delta + bounded tanh + residual with upsampled pcd
        hd = jnp.maximum(_mm(jnp.maximum(k_r, 0.0), dw1) + db1, 0.0)
        delta = _mm(hd, dw2) + db2
        if bounding:
            delta = jnp.tanh(delta) * scale
        p_out[0, :, r * pdim:(r + 1) * pdim] = x + delta


def attn_tail(qf, keyg, pos_rel, vf, identity, x, p, *, up, scale, bounding):
    B, N, K, D = keyg.shape
    P = pos_rel.shape[-1]
    pdim = x.shape[-1]
    tn = _tile(N)
    kg_flat = keyg.reshape(B, N * K, D)
    pr_flat = pos_rel.reshape(B, N * K, P)
    wnames = ['p_w1', 'p_b1', 'p_w2', 'p_b2', 'a_w1', 'a_b1', 'a_w2', 'a_b2',
              'e_w', 'e_b', 'ps_w1', 'ps_b1', 'ps_w2', 'ps_b2', 'psT_w',
              'df_w1a', 'df_w1b', 'df_b1', 'df_w2', 'df_b2',
              'df_wsa', 'df_wsb', 'df_bs',
              'd_w1', 'd_b1', 'd_w2', 'd_b2']
    weights = [p[n] for n in wnames]
    out_shape = (jax.ShapeDtypeStruct((B, N, up * 128), F32),
                 jax.ShapeDtypeStruct((B, N, up * pdim), F32))
    out_specs = (pl.BlockSpec((1, tn, up * 128), lambda b, n: (b, n, 0)),
                 pl.BlockSpec((1, tn, up * pdim), lambda b, n: (b, n, 0)))
    kern = functools.partial(_attn_tail_kernel, tn=tn, k=K, up=up,
                             scale=scale, bounding=bounding)
    k_out, p_out = pl.pallas_call(
        kern,
        out_shape=out_shape,
        grid=(B, N // tn),
        in_specs=[pl.BlockSpec((1, tn, D), lambda b, n: (b, n, 0)),
                  pl.BlockSpec((1, tn * K, D), lambda b, n: (b, n, 0)),
                  pl.BlockSpec((1, tn * K, P), lambda b, n: (b, n, 0)),
                  pl.BlockSpec((1, tn, D), lambda b, n: (b, n, 0)),
                  pl.BlockSpec((1, tn, 128), lambda b, n: (b, n, 0)),
                  pl.BlockSpec((1, tn, pdim), lambda b, n: (b, n, 0))]
                 + [_wspec(w.shape) for w in weights],
        out_specs=out_specs,
        compiler_params=pltpu.CompilerParams(
            dimension_semantics=("parallel", "parallel")),
    )(qf, kg_flat, pr_flat, vf, identity, x, *weights)
    # Interleave the `up` copies: output point index = n*up + r.
    K_curr = k_out.reshape(B, N * up, 128)
    pcd_child = p_out.reshape(B, N * up, pdim)
    return pcd_child, K_curr


# ---------------- parameters (deterministic synthetic init) ----------------
def init_params(key):
    keys = iter(jax.random.split(key, 64))

    def w(shape):
        # Weights stored in bf16 (MXU operands, halves weight DMA); biases f32.
        return (jax.random.normal(next(keys), shape, F32) * 0.02).astype(BF16)

    def b(c):
        return jnp.zeros((1, c), F32)

    p = {}
    # mlp_1: point_dim -> 64 -> 128
    p['m1_w1'], p['m1_b1'] = w((POINT_DIM, 64)), b(64)
    p['m1_w2'], p['m1_b2'] = w((64, 128)), b(128)
    # mlp_2: (128 + 128 + dim_feat) -> 256 -> 128  (first weight split by concat source)
    p['m2_w1a'], p['m2_w1b'], p['m2_w1c'] = w((128, 256)), w((128, 256)), w((DIM_FEAT, 256))
    p['m2_b1'] = b(256)
    p['m2_w2'], p['m2_b2'] = w((256, 128)), b(128)
    # SkipTransformer.mlp_v : MLP_Res(256,128,128), first/shortcut weights split
    # by the concat([key, query]) source.
    p['v_w1a'], p['v_w1b'], p['v_b1'] = w((128, 128)), w((128, 128)), b(128)
    p['v_w2'], p['v_b2'] = w((128, 128)), b(128)
    p['v_wsa'], p['v_wsb'], p['v_bs'] = w((128, 128)), w((128, 128)), b(128)
    # conv_key / conv_query / conv_value : 128 -> 64
    p['k_w'], p['k_b'] = w((128, ST_DIM)), b(ST_DIM)
    p['q_w'], p['q_b'] = w((128, ST_DIM)), b(ST_DIM)
    p['val_w'], p['val_b'] = w((128, ST_DIM)), b(ST_DIM)
    # pos_mlp : point_dim -> 64 -> 64   (BN = identity at init)
    p['p_w1'], p['p_b1'] = w((POINT_DIM, 64)), b(64)
    p['p_w2'], p['p_b2'] = w((64, ST_DIM)), b(ST_DIM)
    # attn_mlp : 64 -> 256 -> 64        (BN = identity at init)
    p['a_w1'], p['a_b1'] = w((ST_DIM, ATTN_HIDDEN)), b(ATTN_HIDDEN)
    p['a_w2'], p['a_b2'] = w((ATTN_HIDDEN, ST_DIM)), b(ST_DIM)
    # conv_end : 64 -> 128
    p['e_w'], p['e_b'] = w((ST_DIM, 128)), b(128)
    # mlp_ps : 128 -> 64 -> ps_dim
    p['ps_w1'], p['ps_b1'] = w((128, 64)), b(64)
    p['ps_w2'], p['ps_b2'] = w((64, PS_DIM)), b(PS_DIM)
    # ps: ConvTranspose1d(ps_dim, 128, up, up, bias=False) stored as (up, ps_dim, 128)
    p['psT_w'] = w((UP_FACTOR, PS_DIM, 128))
    # mlp_delta_feature : MLP_Res(256,128,128), weights split by concat([fc, H_up])
    p['df_w1a'], p['df_w1b'], p['df_b1'] = w((128, 128)), w((128, 128)), b(128)
    p['df_w2'], p['df_b2'] = w((128, 128)), b(128)
    p['df_wsa'], p['df_wsb'], p['df_bs'] = w((128, 128)), w((128, 128)), b(128)
    # mlp_delta : 128 -> 64 -> point_dim
    p['d_w1'], p['d_b1'] = w((128, 64)), b(64)
    p['d_w2'], p['d_b2'] = w((64, POINT_DIM)), b(POINT_DIM)
    return p


# ---------------- SPD forward ----------------
def spd_forward(params, pcd_prev, feat_global, K_prev=None):
    """pcd_prev: (B, point_dim, N), feat_global: (B, dim_feat, 1),
       K_prev: optional (B, 128, N).
       Returns pcd_child (B, point_dim, N*up), K_curr (B, 128, N*up)."""
    B, P, N = pcd_prev.shape
    x = jnp.transpose(pcd_prev, (0, 2, 1)).astype(F32)           # (B, N, P)
    fg = jnp.transpose(feat_global, (0, 2, 1)).astype(F32)       # (B, 1, dim_feat)
    kp = (jnp.transpose(K_prev, (0, 2, 1)).astype(F32)
          if K_prev is not None else None)

    # fused: mlp_1 + global concat + mlp_2 + mlp_v + conv_{key,query,value}
    value, keyf, qf, vf = prologue(x, fg, params, key_prev=kp)
    identity = value

    # TODO(synk): kNN top-k selection + neighbor gather stay in plain JAX (no
    # robust Pallas top-k / dynamic-gather path); only the gathered (B,N,K,.)
    # tensors round-trip HBM between the prologue and attention kernels.
    sq = jnp.sum(x * x, axis=-1)
    d2 = sq[:, :, None] + sq[:, None, :] - 2.0 * jnp.einsum('bip,bjp->bij', x, x)
    _, idx = jax.lax.top_k(-d2, N_KNN)                           # (B, N, K)
    gather = jax.vmap(lambda f, ix: f[ix])
    keyg = gather(keyf, idx)                                     # (B, N, K, 64)
    posg = gather(x, idx)                                        # (B, N, K, P)
    pos_rel = x[:, :, None, :] - posg                            # (B, N, K, P)

    # fused: pos_mlp/attn_mlp/softmax/aggregate + conv_end+identity, mlp_ps,
    # ps(ConvTranspose), mlp_delta_feature, mlp_delta, bounded residual add
    scale = 1.0 / (RADIUS ** I_STEP)
    pcd_child, K_curr = attn_tail(qf, keyg, pos_rel, vf, identity, x, params,
                                  up=UP_FACTOR, scale=scale, bounding=BOUNDING)

    return (jnp.transpose(pcd_child, (0, 2, 1)),
            jnp.transpose(K_curr, (0, 2, 1)))


if __name__ == "__main__":
    key = jax.random.PRNGKey(0)
    kparam, kx, kf = jax.random.split(key, 3)
    B, N = 2, 32
    params = init_params(kparam)
    pcd_prev = jax.random.normal(kx, (B, POINT_DIM, N), F32)
    feat_global = jax.random.normal(kf, (B, DIM_FEAT, 1), F32)

    pcd_child, K_curr = spd_forward(params, pcd_prev, feat_global, K_prev=None)
    jax.block_until_ready((pcd_child, K_curr))

    assert pcd_child.shape == (B, POINT_DIM, N * UP_FACTOR), pcd_child.shape
    assert K_curr.shape == (B, 128, N * UP_FACTOR), K_curr.shape
    assert bool(jnp.isfinite(pcd_child).all()) and bool(jnp.isfinite(K_curr).all())
    print("KERNEL_OK")
</pallas_src>

<mosaic_0001>
module attributes {stable_mosaic.version = 11 : i64} {
  func.func @_prologue_kernel(%arg0: i32, %arg1: memref<1x32x4xf32, #tpu.memory_space<vmem>>, %arg2: memref<1x1x512xf32, #tpu.memory_space<vmem>>, %arg3: memref<4x64xbf16, #tpu.memory_space<vmem>>, %arg4: memref<1x64xf32, #tpu.memory_space<vmem>>, %arg5: memref<64x128xbf16, #tpu.memory_space<vmem>>, %arg6: memref<1x128xf32, #tpu.memory_space<vmem>>, %arg7: memref<128x256xbf16, #tpu.memory_space<vmem>>, %arg8: memref<128x256xbf16, #tpu.memory_space<vmem>>, %arg9: memref<512x256xbf16, #tpu.memory_space<vmem>>, %arg10: memref<1x256xf32, #tpu.memory_space<vmem>>, %arg11: memref<256x128xbf16, #tpu.memory_space<vmem>>, %arg12: memref<1x128xf32, #tpu.memory_space<vmem>>, %arg13: memref<128x128xbf16, #tpu.memory_space<vmem>>, %arg14: memref<128x128xbf16, #tpu.memory_space<vmem>>, %arg15: memref<1x128xf32, #tpu.memory_space<vmem>>, %arg16: memref<128x128xbf16, #tpu.memory_space<vmem>>, %arg17: memref<1x128xf32, #tpu.memory_space<vmem>>, %arg18: memref<128x128xbf16, #tpu.memory_space<vmem>>, %arg19: memref<128x128xbf16, #tpu.memory_space<vmem>>, %arg20: memref<1x128xf32, #tpu.memory_space<vmem>>, %arg21: memref<128x64xbf16, #tpu.memory_space<vmem>>, %arg22: memref<1x64xf32, #tpu.memory_space<vmem>>, %arg23: memref<128x64xbf16, #tpu.memory_space<vmem>>, %arg24: memref<1x64xf32, #tpu.memory_space<vmem>>, %arg25: memref<128x64xbf16, #tpu.memory_space<vmem>>, %arg26: memref<1x64xf32, #tpu.memory_space<vmem>>, %arg27: memref<1x32x128xf32, #tpu.memory_space<vmem>>, %arg28: memref<1x32x64xf32, #tpu.memory_space<vmem>>, %arg29: memref<1x32x64xf32, #tpu.memory_space<vmem>>, %arg30: memref<1x32x64xf32, #tpu.memory_space<vmem>>) attributes {dimension_semantics = [#tpu.dimension_semantics<parallel>], iteration_bounds = array<i64: 2>, scalar_prefetch = 0 : i64, scratch_operands = 0 : i64, tpu.core_type = #tpu.core_type<tc>, window_params = [{transform_indices = @transform_0, window_bounds = array<i64: 1, 32, 4>}, {transform_indices = @transform_1, window_bounds = array<i64: 1, 1, 512>}, {pipeline_mode = #tpu.pipeline_mode<synchronous>, transform_indices = @transform_2, window_bounds = array<i64: 4, 64>}, {pipeline_mode = #tpu.pipeline_mode<synchronous>, transform_indices = @transform_3, window_bounds = array<i64: 1, 64>}, {pipeline_mode = #tpu.pipeline_mode<synchronous>, transform_indices = @transform_4, window_bounds = array<i64: 64, 128>}, {pipeline_mode = #tpu.pipeline_mode<synchronous>, transform_indices = @transform_5, window_bounds = array<i64: 1, 128>}, {pipeline_mode = #tpu.pipeline_mode<synchronous>, transform_indices = @transform_6, window_bounds = array<i64: 128, 256>}, {pipeline_mode = #tpu.pipeline_mode<synchronous>, transform_indices = @transform_7, window_bounds = array<i64: 128, 256>}, {pipeline_mode = #tpu.pipeline_mode<synchronous>, transform_indices = @transform_8, window_bounds = array<i64: 512, 256>}, {pipeline_mode = #tpu.pipeline_mode<synchronous>, transform_indices = @transform_9, window_bounds = array<i64: 1, 256>}, {pipeline_mode = #tpu.pipeline_mode<synchronous>, transform_indices = @transform_10, window_bounds = array<i64: 256, 128>}, {pipeline_mode = #tpu.pipeline_mode<synchronous>, transform_indices = @transform_11, window_bounds = array<i64: 1, 128>}, {pipeline_mode = #tpu.pipeline_mode<synchronous>, transform_indices = @transform_12, window_bounds = array<i64: 128, 128>}, {pipeline_mode = #tpu.pipeline_mode<synchronous>, transform_indices = @transform_13, window_bounds = array<i64: 128, 128>}, {pipeline_mode = #tpu.pipeline_mode<synchronous>, transform_indices = @transform_14, window_bounds = array<i64: 1, 128>}, {pipeline_mode = #tpu.pipeline_mode<synchronous>, transform_indices = @transform_15, window_bounds = array<i64: 128, 128>}, {pipeline_mode = #tpu.pipeline_mode<synchronous>, transform_indices = @transform_16, window_bounds = array<i64: 1, 128>}, {pipeline_mode = #tpu.pipeline_mode<synchronous>, transform_indices = @transform_17, window_bounds = array<i64: 128, 128>}, {pipeline_mode = #tpu.pipeline_mode<synchronous>, transform_indices = @transform_18, window_bounds = array<i64: 128, 128>}, {pipeline_mode = #tpu.pipeline_mode<synchronous>, transform_indices = @transform_19, window_bounds = array<i64: 1, 128>}, {pipeline_mode = #tpu.pipeline_mode<synchronous>, transform_indices = @transform_20, window_bounds = array<i64: 128, 64>}, {pipeline_mode = #tpu.pipeline_mode<synchronous>, transform_indices = @transform_21, window_bounds = array<i64: 1, 64>}, {pipeline_mode = #tpu.pipeline_mode<synchronous>, transform_indices = @transform_22, window_bounds = array<i64: 128, 64>}, {pipeline_mode = #tpu.pipeline_mode<synchronous>, transform_indices = @transform_23, window_bounds = array<i64: 1, 64>}, {pipeline_mode = #tpu.pipeline_mode<synchronous>, transform_indices = @transform_24, window_bounds = array<i64: 128, 64>}, {pipeline_mode = #tpu.pipeline_mode<synchronous>, transform_indices = @transform_25, window_bounds = array<i64: 1, 64>}, {transform_indices = @transform_26, window_bounds = array<i64: 1, 32, 128>}, {transform_indices = @transform_27, window_bounds = array<i64: 1, 32, 64>}, {transform_indices = @transform_28, window_bounds = array<i64: 1, 32, 64>}, {transform_indices = @transform_29, window_bounds = array<i64: 1, 32, 64>}]} {
    %c0 = arith.constant 0 : index
    %c0_0 = arith.constant 0 : index
    %c0_1 = arith.constant 0 : index
    %0 = vector.load %arg1[%c0, %c0_0, %c0_1] : memref<1x32x4xf32, #tpu.memory_space<vmem>>, vector<1x32x4xf32>
    %1 = vector.shape_cast %0 : vector<1x32x4xf32> to vector<32x4xf32>
    %c0_2 = arith.constant 0 : index
    %c0_3 = arith.constant 0 : index
    %c0_4 = arith.constant 0 : index
    %2 = vector.load %arg2[%c0_2, %c0_3, %c0_4] : memref<1x1x512xf32, #tpu.memory_space<vmem>>, vector<1x1x512xf32>
    %3 = vector.shape_cast %2 : vector<1x1x512xf32> to vector<1x512xf32>
    %c0_5 = arith.constant 0 : index
    %c0_6 = arith.constant 0 : index
    %4 = vector.load %arg3[%c0_5, %c0_6] : memref<4x64xbf16, #tpu.memory_space<vmem>>, vector<4x64xbf16>
    %5 = arith.truncf %1 : vector<32x4xf32> to vector<32x4xbf16>
    %cst = arith.constant dense<0.000000e+00> : vector<32x64xf32>
    %6 = tpu.matmul %5, %4, %cst {dimension_numbers = #tpu.dot_dimension_numbers<[1], [0], [0], [1], [0, 0, 1, 1], [], []>} : vector<32x4xbf16>, vector<4x64xbf16>, vector<32x64xf32> -> vector<32x64xf32>
    %c0_7 = arith.constant 0 : index
    %c0_8 = arith.constant 0 : index
    %7 = vector.load %arg4[%c0_7, %c0_8] : memref<1x64xf32, #tpu.memory_space<vmem>>, vector<1x64xf32>
    %8 = vector.broadcast %7 : vector<1x64xf32> to vector<32x64xf32>
    %9 = arith.addf %6, %8 : vector<32x64xf32>
    %cst_9 = arith.constant 0.000000e+00 : f32
    %10 = vector.broadcast %cst_9 : f32 to vector<32x64xf32>
    %11 = arith.maximumf %9, %10 : vector<32x64xf32>
    %c0_10 = arith.constant 0 : index
    %c0_11 = arith.constant 0 : index
    %12 = vector.load %arg5[%c0_10, %c0_11] : memref<64x128xbf16, #tpu.memory_space<vmem>>, vector<64x128xbf16>
    %13 = arith.truncf %11 : vector<32x64xf32> to vector<32x64xbf16>
    %cst_12 = arith.constant dense<0.000000e+00> : vector<32x128xf32>
    %14 = tpu.matmul %13, %12, %cst_12 {dimension_numbers = #tpu.dot_dimension_numbers<[1], [0], [0], [1], [0, 0, 1, 1], [], []>} : vector<32x64xbf16>, vector<64x128xbf16>, vector<32x128xf32> -> vector<32x128xf32>
    %c0_13 = arith.constant 0 : index
    %c0_14 = arith.constant 0 : index
    %15 = vector.load %arg6[%c0_13, %c0_14] : memref<1x128xf32, #tpu.memory_space<vmem>>, vector<1x128xf32>
    %16 = vector.broadcast %15 : vector<1x128xf32> to vector<32x128xf32>
    %17 = arith.addf %14, %16 : vector<32x128xf32>
    %cst_15 = arith.constant dense<0xFF800000> : vector<128xf32>
    %18 = vector.multi_reduction <maximumf>, %17, %cst_15 [0] : vector<32x128xf32> to vector<128xf32>
    %19 = vector.shape_cast %18 : vector<128xf32> to vector<1x128xf32>
    %c0_16 = arith.constant 0 : index
    %c0_17 = arith.constant 0 : index
    %20 = vector.load %arg7[%c0_16, %c0_17] : memref<128x256xbf16, #tpu.memory_space<vmem>>, vector<128x256xbf16>
    %21 = arith.truncf %17 : vector<32x128xf32> to vector<32x128xbf16>
    %cst_18 = arith.constant dense<0.000000e+00> : vector<32x256xf32>
    %22 = tpu.matmul %21, %20, %cst_18 {dimension_numbers = #tpu.dot_dimension_numbers<[1], [0], [0], [1], [0, 0, 1, 1], [], []>} : vector<32x128xbf16>, vector<128x256xbf16>, vector<32x256xf32> -> vector<32x256xf32>
    %c0_19 = arith.constant 0 : index
    %c0_20 = arith.constant 0 : index
    %23 = vector.load %arg8[%c0_19, %c0_20] : memref<128x256xbf16, #tpu.memory_space<vmem>>, vector<128x256xbf16>
    %24 = arith.truncf %19 : vector<1x128xf32> to vector<1x128xbf16>
    %cst_21 = arith.constant dense<0.000000e+00> : vector<1x256xf32>
    %25 = tpu.matmul %24, %23, %cst_21 {dimension_numbers = #tpu.dot_dimension_numbers<[1], [0], [0], [1], [0, 0, 1, 1], [], []>} : vector<1x128xbf16>, vector<128x256xbf16>, vector<1x256xf32> -> vector<1x256xf32>
    %26 = vector.broadcast %25 : vector<1x256xf32> to vector<32x256xf32>
    %27 = arith.addf %22, %26 : vector<32x256xf32>
    %c0_22 = arith.constant 0 : index
    %c0_23 = arith.constant 0 : index
    %28 = vector.load %arg9[%c0_22, %c0_23] : memref<512x256xbf16, #tpu.memory_space<vmem>>, vector<512x256xbf16>
    %29 = arith.truncf %3 : vector<1x512xf32> to vector<1x512xbf16>
    %cst_24 = arith.constant dense<0.000000e+00> : vector<1x256xf32>
    %30 = tpu.matmul %29, %28, %cst_24 {dimension_numbers = #tpu.dot_dimension_numbers<[1], [0], [0], [1], [0, 0, 1, 1], [], []>} : vector<1x512xbf16>, vector<512x256xbf16>, vector<1x256xf32> -> vector<1x256xf32>
    %31 = vector.broadcast %30 : vector<1x256xf32> to vector<32x256xf32>
    %32 = arith.addf %27, %31 : vector<32x256xf32>
    %c0_25 = arith.constant 0 : index
    %c0_26 = arith.constant 0 : index
    %33 = vector.load %arg10[%c0_25, %c0_26] : memref<1x256xf32, #tpu.memory_space<vmem>>, vector<1x256xf32>
    %34 = vector.broadcast %33 : vector<1x256xf32> to vector<32x256xf32>
    %35 = arith.addf %32, %34 : vector<32x256xf32>
    %cst_27 = arith.constant 0.000000e+00 : f32
    %36 = vector.broadcast %cst_27 : f32 to vector<32x256xf32>
    %37 = arith.maximumf %35, %36 : vector<32x256xf32>
    %c0_28 = arith.constant 0 : index
    %c0_29 = arith.constant 0 : index
    %38 = vector.load %arg11[%c0_28, %c0_29] : memref<256x128xbf16, #tpu.memory_space<vmem>>, vector<256x128xbf16>
    %39 = arith.truncf %37 : vector<32x256xf32> to vector<32x256xbf16>
    %cst_30 = arith.constant dense<0.000000e+00> : vector<32x128xf32>
    %40 = tpu.matmul %39, %38, %cst_30 {dimension_numbers = #tpu.dot_dimension_numbers<[1], [0], [0], [1], [0, 0, 1, 1], [], []>} : vector<32x256xbf16>, vector<256x128xbf16>, vector<32x128xf32> -> vector<32x128xf32>
    %c0_31 = arith.constant 0 : index
    %c0_32 = arith.constant 0 : index
    %41 = vector.load %arg12[%c0_31, %c0_32] : memref<1x128xf32, #tpu.memory_space<vmem>>, vector<1x128xf32>
    %42 = vector.broadcast %41 : vector<1x128xf32> to vector<32x128xf32>
    %43 = arith.addf %40, %42 : vector<32x128xf32>
    %c0_33 = arith.constant 0 : index
    %c0_34 = arith.constant 0 : index
    %44 = vector.load %arg13[%c0_33, %c0_34] : memref<128x128xbf16, #tpu.memory_space<vmem>>, vector<128x128xbf16>
    %45 = arith.truncf %43 : vector<32x128xf32> to vector<32x128xbf16>
    %cst_35 = arith.constant dense<0.000000e+00> : vector<32x128xf32>
    %46 = tpu.matmul %45, %44, %cst_35 {dimension_numbers = #tpu.dot_dimension_numbers<[1], [0], [0], [1], [0, 0, 1, 1], [], []>} : vector<32x128xbf16>, vector<128x128xbf16>, vector<32x128xf32> -> vector<32x128xf32>
    %c0_36 = arith.constant 0 : index
    %c0_37 = arith.constant 0 : index
    %47 = vector.load %arg14[%c0_36, %c0_37] : memref<128x128xbf16, #tpu.memory_space<vmem>>, vector<128x128xbf16>
    %48 = arith.truncf %43 : vector<32x128xf32> to vector<32x128xbf16>
    %cst_38 = arith.constant dense<0.000000e+00> : vector<32x128xf32>
    %49 = tpu.matmul %48, %47, %cst_38 {dimension_numbers = #tpu.dot_dimension_numbers<[1], [0], [0], [1], [0, 0, 1, 1], [], []>} : vector<32x128xbf16>, vector<128x128xbf16>, vector<32x128xf32> -> vector<32x128xf32>
    %50 = arith.addf %46, %49 : vector<32x128xf32>
    %c0_39 = arith.constant 0 : index
    %c0_40 = arith.constant 0 : index
    %51 = vector.load %arg15[%c0_39, %c0_40] : memref<1x128xf32, #tpu.memory_space<vmem>>, vector<1x128xf32>
    %52 = vector.broadcast %51 : vector<1x128xf32> to vector<32x128xf32>
    %53 = arith.addf %50, %52 : vector<32x128xf32>
    %cst_41 = arith.constant 0.000000e+00 : f32
    %54 = vector.broadcast %cst_41 : f32 to vector<32x128xf32>
    %55 = arith.maximumf %53, %54 : vector<32x128xf32>
    %c0_42 = arith.constant 0 : index
    %c0_43 = arith.constant 0 : index
    %56 = vector.load %arg16[%c0_42, %c0_43] : memref<128x128xbf16, #tpu.memory_space<vmem>>, vector<128x128xbf16>
    %57 = arith.truncf %55 : vector<32x128xf32> to vector<32x128xbf16>
    %cst_44 = arith.constant dense<0.000000e+00> : vector<32x128xf32>
    %58 = tpu.matmul %57, %56, %cst_44 {dimension_numbers = #tpu.dot_dimension_numbers<[1], [0], [0], [1], [0, 0, 1, 1], [], []>} : vector<32x128xbf16>, vector<128x128xbf16>, vector<32x128xf32> -> vector<32x128xf32>
    %c0_45 = arith.constant 0 : index
    %c0_46 = arith.constant 0 : index
    %59 = vector.load %arg17[%c0_45, %c0_46] : memref<1x128xf32, #tpu.memory_space<vmem>>, vector<1x128xf32>
    %60 = vector.broadcast %59 : vector<1x128xf32> to vector<32x128xf32>
    %61 = arith.addf %58, %60 : vector<32x128xf32>
    %c0_47 = arith.constant 0 : index
    %c0_48 = arith.constant 0 : index
    %62 = vector.load %arg18[%c0_47, %c0_48] : memref<128x128xbf16, #tpu.memory_space<vmem>>, vector<128x128xbf16>
    %63 = arith.truncf %43 : vector<32x128xf32> to vector<32x128xbf16>
    %cst_49 = arith.constant dense<0.000000e+00> : vector<32x128xf32>
    %64 = tpu.matmul %63, %62, %cst_49 {dimension_numbers = #tpu.dot_dimension_numbers<[1], [0], [0], [1], [0, 0, 1, 1], [], []>} : vector<32x128xbf16>, vector<128x128xbf16>, vector<32x128xf32> -> vector<32x128xf32>
    %65 = arith.addf %61, %64 : vector<32x128xf32>
    %c0_50 = arith.constant 0 : index
    %c0_51 = arith.constant 0 : index
    %66 = vector.load %arg19[%c0_50, %c0_51] : memref<128x128xbf16, #tpu.memory_space<vmem>>, vector<128x128xbf16>
    %67 = arith.truncf %43 : vector<32x128xf32> to vector<32x128xbf16>
    %cst_52 = arith.constant dense<0.000000e+00> : vector<32x128xf32>
    %68 = tpu.matmul %67, %66, %cst_52 {dimension_numbers = #tpu.dot_dimension_numbers<[1], [0], [0], [1], [0, 0, 1, 1], [], []>} : vector<32x128xbf16>, vector<128x128xbf16>, vector<32x128xf32> -> vector<32x128xf32>
    %69 = arith.addf %65, %68 : vector<32x128xf32>
    %c0_53 = arith.constant 0 : index
    %c0_54 = arith.constant 0 : index
    %70 = vector.load %arg20[%c0_53, %c0_54] : memref<1x128xf32, #tpu.memory_space<vmem>>, vector<1x128xf32>
    %71 = vector.broadcast %70 : vector<1x128xf32> to vector<32x128xf32>
    %72 = arith.addf %69, %71 : vector<32x128xf32>
    %c0_55 = arith.constant 0 : index
    %c0_56 = arith.constant 0 : index
    %c0_57 = arith.constant 0 : index
    %73 = vector.load %arg27[%c0_55, %c0_56, %c0_57] : memref<1x32x128xf32, #tpu.memory_space<vmem>>, vector<1x32x128xf32>
    %74 = vector.shape_cast %73 : vector<1x32x128xf32> to vector<32x128xf32>
    %75 = vector.shape_cast %72 : vector<32x128xf32> to vector<1x32x128xf32>
    tpu.vector_store %arg27[%c0_55, %c0_56, %c0_57], %75 {strides = array<i32>} : memref<1x32x128xf32, #tpu.memory_space<vmem>>, vector<1x32x128xf32>,
    %c0_58 = arith.constant 0 : index
    %c0_59 = arith.constant 0 : index
    %76 = vector.load %arg21[%c0_58, %c0_59] : memref<128x64xbf16, #tpu.memory_space<vmem>>, vector<128x64xbf16>
    %77 = arith.truncf %43 : vector<32x128xf32> to vector<32x128xbf16>
    %cst_60 = arith.constant dense<0.000000e+00> : vector<32x64xf32>
    %78 = tpu.matmul %77, %76, %cst_60 {dimension_numbers = #tpu.dot_dimension_numbers<[1], [0], [0], [1], [0, 0, 1, 1], [], []>} : vector<32x128xbf16>, vector<128x64xbf16>, vector<32x64xf32> -> vector<32x64xf32>
    %c0_61 = arith.constant 0 : index
    %c0_62 = arith.constant 0 : index
    %79 = vector.load %arg22[%c0_61, %c0_62] : memref<1x64xf32, #tpu.memory_space<vmem>>, vector<1x64xf32>
    %80 = vector.broadcast %79 : vector<1x64xf32> to vector<32x64xf32>
    %81 = arith.addf %78, %80 : vector<32x64xf32>
    %c0_63 = arith.constant 0 : index
    %c0_64 = arith.constant 0 : index
    %c0_65 = arith.constant 0 : index
    %82 = vector.load %arg28[%c0_63, %c0_64, %c0_65] : memref<1x32x64xf32, #tpu.memory_space<vmem>>, vector<1x32x64xf32>
    %83 = vector.shape_cast %82 : vector<1x32x64xf32> to vector<32x64xf32>
    %84 = vector.shape_cast %81 : vector<32x64xf32> to vector<1x32x64xf32>
    tpu.vector_store %arg28[%c0_63, %c0_64, %c0_65], %84 {strides = array<i32>} : memref<1x32x64xf32, #tpu.memory_space<vmem>>, vector<1x32x64xf32>,
    %c0_66 = arith.constant 0 : index
    %c0_67 = arith.constant 0 : index
    %85 = vector.load %arg23[%c0_66, %c0_67] : memref<128x64xbf16, #tpu.memory_space<vmem>>, vector<128x64xbf16>
    %86 = arith.truncf %43 : vector<32x128xf32> to vector<32x128xbf16>
    %cst_68 = arith.constant dense<0.000000e+00> : vector<32x64xf32>
    %87 = tpu.matmul %86, %85, %cst_68 {dimension_numbers = #tpu.dot_dimension_numbers<[1], [0], [0], [1], [0, 0, 1, 1], [], []>} : vector<32x128xbf16>, vector<128x64xbf16>, vector<32x64xf32> -> vector<32x64xf32>
    %c0_69 = arith.constant 0 : index
    %c0_70 = arith.constant 0 : index
    %88 = vector.load %arg24[%c0_69, %c0_70] : memref<1x64xf32, #tpu.memory_space<vmem>>, vector<1x64xf32>
    %89 = vector.broadcast %88 : vector<1x64xf32> to vector<32x64xf32>
    %90 = arith.addf %87, %89 : vector<32x64xf32>
    %c0_71 = arith.constant 0 : index
    %c0_72 = arith.constant 0 : index
    %c0_73 = arith.constant 0 : index
    %91 = vector.load %arg29[%c0_71, %c0_72, %c0_73] : memref<1x32x64xf32, #tpu.memory_space<vmem>>, vector<1x32x64xf32>
    %92 = vector.shape_cast %91 : vector<1x32x64xf32> to vector<32x64xf32>
    %93 = vector.shape_cast %90 : vector<32x64xf32> to vector<1x32x64xf32>
    tpu.vector_store %arg29[%c0_71, %c0_72, %c0_73], %93 {strides = array<i32>} : memref<1x32x64xf32, #tpu.memory_space<vmem>>, vector<1x32x64xf32>,
    %c0_74 = arith.constant 0 : index
    %c0_75 = arith.constant 0 : index
    %94 = vector.load %arg25[%c0_74, %c0_75] : memref<128x64xbf16, #tpu.memory_space<vmem>>, vector<128x64xbf16>
    %95 = arith.truncf %72 : vector<32x128xf32> to vector<32x128xbf16>
    %cst_76 = arith.constant dense<0.000000e+00> : vector<32x64xf32>
    %96 = tpu.matmul %95, %94, %cst_76 {dimension_numbers = #tpu.dot_dimension_numbers<[1], [0], [0], [1], [0, 0, 1, 1], [], []>} : vector<32x128xbf16>, vector<128x64xbf16>, vector<32x64xf32> -> vector<32x64xf32>
    %c0_77 = arith.constant 0 : index
    %c0_78 = arith.constant 0 : index
    %97 = vector.load %arg26[%c0_77, %c0_78] : memref<1x64xf32, #tpu.memory_space<vmem>>, vector<1x64xf32>
    %98 = vector.broadcast %97 : vector<1x64xf32> to vector<32x64xf32>
    %99 = arith.addf %96, %98 : vector<32x64xf32>
    %c0_79 = arith.constant 0 : index
    %c0_80 = arith.constant 0 : index
    %c0_81 = arith.constant 0 : index
    %100 = vector.load %arg30[%c0_79, %c0_80, %c0_81] : memref<1x32x64xf32, #tpu.memory_space<vmem>>, vector<1x32x64xf32>
    %101 = vector.shape_cast %100 : vector<1x32x64xf32> to vector<32x64xf32>
    %102 = vector.shape_cast %99 : vector<32x64xf32> to vector<1x32x64xf32>
    tpu.vector_store %arg30[%c0_79, %c0_80, %c0_81], %102 {strides = array<i32>} : memref<1x32x64xf32, #tpu.memory_space<vmem>>, vector<1x32x64xf32>,
    return
  }
  func.func @transform_0(%arg0: i32) -> (i32, i32, i32) {
    %c0_i32 = arith.constant 0 : i32
    %c0_i32_0 = arith.constant 0 : i32
    %c0_i32_1 = arith.constant 0 : i32
    return %arg0, %c0_i32, %c0_i32_0 : i32, i32, i32
  }
  func.func @transform_1(%arg0: i32) -> (i32, i32, i32) {
    %c0_i32 = arith.constant 0 : i32
    %c0_i32_0 = arith.constant 0 : i32
    %c0_i32_1 = arith.constant 0 : i32
    return %arg0, %c0_i32, %c0_i32_0 : i32, i32, i32
  }
  func.func @transform_2(%arg0: i32) -> (i32, i32) {
    %c0_i32 = arith.constant 0 : i32
    %c0_i32_0 = arith.constant 0 : i32
    %c0_i32_1 = arith.constant 0 : i32
    return %c0_i32, %c0_i32_0 : i32, i32
  }
  func.func @transform_3(%arg0: i32) -> (i32, i32) {
    %c0_i32 = arith.constant 0 : i32
    %c0_i32_0 = arith.constant 0 : i32
    %c0_i32_1 = arith.constant 0 : i32
    return %c0_i32, %c0_i32_0 : i32, i32
  }
  func.func @transform_4(%arg0: i32) -> (i32, i32) {
    %c0_i32 = arith.constant 0 : i32
    %c0_i32_0 = arith.constant 0 : i32
    %c0_i32_1 = arith.constant 0 : i32
    return %c0_i32, %c0_i32_0 : i32, i32
  }
  func.func @transform_5(%arg0: i32) -> (i32, i32) {
    %c0_i32 = arith.constant 0 : i32
    %c0_i32_0 = arith.constant 0 : i32
    %c0_i32_1 = arith.constant 0 : i32
    return %c0_i32, %c0_i32_0 : i32, i32
  }
  func.func @transform_6(%arg0: i32) -> (i32, i32) {
    %c0_i32 = arith.constant 0 : i32
    %c0_i32_0 = arith.constant 0 : i32
    %c0_i32_1 = arith.constant 0 : i32
    return %c0_i32, %c0_i32_0 : i32, i32
  }
  func.func @transform_7(%arg0: i32) -> (i32, i32) {
    %c0_i32 = arith.constant 0 : i32
    %c0_i32_0 = arith.constant 0 : i32
    %c0_i32_1 = arith.constant 0 : i32
    return %c0_i32, %c0_i32_0 : i32, i32
  }
  func.func @transform_8(%arg0: i32) -> (i32, i32) {
    %c0_i32 = arith.constant 0 : i32
    %c0_i32_0 = arith.constant 0 : i32
    %c0_i32_1 = arith.constant 0 : i32
    return %c0_i32, %c0_i32_0 : i32, i32
  }
  func.func @transform_9(%arg0: i32) -> (i32, i32) {
    %c0_i32 = arith.constant 0 : i32
    %c0_i32_0 = arith.constant 0 : i32
    %c0_i32_1 = arith.constant 0 : i32
    return %c0_i32, %c0_i32_0 : i32, i32
  }
  func.func @transform_10(%arg0: i32) -> (i32, i32) {
    %c0_i32 = arith.constant 0 : i32
    %c0_i32_0 = arith.constant 0 : i32
    %c0_i32_1 = arith.constant 0 : i32
    return %c0_i32, %c0_i32_0 : i32, i32
  }
  func.func @transform_11(%arg0: i32) -> (i32, i32) {
    %c0_i32 = arith.constant 0 : i32
    %c0_i32_0 = arith.constant 0 : i32
    %c0_i32_1 = arith.constant 0 : i32
    return %c0_i32, %c0_i32_0 : i32, i32
  }
  func.func @transform_12(%arg0: i32) -> (i32, i32) {
    %c0_i32 = arith.constant 0 : i32
    %c0_i32_0 = arith.constant 0 : i32
    %c0_i32_1 = arith.constant 0 : i32
    return %c0_i32, %c0_i32_0 : i32, i32
  }
  func.func @transform_13(%arg0: i32) -> (i32, i32) {
    %c0_i32 = arith.constant 0 : i32
    %c0_i32_0 = arith.constant 0 : i32
    %c0_i32_1 = arith.constant 0 : i32
    return %c0_i32, %c0_i32_0 : i32, i32
  }
  func.func @transform_14(%arg0: i32) -> (i32, i32) {
    %c0_i32 = arith.constant 0 : i32
    %c0_i32_0 = arith.constant 0 : i32
    %c0_i32_1 = arith.constant 0 : i32
    return %c0_i32, %c0_i32_0 : i32, i32
  }
  func.func @transform_15(%arg0: i32) -> (i32, i32) {
    %c0_i32 = arith.constant 0 : i32
    %c0_i32_0 = arith.constant 0 : i32
    %c0_i32_1 = arith.constant 0 : i32
    return %c0_i32, %c0_i32_0 : i32, i32
  }
  func.func @transform_16(%arg0: i32) -> (i32, i32) {
    %c0_i32 = arith.constant 0 : i32
    %c0_i32_0 = arith.constant 0 : i32
    %c0_i32_1 = arith.constant 0 : i32
    return %c0_i32, %c0_i32_0 : i32, i32
  }
  func.func @transform_17(%arg0: i32) -> (i32, i32) {
    %c0_i32 = arith.constant 0 : i32
    %c0_i32_0 = arith.constant 0 : i32
    %c0_i32_1 = arith.constant 0 : i32
    return %c0_i32, %c0_i32_0 : i32, i32
  }
  func.func @transform_18(%arg0: i32) -> (i32, i32) {
    %c0_i32 = arith.constant 0 : i32
    %c0_i32_0 = arith.constant 0 : i32
    %c0_i32_1 = arith.constant 0 : i32
    return %c0_i32, %c0_i32_0 : i32, i32
  }
  func.func @transform_19(%arg0: i32) -> (i32, i32) {
    %c0_i32 = arith.constant 0 : i32
    %c0_i32_0 = arith.constant 0 : i32
    %c0_i32_1 = arith.constant 0 : i32
    return %c0_i32, %c0_i32_0 : i32, i32
  }
  func.func @transform_20(%arg0: i32) -> (i32, i32) {
    %c0_i32 = arith.constant 0 : i32
    %c0_i32_0 = arith.constant 0 : i32
    %c0_i32_1 = arith.constant 0 : i32
    return %c0_i32, %c0_i32_0 : i32, i32
  }
  func.func @transform_21(%arg0: i32) -> (i32, i32) {
    %c0_i32 = arith.constant 0 : i32
    %c0_i32_0 = arith.constant 0 : i32
    %c0_i32_1 = arith.constant 0 : i32
    return %c0_i32, %c0_i32_0 : i32, i32
  }
  func.func @transform_22(%arg0: i32) -> (i32, i32) {
    %c0_i32 = arith.constant 0 : i32
    %c0_i32_0 = arith.constant 0 : i32
    %c0_i32_1 = arith.constant 0 : i32
    return %c0_i32, %c0_i32_0 : i32, i32
  }
  func.func @transform_23(%arg0: i32) -> (i32, i32) {
    %c0_i32 = arith.constant 0 : i32
    %c0_i32_0 = arith.constant 0 : i32
    %c0_i32_1 = arith.constant 0 : i32
    return %c0_i32, %c0_i32_0 : i32, i32
  }
  func.func @transform_24(%arg0: i32) -> (i32, i32) {
    %c0_i32 = arith.constant 0 : i32
    %c0_i32_0 = arith.constant 0 : i32
    %c0_i32_1 = arith.constant 0 : i32
    return %c0_i32, %c0_i32_0 : i32, i32
  }
  func.func @transform_25(%arg0: i32) -> (i32, i32) {
    %c0_i32 = arith.constant 0 : i32
    %c0_i32_0 = arith.constant 0 : i32
    %c0_i32_1 = arith.constant 0 : i32
    return %c0_i32, %c0_i32_0 : i32, i32
  }
  func.func @transform_26(%arg0: i32) -> (i32, i32, i32) {
    %c0_i32 = arith.constant 0 : i32
    %c0_i32_0 = arith.constant 0 : i32
    %c0_i32_1 = arith.constant 0 : i32
    return %arg0, %c0_i32, %c0_i32_0 : i32, i32, i32
  }
  func.func @transform_27(%arg0: i32) -> (i32, i32, i32) {
    %c0_i32 = arith.constant 0 : i32
    %c0_i32_0 = arith.constant 0 : i32
    %c0_i32_1 = arith.constant 0 : i32
    return %arg0, %c0_i32, %c0_i32_0 : i32, i32, i32
  }
  func.func @transform_28(%arg0: i32) -> (i32, i32, i32) {
    %c0_i32 = arith.constant 0 : i32
    %c0_i32_0 = arith.constant 0 : i32
    %c0_i32_1 = arith.constant 0 : i32
    return %arg0, %c0_i32, %c0_i32_0 : i32, i32, i32
  }
  func.func @transform_29(%arg0: i32) -> (i32, i32, i32) {
    %c0_i32 = arith.constant 0 : i32
    %c0_i32_0 = arith.constant 0 : i32
    %c0_i32_1 = arith.constant 0 : i32
    return %arg0, %c0_i32, %c0_i32_0 : i32, i32, i32
  }
}

</mosaic_0001>

<llo_original>
// kernel: tpu_custom_call.1
$region0: #{tpu_custom_call.1}
  #allocation0 [shape = 'u32[]', space=smem, size = 0x4, offset = 0x4, fixed_abs, tag = 'smem constant byte address 0x4 - core index']
  #allocation1 [shape = 'u32[144,128]{1,0:T(1,128)}', space=vmem, size = 0x12000, scoped, tag = 'internal scratch']
  %s0 = inlined_call_operand.smem [shape: u32[30], index: -1, kind: input, shape index: {}]
  %s1 = sld [smem:[%s0]]
  %s2 = scalar_lea.smem %s0, 1
  %s3 = sld [smem:[%s2]]
  %s4 = scalar_lea.smem %s0, 2
  %s5 = sld [smem:[%s4]]
  %s6 = scalar_lea.smem %s0, 3
  %s7 = sld [smem:[%s6]]
  %s8 = scalar_lea.smem %s0, 4
  %s9 = sld [smem:[%s8]]
  %s10 = scalar_lea.smem %s0, 5
  %s11 = sld [smem:[%s10]]
  %s12 = scalar_lea.smem %s0, 6
  %s13 = sld [smem:[%s12]]
  %s14 = scalar_lea.smem %s0, 7
  %s15 = sld [smem:[%s14]]
  %s16 = scalar_lea.smem %s0, 8
  %s17 = sld [smem:[%s16]]
  %s18 = scalar_lea.smem %s0, 9
  %s19 = sld [smem:[%s18]]
  %s20 = scalar_lea.smem %s0, 10
  %s21 = sld [smem:[%s20]]
  %s22 = scalar_lea.smem %s0, 11
  %s23 = sld [smem:[%s22]]
  %s24 = scalar_lea.smem %s0, 12
  %s25 = sld [smem:[%s24]]
  %s26 = scalar_lea.smem %s0, 13
  %s27 = sld [smem:[%s26]]
  %s28 = scalar_lea.smem %s0, 14
  %s29 = sld [smem:[%s28]]
  %s30 = scalar_lea.smem %s0, 15
  %s31 = sld [smem:[%s30]]
  %s32 = scalar_lea.smem %s0, 16
  %s33 = sld [smem:[%s32]]
  %s34 = scalar_lea.smem %s0, 17
  %s35 = sld [smem:[%s34]]
  %s36 = scalar_lea.smem %s0, 18
  %s37 = sld [smem:[%s36]]
  %s38 = scalar_lea.smem %s0, 19
  %s39 = sld [smem:[%s38]]
  %s40 = scalar_lea.smem %s0, 20
  %s41 = sld [smem:[%s40]]
  %s42 = scalar_lea.smem %s0, 21
  %s43 = sld [smem:[%s42]]
  %s44 = scalar_lea.smem %s0, 22
  %s45 = sld [smem:[%s44]]
  %s46 = scalar_lea.smem %s0, 23
  %s47 = sld [smem:[%s46]]
  %s48 = scalar_lea.smem %s0, 24
  %s49 = sld [smem:[%s48]]
  %s50 = scalar_lea.smem %s0, 25
  %s51 = sld [smem:[%s50]]
  %s52 = scalar_lea.smem %s0, 26
  %s53 = sld [smem:[%s52]]
  %s54 = scalar_lea.smem %s0, 27
  %s55 = sld [smem:[%s54]]
  %s56 = scalar_lea.smem %s0, 28
  %s57 = sld [smem:[%s56]]
  %s58 = scalar_lea.smem %s0, 29
  %s59 = sld [smem:[%s58]]
  %60 = xla_tuple %s53, %s55, %s57, %s59
  %s61 = sld [smem:[#allocation0]]
  $region229: #{tpu_custom_call.1} parent=0
    _
  %s63 = ssub.s32 1, %s61
  %s64 = scalar_select 0, %s63, %s61
  $region1: #{tpu_custom_call.1} parent=0
    #allocation2 [shape = 'u8[4096]{0}', space=vmem, size = 0x1000, scoped, tag = 'input window, operand 1']
    #allocation3 [shape = 's32[2]{0}', space=sflag, size = 0x8, scoped, tag = 'scoped memory for tpu_custom_call.1']
    #allocation4 [shape = 's32[2]{0}', space=sflag, size = 0x8, scoped, tag = 'scoped memory for tpu_custom_call.1']
    #allocation5 [shape = 'u8[1024]{0}', space=vmem, size = 0x400, scoped, tag = 'input window, operand 2, single buffered']
    #allocation6 [shape = 's32[1]{0}', space=sflag, size = 0x4, scoped, tag = 'scoped memory for tpu_custom_call.1']
    #allocation7 [shape = 'u8[512]{0}', space=vmem, size = 0x400, scoped, tag = 'input window, operand 3, single buffered']
    #allocation8 [shape = 'u8[16384]{0}', space=vmem, size = 0x4000, scoped, tag = 'input window, operand 4, single buffered']
    #allocation9 [shape = 's32[1]{0}', space=sflag, size = 0x4, scoped, tag = 'scoped memory for tpu_custom_call.1']
    #allocation10 [shape = 'u8[512]{0}', space=vmem, size = 0x400, scoped, tag = 'input window, operand 5, single buffered']
    #allocation11 [shape = 'u8[262144]{0}', space=vmem, size = 0x40000, scoped, tag = 'input window, operand 8, single buffered']
    #allocation12 [shape = 's32[1]{0}', space=sflag, size = 0x4, scoped, tag = 'scoped memory for tpu_custom_call.1']
    #allocation13 [shape = 'u8[1024]{0}', space=vmem, size = 0x400, scoped, tag = 'input window, operand 9, single buffered']
    #allocation14 [shape = 'u8[512]{0}', space=vmem, size = 0x400, scoped, tag = 'input window, operand 11, single buffered']
    #allocation15 [shape = 's32[1]{0}', space=sflag, size = 0x4, scoped, tag = 'scoped memory for tpu_custom_call.1']
    #allocation16 [shape = 'u8[32768]{0}', space=vmem, size = 0x8000, scoped, tag = 'input window, operand 12, single buffered']
    #allocation17 [shape = 'u8[32768]{0}', space=vmem, size = 0x8000, scoped, tag = 'input window, operand 13, single buffered']
    #allocation18 [shape = 's32[1]{0}', space=sflag, size = 0x4, scoped, tag = 'scoped memory for tpu_custom_call.1']
    #allocation19 [shape = 'u8[512]{0}', space=vmem, size = 0x400, scoped, tag = 'input window, operand 14, single buffered']
    #allocation20 [shape = 'u8[32768]{0}', space=vmem, size = 0x8000, scoped, tag = 'input window, operand 15, single buffered']
    #allocation21 [shape = 's32[1]{0}', space=sflag, size = 0x4, scoped, tag = 'scoped memory for tpu_custom_call.1']
    #allocation22 [shape = 'u8[32768]{0}', space=vmem, size = 0x8000, scoped, tag = 'input window, operand 17, single buffered']
    #allocation23 [shape = 'u8[32768]{0}', space=vmem, size = 0x8000, scoped, tag = 'input window, operand 18, single buffered']
    #allocation24 [shape = 's32[1]{0}', space=sflag, size = 0x4, scoped, tag = 'scoped memory for tpu_custom_call.1']
    #allocation25 [shape = 'u8[512]{0}', space=vmem, size = 0x400, scoped, tag = 'input window, operand 21, single buffered']
    #allocation26 [shape = 'u8[512]{0}', space=vmem, size = 0x400, scoped, tag = 'input window, operand 23, single buffered']
    #allocation27 [shape = 's32[1]{0}', space=sflag, size = 0x4, scoped, tag = 'scoped memory for tpu_custom_call.1']
    #allocation28 [shape = 'u8[512]{0}', space=vmem, size = 0x400, scoped, tag = 'input window, operand 25, single buffered']
    #allocation29 [shape = 'u8[32768]{0}', space=vmem, size = 0x8000, scoped, tag = 'output window, operand 0']
    #allocation30 [shape = 'u8[32768]{0}', space=vmem, size = 0x8000, scoped, tag = 'output window, operand 1']
    #allocation31 [shape = 's32[2]{0}', space=sflag, size = 0x8, scoped, tag = 'scoped memory for tpu_custom_call.1']
    #allocation32 [shape = 'u8[32768]{0}', space=vmem, size = 0x8000, scoped, tag = 'output window, operand 2']
    #allocation33 [shape = 'u8[32768]{0}', space=vmem, size = 0x8000, scoped, tag = 'output window, operand 3']
    #allocation34 [shape = 's32[2]{0}', space=sflag, size = 0x8, scoped, tag = 'scoped memory for tpu_custom_call.1']
    %65 = vsyncpa [#allocation3], 0
    %s66 = scalar_lea.sflag [#allocation3], 1
    %67 = vsyncpa %s66, 0
    %68 = vsyncpa [#allocation6], 0
    %69 = vsyncpa [#allocation9], 0
    %70 = vsyncpa [#allocation12], 0
    %71 = vsyncpa [#allocation15], 0
    %72 = vsyncpa [#allocation18], 0
    %73 = vsyncpa [#allocation21], 0
    %74 = vsyncpa [#allocation24], 0
    %75 = vsyncpa [#allocation27], 0
    %76 = vsyncpa [#allocation4], 0
    %s77 = scalar_lea.sflag [#allocation4], 1
    %78 = vsyncpa %s77, 0
    %79 = vsyncpa [#allocation31], 0
    %s80 = scalar_lea.sflag [#allocation31], 1
    %81 = vsyncpa %s80, 0
    %82 = vsyncpa [#allocation34], 0
    %s83 = scalar_lea.sflag [#allocation34], 1
    %84 = vsyncpa %s83, 0
    loop: start=0, step=1, limit=4
    $region2: #{tpu_custom_call.1} parent=1 // loop_pre_header
      _
    $region3: #{tpu_custom_call.1} parent=1 // loop_header
      %s86 = sphi 0, %s90
      %p87 = scmp.ge.s32.totalorder %s86, 4
      %s96 = sphi 0, %s98
      %s99 = sphi 0, %s96
      %s100 = sphi 0, %s99
      %s116 = sphi 0, %s100
      %s122 = sphi 0, %s124
      %s125 = sphi 0, %s122
      %s126 = sphi 0, %s125
      %s142 = sphi 0, %s126
      %s146 = sphi 0, %s146
      %s148 = sphi 0, %s146
      %s149 = sphi 0, %s148
      %s163 = sphi 0, %s149
      %s167 = sphi 0, %s167
      %s169 = sphi 0, %s167
      %s170 = sphi 0, %s169
      %s184 = sphi 0, %s170
      %s188 = sphi 0, %s188
      %s190 = sphi 0, %s188
      %s191 = sphi 0, %s190
      %s205 = sphi 0, %s191
      %s209 = sphi 0, %s209
      %s211 = sphi 0, %s209
      %s212 = sphi 0, %s211
      %s226 = sphi 0, %s212
      %s230 = sphi 0, %s230
      %s232 = sphi 0, %s230
      %s233 = sphi 0, %s232
      %s247 = sphi 0, %s233
      %s251 = sphi 0, %s251
      %s253 = sphi 0, %s251
      %s254 = sphi 0, %s253
      %s268 = sphi 0, %s254
      %s272 = sphi 0, %s272
      %s274 = sphi 0, %s272
      %s275 = sphi 0, %s274
      %s289 = sphi 0, %s275
      %s293 = sphi 0, %s293
      %s295 = sphi 0, %s293
      %s296 = sphi 0, %s295
      %s310 = sphi 0, %s296
      %s314 = sphi 0, %s314
      %s316 = sphi 0, %s314
      %s317 = sphi 0, %s316
      %s331 = sphi 0, %s317
      %s335 = sphi 0, %s335
      %s337 = sphi 0, %s335
      %s338 = sphi 0, %s337
      %s352 = sphi 0, %s338
      %s356 = sphi 0, %s356
      %s358 = sphi 0, %s356
      %s359 = sphi 0, %s358
      %s373 = sphi 0, %s359
      %s377 = sphi 0, %s377
      %s379 = sphi 0, %s377
      %s380 = sphi 0, %s379
      %s394 = sphi 0, %s380
      %s398 = sphi 0, %s398
      %s400 = sphi 0, %s398
      %s401 = sphi 0, %s400
      %s415 = sphi 0, %s401
      %s419 = sphi 0, %s419
      %s421 = sphi 0, %s419
      %s422 = sphi 0, %s421
      %s436 = sphi 0, %s422
      %s440 = sphi 0, %s440
      %s442 = sphi 0, %s440
      %s443 = sphi 0, %s442
      %s457 = sphi 0, %s443
      %s461 = sphi 0, %s461
      %s463 = sphi 0, %s461
      %s464 = sphi 0, %s463
      %s478 = sphi 0, %s464
      %s482 = sphi 0, %s482
      %s484 = sphi 0, %s482
      %s485 = sphi 0, %s484
      %s499 = sphi 0, %s485
      %s503 = sphi 0, %s503
      %s505 = sphi 0, %s503
      %s506 = sphi 0, %s505
      %s520 = sphi 0, %s506
      %s524 = sphi 0, %s524
      %s526 = sphi 0, %s524
      %s527 = sphi 0, %s526
      %s541 = sphi 0, %s527
      %s545 = sphi 0, %s545
      %s547 = sphi 0, %s545
      %s548 = sphi 0, %s547
      %s562 = sphi 0, %s548
      %s566 = sphi 0, %s566
      %s568 = sphi 0, %s566
      %s569 = sphi 0, %s568
      %s583 = sphi 0, %s569
      %s587 = sphi 0, %s587
      %s589 = sphi 0, %s587
      %s590 = sphi 0, %s589
      %s604 = sphi 0, %s590
      %s608 = sphi 0, %s608
      %s610 = sphi 0, %s608
      %s611 = sphi 0, %s610
      %s625 = sphi 0, %s611
      %s629 = sphi 0, %s629
      %s631 = sphi 0, %s629
      %s632 = sphi 0, %s631
      %s646 = sphi 0, %s632
      %s652 = sphi 0, %s654
      %s655 = sphi 0, %s652
      %s656 = sphi 0, %s655
      %s672 = sphi 0, %s656
      %s678 = sphi 0, %s680
      %s681 = sphi 0, %s678
      %s682 = sphi 0, %s681
      %s698 = sphi 0, %s682
      %s704 = sphi 0, %s706
      %s707 = sphi 0, %s704
      %s708 = sphi 0, %s707
      %s724 = sphi 0, %s708
      %s730 = sphi 0, %s732
      %s733 = sphi 0, %s730
      %s734 = sphi 0, %s733
      %s750 = sphi 0, %s734
    $region4: #{tpu_custom_call.1} parent=1 // loop_header_branch
      %89 = sbr.rel (%p87) target = $region8
    $region5: #{tpu_custom_call.1} parent=1 // loop_body
      %s91 = ssub.s32 %s86, 1
      %s92 = ssub.s32 %s86, 2
      %s93 = sadd.s32 %s86, 1
      %s94 = ssub.s32 %s86, %s93
      %p95 = scmp.eq.s32.totalorder %s94, 0
      %s97 = sadd.s32 %s96, 1
      %s98 = scalar_select %p95, %s96, %s97
      %p101 = pneg %p95
      %p102 = scmp.eq.s32.totalorder %s86, 1
      %p103 = por %p101, %p102
      %p104 = scmp.ne.s32.totalorder %s96, %s99
      %p105 = scmp.eq.s32.totalorder %s86, 0
      %p106 = por %p104, %p105
      %p107 = scmp.ne.s32.totalorder %s96, %s99
      %p108 = scmp.eq.s32.totalorder %s91, 1
      %p109 = por %p107, %p108
      %p110 = scmp.ne.s32.totalorder %s99, %s100
      %p111 = scmp.eq.s32.totalorder %s91, 0
      %p112 = por %p110, %p111
      %p113 = scmp.ne.s32.totalorder %s99, %s100
      %p114 = scmp.eq.s32.totalorder %s92, 1
      %p115 = por %p113, %p114
      %p117 = scmp.ne.s32.totalorder %s100, %s116
      %p118 = scmp.eq.s32.totalorder %s92, 0
      %p119 = por %p117, %p118
      %s120 = ssub.s32 %s86, %s93
      %p121 = scmp.eq.s32.totalorder %s120, 0
      %s123 = sadd.s32 %s122, 1
      %s124 = scalar_select %p121, %s122, %s123
      %p127 = pneg %p121
      %p128 = scmp.eq.s32.totalorder %s86, 1
      %p129 = por %p127, %p128
      %p130 = scmp.ne.s32.totalorder %s122, %s125
      %p131 = scmp.eq.s32.totalorder %s86, 0
      %p132 = por %p130, %p131
      %p133 = scmp.ne.s32.totalorder %s122, %s125
      %p134 = scmp.eq.s32.totalorder %s91, 1
      %p135 = por %p133, %p134
      %p136 = scmp.ne.s32.totalorder %s125, %s126
      %p137 = scmp.eq.s32.totalorder %s91, 0
      %p138 = por %p136, %p137
      %p139 = scmp.ne.s32.totalorder %s125, %s126
      %p140 = scmp.eq.s32.totalorder %s92, 1
      %p141 = por %p139, %p140
      %p143 = scmp.ne.s32.totalorder %s126, %s142
      %p144 = scmp.eq.s32.totalorder %s92, 0
      %p145 = por %p143, %p144
      %s147 = sadd.s32 %s146, 1
      %p150 = scmp.eq.s32.totalorder %s86, 1
      %p151 = scmp.ne.s32.totalorder %s146, %s148
      %p152 = scmp.eq.s32.totalorder %s86, 0
      %p153 = por %p151, %p152
      %p154 = scmp.ne.s32.totalorder %s146, %s148
      %p155 = scmp.eq.s32.totalorder %s91, 1
      %p156 = por %p154, %p155
      %p157 = scmp.ne.s32.totalorder %s148, %s149
      %p158 = scmp.eq.s32.totalorder %s91, 0
      %p159 = por %p157, %p158
      %p160 = scmp.ne.s32.totalorder %s148, %s149
      %p161 = scmp.eq.s32.totalorder %s92, 1
      %p162 = por %p160, %p161
      %p164 = scmp.ne.s32.totalorder %s149, %s163
      %p165 = scmp.eq.s32.totalorder %s92, 0
      %p166 = por %p164, %p165
      %s168 = sadd.s32 %s167, 1
      %p171 = scmp.eq.s32.totalorder %s86, 1
      %p172 = scmp.ne.s32.totalorder %s167, %s169
      %p173 = scmp.eq.s32.totalorder %s86, 0
      %p174 = por %p172, %p173
      %p175 = scmp.ne.s32.totalorder %s167, %s169
      %p176 = scmp.eq.s32.totalorder %s91, 1
      %p177 = por %p175, %p176
      %p178 = scmp.ne.s32.totalorder %s169, %s170
      %p179 = scmp.eq.s32.totalorder %s91, 0
      %p180 = por %p178, %p179
      %p181 = scmp.ne.s32.totalorder %s169, %s170
      %p182 = scmp.eq.s32.totalorder %s92, 1
      %p183 = por %p181, %p182
      %p185 = scmp.ne.s32.totalorder %s170, %s184
      %p186 = scmp.eq.s32.totalorder %s92, 0
      %p187 = por %p185, %p186
      %s189 = sadd.s32 %s188, 1
      %p192 = scmp.eq.s32.totalorder %s86, 1
      %p193 = scmp.ne.s32.totalorder %s188, %s190
      %p194 = scmp.eq.s32.totalorder %s86, 0
      %p195 = por %p193, %p194
      %p196 = scmp.ne.s32.totalorder %s188, %s190
      %p197 = scmp.eq.s32.totalorder %s91, 1
      %p198 = por %p196, %p197
      %p199 = scmp.ne.s32.totalorder %s190, %s191
      %p200 = scmp.eq.s32.totalorder %s91, 0
      %p201 = por %p199, %p200
      %p202 = scmp.ne.s32.totalorder %s190, %s191
      %p203 = scmp.eq.s32.totalorder %s92, 1
      %p204 = por %p202, %p203
      %p206 = scmp.ne.s32.totalorder %s191, %s205
      %p207 = scmp.eq.s32.totalorder %s92, 0
      %p208 = por %p206, %p207
      %s210 = sadd.s32 %s209, 1
      %p213 = scmp.eq.s32.totalorder %s86, 1
      %p214 = scmp.ne.s32.totalorder %s209, %s211
      %p215 = scmp.eq.s32.totalorder %s86, 0
      %p216 = por %p214, %p215
      %p217 = scmp.ne.s32.totalorder %s209, %s211
      %p218 = scmp.eq.s32.totalorder %s91, 1
      %p219 = por %p217, %p218
      %p220 = scmp.ne.s32.totalorder %s211, %s212
      %p221 = scmp.eq.s32.totalorder %s91, 0
      %p222 = por %p220, %p221
      %p223 = scmp.ne.s32.totalorder %s211, %s212
      %p224 = scmp.eq.s32.totalorder %s92, 1
      %p225 = por %p223, %p224
      %p227 = scmp.ne.s32.totalorder %s212, %s226
      %p228 = scmp.eq.s32.totalorder %s92, 0
      %p229 = por %p227, %p228
      %s231 = sadd.s32 %s230, 1
      %p234 = scmp.eq.s32.totalorder %s86, 1
      %p235 = scmp.ne.s32.totalorder %s230, %s232
      %p236 = scmp.eq.s32.totalorder %s86, 0
      %p237 = por %p235, %p236
      %p238 = scmp.ne.s32.totalorder %s230, %s232
      %p239 = scmp.eq.s32.totalorder %s91, 1
      %p240 = por %p238, %p239
      %p241 = scmp.ne.s32.totalorder %s232, %s233
      %p242 = scmp.eq.s32.totalorder %s91, 0
      %p243 = por %p241, %p242
      %p244 = scmp.ne.s32.totalorder %s232, %s233
      %p245 = scmp.eq.s32.totalorder %s92, 1
      %p246 = por %p244, %p245
      %p248 = scmp.ne.s32.totalorder %s233, %s247
      %p249 = scmp.eq.s32.totalorder %s92, 0
      %p250 = por %p248, %p249
      %s252 = sadd.s32 %s251, 1
      %p255 = scmp.eq.s32.totalorder %s86, 1
      %p256 = scmp.ne.s32.totalorder %s251, %s253
      %p257 = scmp.eq.s32.totalorder %s86, 0
      %p258 = por %p256, %p257
      %p259 = scmp.ne.s32.totalorder %s251, %s253
      %p260 = scmp.eq.s32.totalorder %s91, 1
      %p261 = por %p259, %p260
      %p262 = scmp.ne.s32.totalorder %s253, %s254
      %p263 = scmp.eq.s32.totalorder %s91, 0
      %p264 = por %p262, %p263
      %p265 = scmp.ne.s32.totalorder %s253, %s254
      %p266 = scmp.eq.s32.totalorder %s92, 1
      %p267 = por %p265, %p266
      %p269 = scmp.ne.s32.totalorder %s254, %s268
      %p270 = scmp.eq.s32.totalorder %s92, 0
      %p271 = por %p269, %p270
      %s273 = sadd.s32 %s272, 1
      %p276 = scmp.eq.s32.totalorder %s86, 1
      %p277 = scmp.ne.s32.totalorder %s272, %s274
      %p278 = scmp.eq.s32.totalorder %s86, 0
      %p279 = por %p277, %p278
      %p280 = scmp.ne.s32.totalorder %s272, %s274
      %p281 = scmp.eq.s32.totalorder %s91, 1
      %p282 = por %p280, %p281
      %p283 = scmp.ne.s32.totalorder %s274, %s275
      %p284 = scmp.eq.s32.totalorder %s91, 0
      %p285 = por %p283, %p284
      %p286 = scmp.ne.s32.totalorder %s274, %s275
      %p287 = scmp.eq.s32.totalorder %s92, 1
      %p288 = por %p286, %p287
      %p290 = scmp.ne.s32.totalorder %s275, %s289
      %p291 = scmp.eq.s32.totalorder %s92, 0
      %p292 = por %p290, %p291
      %s294 = sadd.s32 %s293, 1
      %p297 = scmp.eq.s32.totalorder %s86, 1
      %p298 = scmp.ne.s32.totalorder %s293, %s295
      %p299 = scmp.eq.s32.totalorder %s86, 0
      %p300 = por %p298, %p299
      %p301 = scmp.ne.s32.totalorder %s293, %s295
      %p302 = scmp.eq.s32.totalorder %s91, 1
      %p303 = por %p301, %p302
      %p304 = scmp.ne.s32.totalorder %s295, %s296
      %p305 = scmp.eq.s32.totalorder %s91, 0
      %p306 = por %p304, %p305
      %p307 = scmp.ne.s32.totalorder %s295, %s296
      %p308 = scmp.eq.s32.totalorder %s92, 1
      %p309 = por %p307, %p308
      %p311 = scmp.ne.s32.totalorder %s296, %s310
      %p312 = scmp.eq.s32.totalorder %s92, 0
      %p313 = por %p311, %p312
      %s315 = sadd.s32 %s314, 1
      %p318 = scmp.eq.s32.totalorder %s86, 1
      %p319 = scmp.ne.s32.totalorder %s314, %s316
      %p320 = scmp.eq.s32.totalorder %s86, 0
      %p321 = por %p319, %p320
      %p322 = scmp.ne.s32.totalorder %s314, %s316
      %p323 = scmp.eq.s32.totalorder %s91, 1
      %p324 = por %p322, %p323
      %p325 = scmp.ne.s32.totalorder %s316, %s317
      %p326 = scmp.eq.s32.totalorder %s91, 0
      %p327 = por %p325, %p326
      %p328 = scmp.ne.s32.totalorder %s316, %s317
      %p329 = scmp.eq.s32.totalorder %s92, 1
      %p330 = por %p328, %p329
      %p332 = scmp.ne.s32.totalorder %s317, %s331
      %p333 = scmp.eq.s32.totalorder %s92, 0
      %p334 = por %p332, %p333
      %s336 = sadd.s32 %s335, 1
      %p339 = scmp.eq.s32.totalorder %s86, 1
      %p340 = scmp.ne.s32.totalorder %s335, %s337
      %p341 = scmp.eq.s32.totalorder %s86, 0
      %p342 = por %p340, %p341
      %p343 = scmp.ne.s32.totalorder %s335, %s337
      %p344 = scmp.eq.s32.totalorder %s91, 1
      %p345 = por %p343, %p344
      %p346 = scmp.ne.s32.totalorder %s337, %s338
      %p347 = scmp.eq.s32.totalorder %s91, 0
      %p348 = por %p346, %p347
      %p349 = scmp.ne.s32.totalorder %s337, %s338
      %p350 = scmp.eq.s32.totalorder %s92, 1
      %p351 = por %p349, %p350
      %p353 = scmp.ne.s32.totalorder %s338, %s352
      %p354 = scmp.eq.s32.totalorder %s92, 0
      %p355 = por %p353, %p354
      %s357 = sadd.s32 %s356, 1
      %p360 = scmp.eq.s32.totalorder %s86, 1
      %p361 = scmp.ne.s32.totalorder %s356, %s358
      %p362 = scmp.eq.s32.totalorder %s86, 0
      %p363 = por %p361, %p362
      %p364 = scmp.ne.s32.totalorder %s356, %s358
      %p365 = scmp.eq.s32.totalorder %s91, 1
      %p366 = por %p364, %p365
      %p367 = scmp.ne.s32.totalorder %s358, %s359
      %p368 = scmp.eq.s32.totalorder %s91, 0
      %p369 = por %p367, %p368
      %p370 = scmp.ne.s32.totalorder %s358, %s359
      %p371 = scmp.eq.s32.totalorder %s92, 1
      %p372 = por %p370, %p371
      %p374 = scmp.ne.s32.totalorder %s359, %s373
      %p375 = scmp.eq.s32.totalorder %s92, 0
      %p376 = por %p374, %p375
      %s378 = sadd.s32 %s377, 1
      %p381 = scmp.eq.s32.totalorder %s86, 1
      %p382 = scmp.ne.s32.totalorder %s377, %s379
      %p383 = scmp.eq.s32.totalorder %s86, 0
      %p384 = por %p382, %p383
      %p385 = scmp.ne.s32.totalorder %s377, %s379
      %p386 = scmp.eq.s32.totalorder %s91, 1
      %p387 = por %p385, %p386
      %p388 = scmp.ne.s32.totalorder %s379, %s380
      %p389 = scmp.eq.s32.totalorder %s91, 0
      %p390 = por %p388, %p389
      %p391 = scmp.ne.s32.totalorder %s379, %s380
      %p392 = scmp.eq.s32.totalorder %s92, 1
      %p393 = por %p391, %p392
      %p395 = scmp.ne.s32.totalorder %s380, %s394
      %p396 = scmp.eq.s32.totalorder %s92, 0
      %p397 = por %p395, %p396
      %s399 = sadd.s32 %s398, 1
      %p402 = scmp.eq.s32.totalorder %s86, 1
      %p403 = scmp.ne.s32.totalorder %s398, %s400
      %p404 = scmp.eq.s32.totalorder %s86, 0
      %p405 = por %p403, %p404
      %p406 = scmp.ne.s32.totalorder %s398, %s400
      %p407 = scmp.eq.s32.totalorder %s91, 1
      %p408 = por %p406, %p407
      %p409 = scmp.ne.s32.totalorder %s400, %s401
      %p410 = scmp.eq.s32.totalorder %s91, 0
      %p411 = por %p409, %p410
      %p412 = scmp.ne.s32.totalorder %s400, %s401
      %p413 = scmp.eq.s32.totalorder %s92, 1
      %p414 = por %p412, %p413
      %p416 = scmp.ne.s32.totalorder %s401, %s415
      %p417 = scmp.eq.s32.totalorder %s92, 0
      %p418 = por %p416, %p417
      %s420 = sadd.s32 %s419, 1
      %p423 = scmp.eq.s32.totalorder %s86, 1
      %p424 = scmp.ne.s32.totalorder %s419, %s421
      %p425 = scmp.eq.s32.totalorder %s86, 0
      %p426 = por %p424, %p425
      %p427 = scmp.ne.s32.totalorder %s419, %s421
      %p428 = scmp.eq.s32.totalorder %s91, 1
      %p429 = por %p427, %p428
      %p430 = scmp.ne.s32.totalorder %s421, %s422
      %p431 = scmp.eq.s32.totalorder %s91, 0
      %p432 = por %p430, %p431
      %p433 = scmp.ne.s32.totalorder %s421, %s422
      %p434 = scmp.eq.s32.totalorder %s92, 1
      %p435 = por %p433, %p434
      %p437 = scmp.ne.s32.totalorder %s422, %s436
      %p438 = scmp.eq.s32.totalorder %s92, 0
      %p439 = por %p437, %p438
      %s441 = sadd.s32 %s440, 1
      %p444 = scmp.eq.s32.totalorder %s86, 1
      %p445 = scmp.ne.s32.totalorder %s440, %s442
      %p446 = scmp.eq.s32.totalorder %s86, 0
      %p447 = por %p445, %p446
      %p448 = scmp.ne.s32.totalorder %s440, %s442
      %p449 = scmp.eq.s32.totalorder %s91, 1
      %p450 = por %p448, %p449
      %p451 = scmp.ne.s32.totalorder %s442, %s443
      %p452 = scmp.eq.s32.totalorder %s91, 0
      %p453 = por %p451, %p452
      %p454 = scmp.ne.s32.totalorder %s442, %s443
      %p455 = scmp.eq.s32.totalorder %s92, 1
      %p456 = por %p454, %p455
      %p458 = scmp.ne.s32.totalorder %s443, %s457
      %p459 = scmp.eq.s32.totalorder %s92, 0
      %p460 = por %p458, %p459
      %s462 = sadd.s32 %s461, 1
      %p465 = scmp.eq.s32.totalorder %s86, 1
      %p466 = scmp.ne.s32.totalorder %s461, %s463
      %p467 = scmp.eq.s32.totalorder %s86, 0
      %p468 = por %p466, %p467
      %p469 = scmp.ne.s32.totalorder %s461, %s463
      %p470 = scmp.eq.s32.totalorder %s91, 1
      %p471 = por %p469, %p470
      %p472 = scmp.ne.s32.totalorder %s463, %s464
      %p473 = scmp.eq.s32.totalorder %s91, 0
      %p474 = por %p472, %p473
      %p475 = scmp.ne.s32.totalorder %s463, %s464
      %p476 = scmp.eq.s32.totalorder %s92, 1
      %p477 = por %p475, %p476
      %p479 = scmp.ne.s32.totalorder %s464, %s478
      %p480 = scmp.eq.s32.totalorder %s92, 0
      %p481 = por %p479, %p480
      %s483 = sadd.s32 %s482, 1
      %p486 = scmp.eq.s32.totalorder %s86, 1
      %p487 = scmp.ne.s32.totalorder %s482, %s484
      %p488 = scmp.eq.s32.totalorder %s86, 0
      %p489 = por %p487, %p488
      %p490 = scmp.ne.s32.totalorder %s482, %s484
      %p491 = scmp.eq.s32.totalorder %s91, 1
      %p492 = por %p490, %p491
      %p493 = scmp.ne.s32.totalorder %s484, %s485
      %p494 = scmp.eq.s32.totalorder %s91, 0
      %p495 = por %p493, %p494
      %p496 = scmp.ne.s32.totalorder %s484, %s485
      %p497 = scmp.eq.s32.totalorder %s92, 1
      %p498 = por %p496, %p497
      %p500 = scmp.ne.s32.totalorder %s485, %s499
      %p501 = scmp.eq.s32.totalorder %s92, 0
      %p502 = por %p500, %p501
      %s504 = sadd.s32 %s503, 1
      %p507 = scmp.eq.s32.totalorder %s86, 1
      %p508 = scmp.ne.s32.totalorder %s503, %s505
      %p509 = scmp.eq.s32.totalorder %s86, 0
      %p510 = por %p508, %p509
      %p511 = scmp.ne.s32.totalorder %s503, %s505
      %p512 = scmp.eq.s32.totalorder %s91, 1
      %p513 = por %p511, %p512
      %p514 = scmp.ne.s32.totalorder %s505, %s506
      %p515 = scmp.eq.s32.totalorder %s91, 0
      %p516 = por %p514, %p515
      %p517 = scmp.ne.s32.totalorder %s505, %s506
      %p518 = scmp.eq.s32.totalorder %s92, 1
      %p519 = por %p517, %p518
      %p521 = scmp.ne.s32.totalorder %s506, %s520
      %p522 = scmp.eq.s32.totalorder %s92, 0
      %p523 = por %p521, %p522
      %s525 = sadd.s32 %s524, 1
      %p528 = scmp.eq.s32.totalorder %s86, 1
      %p529 = scmp.ne.s32.totalorder %s524, %s526
      %p530 = scmp.eq.s32.totalorder %s86, 0
      %p531 = por %p529, %p530
      %p532 = scmp.ne.s32.totalorder %s524, %s526
      %p533 = scmp.eq.s32.totalorder %s91, 1
      %p534 = por %p532, %p533
      %p535 = scmp.ne.s32.totalorder %s526, %s527
      %p536 = scmp.eq.s32.totalorder %s91, 0
      %p537 = por %p535, %p536
      %p538 = scmp.ne.s32.totalorder %s526, %s527
      %p539 = scmp.eq.s32.totalorder %s92, 1
      %p540 = por %p538, %p539
      %p542 = scmp.ne.s32.totalorder %s527, %s541
      %p543 = scmp.eq.s32.totalorder %s92, 0
      %p544 = por %p542, %p543
      %s546 = sadd.s32 %s545, 1
      %p549 = scmp.eq.s32.totalorder %s86, 1
      %p550 = scmp.ne.s32.totalorder %s545, %s547
      %p551 = scmp.eq.s32.totalorder %s86, 0
      %p552 = por %p550, %p551
      %p553 = scmp.ne.s32.totalorder %s545, %s547
      %p554 = scmp.eq.s32.totalorder %s91, 1
      %p555 = por %p553, %p554
      %p556 = scmp.ne.s32.totalorder %s547, %s548
      %p557 = scmp.eq.s32.totalorder %s91, 0
      %p558 = por %p556, %p557
      %p559 = scmp.ne.s32.totalorder %s547, %s548
      %p560 = scmp.eq.s32.totalorder %s92, 1
      %p561 = por %p559, %p560
      %p563 = scmp.ne.s32.totalorder %s548, %s562
      %p564 = scmp.eq.s32.totalorder %s92, 0
      %p565 = por %p563, %p564
      %s567 = sadd.s32 %s566, 1
      %p570 = scmp.eq.s32.totalorder %s86, 1
      %p571 = scmp.ne.s32.totalorder %s566, %s568
      %p572 = scmp.eq.s32.totalorder %s86, 0
      %p573 = por %p571, %p572
      %p574 = scmp.ne.s32.totalorder %s566, %s568
      %p575 = scmp.eq.s32.totalorder %s91, 1
      %p576 = por %p574, %p575
      %p577 = scmp.ne.s32.totalorder %s568, %s569
      %p578 = scmp.eq.s32.totalorder %s91, 0
      %p579 = por %p577, %p578
      %p580 = scmp.ne.s32.totalorder %s568, %s569
      %p581 = scmp.eq.s32.totalorder %s92, 1
      %p582 = por %p580, %p581
      %p584 = scmp.ne.s32.totalorder %s569, %s583
      %p585 = scmp.eq.s32.totalorder %s92, 0
      %p586 = por %p584, %p585
      %s588 = sadd.s32 %s587, 1
      %p591 = scmp.eq.s32.totalorder %s86, 1
      %p592 = scmp.ne.s32.totalorder %s587, %s589
      %p593 = scmp.eq.s32.totalorder %s86, 0
      %p594 = por %p592, %p593
      %p595 = scmp.ne.s32.totalorder %s587, %s589
      %p596 = scmp.eq.s32.totalorder %s91, 1
      %p597 = por %p595, %p596
      %p598 = scmp.ne.s32.totalorder %s589, %s590
      %p599 = scmp.eq.s32.totalorder %s91, 0
      %p600 = por %p598, %p599
      %p601 = scmp.ne.s32.totalorder %s589, %s590
      %p602 = scmp.eq.s32.totalorder %s92, 1
      %p603 = por %p601, %p602
      %p605 = scmp.ne.s32.totalorder %s590, %s604
      %p606 = scmp.eq.s32.totalorder %s92, 0
      %p607 = por %p605, %p606
      %s609 = sadd.s32 %s608, 1
      %p612 = scmp.eq.s32.totalorder %s86, 1
      %p613 = scmp.ne.s32.totalorder %s608, %s610
      %p614 = scmp.eq.s32.totalorder %s86, 0
      %p615 = por %p613, %p614
      %p616 = scmp.ne.s32.totalorder %s608, %s610
      %p617 = scmp.eq.s32.totalorder %s91, 1
      %p618 = por %p616, %p617
      %p619 = scmp.ne.s32.totalorder %s610, %s611
      %p620 = scmp.eq.s32.totalorder %s91, 0
      %p621 = por %p619, %p620
      %p622 = scmp.ne.s32.totalorder %s610, %s611
      %p623 = scmp.eq.s32.totalorder %s92, 1
      %p624 = por %p622, %p623
      %p626 = scmp.ne.s32.totalorder %s611, %s625
      %p627 = scmp.eq.s32.totalorder %s92, 0
      %p628 = por %p626, %p627
      %s630 = sadd.s32 %s629, 1
      %p633 = scmp.eq.s32.totalorder %s86, 1
      %p634 = scmp.ne.s32.totalorder %s629, %s631
      %p635 = scmp.eq.s32.totalorder %s86, 0
      %p636 = por %p634, %p635
      %p637 = scmp.ne.s32.totalorder %s629, %s631
      %p638 = scmp.eq.s32.totalorder %s91, 1
      %p639 = por %p637, %p638
      %p640 = scmp.ne.s32.totalorder %s631, %s632
      %p641 = scmp.eq.s32.totalorder %s91, 0
      %p642 = por %p640, %p641
      %p643 = scmp.ne.s32.totalorder %s631, %s632
      %p644 = scmp.eq.s32.totalorder %s92, 1
      %p645 = por %p643, %p644
      %p647 = scmp.ne.s32.totalorder %s632, %s646
      %p648 = scmp.eq.s32.totalorder %s92, 0
      %p649 = por %p647, %p648
      %s650 = ssub.s32 %s86, %s93
      %p651 = scmp.eq.s32.totalorder %s650, 0
      %s653 = sadd.s32 %s652, 1
      %s654 = scalar_select %p651, %s652, %s653
      %p657 = pneg %p651
      %p658 = scmp.eq.s32.totalorder %s86, 1
      %p659 = por %p657, %p658
      %p660 = scmp.ne.s32.totalorder %s652, %s655
      %p661 = scmp.eq.s32.totalorder %s86, 0
      %p662 = por %p660, %p661
      %p663 = scmp.ne.s32.totalorder %s652, %s655
      %p664 = scmp.eq.s32.totalorder %s91, 1
      %p665 = por %p663, %p664
      %p666 = scmp.ne.s32.totalorder %s655, %s656
      %p667 = scmp.eq.s32.totalorder %s91, 0
      %p668 = por %p666, %p667
      %p669 = scmp.ne.s32.totalorder %s655, %s656
      %p670 = scmp.eq.s32.totalorder %s92, 1
      %p671 = por %p669, %p670
      %p673 = scmp.ne.s32.totalorder %s656, %s672
      %p674 = scmp.eq.s32.totalorder %s92, 0
      %p675 = por %p673, %p674
      %s676 = ssub.s32 %s86, %s93
      %p677 = scmp.eq.s32.totalorder %s676, 0
      %s679 = sadd.s32 %s678, 1
      %s680 = scalar_select %p677, %s678, %s679
      %p683 = pneg %p677
      %p684 = scmp.eq.s32.totalorder %s86, 1
      %p685 = por %p683, %p684
      %p686 = scmp.ne.s32.totalorder %s678, %s681
      %p687 = scmp.eq.s32.totalorder %s86, 0
      %p688 = por %p686, %p687
      %p689 = scmp.ne.s32.totalorder %s678, %s681
      %p690 = scmp.eq.s32.totalorder %s91, 1
      %p691 = por %p689, %p690
      %p692 = scmp.ne.s32.totalorder %s681, %s682
      %p693 = scmp.eq.s32.totalorder %s91, 0
      %p694 = por %p692, %p693
      %p695 = scmp.ne.s32.totalorder %s681, %s682
      %p696 = scmp.eq.s32.totalorder %s92, 1
      %p697 = por %p695, %p696
      %p699 = scmp.ne.s32.totalorder %s682, %s698
      %p700 = scmp.eq.s32.totalorder %s92, 0
      %p701 = por %p699, %p700
      %s702 = ssub.s32 %s86, %s93
      %p703 = scmp.eq.s32.totalorder %s702, 0
      %s705 = sadd.s32 %s704, 1
      %s706 = scalar_select %p703, %s704, %s705
      %p709 = pneg %p703
      %p710 = scmp.eq.s32.totalorder %s86, 1
      %p711 = por %p709, %p710
      %p712 = scmp.ne.s32.totalorder %s704, %s707
      %p713 = scmp.eq.s32.totalorder %s86, 0
      %p714 = por %p712, %p713
      %p715 = scmp.ne.s32.totalorder %s704, %s707
      %p716 = scmp.eq.s32.totalorder %s91, 1
      %p717 = por %p715, %p716
      %p718 = scmp.ne.s32.totalorder %s707, %s708
      %p719 = scmp.eq.s32.totalorder %s91, 0
      %p720 = por %p718, %p719
      %p721 = scmp.ne.s32.totalorder %s707, %s708
      %p722 = scmp.eq.s32.totalorder %s92, 1
      %p723 = por %p721, %p722
      %p725 = scmp.ne.s32.totalorder %s708, %s724
      %p726 = scmp.eq.s32.totalorder %s92, 0
      %p727 = por %p725, %p726
      %s728 = ssub.s32 %s86, %s93
      %p729 = scmp.eq.s32.totalorder %s728, 0
      %s731 = sadd.s32 %s730, 1
      %s732 = scalar_select %p729, %s730, %s731
      %p735 = pneg %p729
      %p736 = scmp.eq.s32.totalorder %s86, 1
      %p737 = por %p735, %p736
      %p738 = scmp.ne.s32.totalorder %s730, %s733
      %p739 = scmp.eq.s32.totalorder %s86, 0
      %p740 = por %p738, %p739
      %p741 = scmp.ne.s32.totalorder %s730, %s733
      %p742 = scmp.eq.s32.totalorder %s91, 1
      %p743 = por %p741, %p742
      %p744 = scmp.ne.s32.totalorder %s733, %s734
      %p745 = scmp.eq.s32.totalorder %s91, 0
      %p746 = por %p744, %p745
      %p747 = scmp.ne.s32.totalorder %s733, %s734
      %p748 = scmp.eq.s32.totalorder %s92, 1
      %p749 = por %p747, %p748
      %p751 = scmp.ne.s32.totalorder %s734, %s750
      %p752 = scmp.eq.s32.totalorder %s92, 0
      %p753 = por %p751, %p752
      %p754 = scmp.le.s32.totalorder 1, %s86
      %p755 = scmp.lt.s32.totalorder %s86, 3
      %p756 = pnand %p754, %p755
      %p757 = pneg %p756
      // Predicated region
      $region9: #{tpu_custom_call.1} parent=5 // pred_check
        _
      $region10: #{tpu_custom_call.1} parent=5 // pred_check_branch
        %759 = sbr.rel (%p756) target = $region12
      $region11: #{tpu_custom_call.1} parent=5 // pred_region
        %s760 = ssub.s32 %s86, 1
        // Predicated region
        $region13: #{tpu_custom_call.1} parent=11 // pred_check
          %p761 = pneg %p159
        $region14: #{tpu_custom_call.1} parent=11 // pred_check_branch
          %763 = sbr.rel (%p761) target = $region16
        $region15: #{tpu_custom_call.1} parent=11 // pred_region
          %s765 = ssub.s32 32, 32
          %766 = vsyncadd [#allocation6], %s765
          %s768 = sshll.u32 [#allocation5], 4
          %s769 = int_to_ptr.vmem [resolvable:$true] %s768
          %771 = dma.hbm_to_vmem [thread:$0]  %s5, 32, %s769, [#allocation6]
        $region16: #{tpu_custom_call.1} parent=11 // pred_fallthru
          _
        // Predicated region
        $region17: #{tpu_custom_call.1} parent=11 // pred_check
          %p772 = pneg %p180
        $region18: #{tpu_custom_call.1} parent=11 // pred_check_branch
          %774 = sbr.rel (%p772) target = $region20
        $region19: #{tpu_custom_call.1} parent=11 // pred_region
          %s776 = ssub.s32 16, 16
          %777 = vsyncadd [#allocation6], %s776
          %s779 = sshll.u32 [#allocation7], 4
          %s780 = int_to_ptr.vmem [resolvable:$true] %s779
          %782 = dma.hbm_to_vmem [thread:$0]  %s7, 16, %s780, [#allocation6]
        $region20: #{tpu_custom_call.1} parent=11 // pred_fallthru
          _
        // Predicated region
        $region21: #{tpu_custom_call.1} parent=11 // pred_check
          %p783 = pneg %p201
        $region22: #{tpu_custom_call.1} parent=11 // pred_check_branch
          %785 = sbr.rel (%p783) target = $region24
        $region23: #{tpu_custom_call.1} parent=11 // pred_region
          %s787 = ssub.s32 512, 512
          %788 = vsyncadd [#allocation9], %s787
          %s789 = sshll.u32 [#allocation8], 4
          %s790 = int_to_ptr.vmem [resolvable:$true] %s789
          %795 = dma.hbm_to_vmem [thread:$0]  %s9, 512, %s790, [#allocation9], 64, 64, 4
        $region24: #{tpu_custom_call.1} parent=11 // pred_fallthru
          _
        // Predicated region
        $region25: #{tpu_custom_call.1} parent=11 // pred_check
          %p796 = pneg %p222
        $region26: #{tpu_custom_call.1} parent=11 // pred_check_branch
          %798 = sbr.rel (%p796) target = $region28
        $region27: #{tpu_custom_call.1} parent=11 // pred_region
          %s800 = ssub.s32 16, 16
          %801 = vsyncadd [#allocation9], %s800
          %s803 = sshll.u32 [#allocation10], 4
          %s804 = int_to_ptr.vmem [resolvable:$true] %s803
          %806 = dma.hbm_to_vmem [thread:$0]  %s11, 16, %s804, [#allocation9]
        $region28: #{tpu_custom_call.1} parent=11 // pred_fallthru
          _
        // Predicated region
        $region29: #{tpu_custom_call.1} parent=11 // pred_check
          %p807 = pneg %p243
        $region30: #{tpu_custom_call.1} parent=11 // pred_check_branch
          %809 = sbr.rel (%p807) target = $region32
        $region31: #{tpu_custom_call.1} parent=11 // pred_region
          _
        $region32: #{tpu_custom_call.1} parent=11 // pred_fallthru
          _
        // Predicated region
        $region33: #{tpu_custom_call.1} parent=11 // pred_check
          %p810 = pneg %p264
        $region34: #{tpu_custom_call.1} parent=11 // pred_check_branch
          %812 = sbr.rel (%p810) target = $region36
        $region35: #{tpu_custom_call.1} parent=11 // pred_region
          _
        $region36: #{tpu_custom_call.1} parent=11 // pred_fallthru
          _
        // Predicated region
        $region37: #{tpu_custom_call.1} parent=11 // pred_check
          %p813 = pneg %p285
        $region38: #{tpu_custom_call.1} parent=11 // pred_check_branch
          %815 = sbr.rel (%p813) target = $region40
        $region39: #{tpu_custom_call.1} parent=11 // pred_region
          %s817 = ssub.s32 8192, 8192
          %818 = vsyncadd [#allocation12], %s817
          %s819 = sshll.u32 [#allocation11], 4
          %s820 = int_to_ptr.vmem [resolvable:$true] %s819
          %825 = dma.hbm_to_vmem [thread:$0]  %s17, 8192, %s820, [#allocation12], 128, 128, 8
        $region40: #{tpu_custom_call.1} parent=11 // pred_fallthru
          _
        // Predicated region
        $region41: #{tpu_custom_call.1} parent=11 // pred_check
          %p826 = pneg %p306
        $region42: #{tpu_custom_call.1} parent=11 // pred_check_branch
          %828 = sbr.rel (%p826) target = $region44
        $region43: #{tpu_custom_call.1} parent=11 // pred_region
          %s830 = ssub.s32 32, 32
          %831 = vsyncadd [#allocation12], %s830
          %s833 = sshll.u32 [#allocation13], 4
          %s834 = int_to_ptr.vmem [resolvable:$true] %s833
          %836 = dma.hbm_to_vmem [thread:$0]  %s19, 32, %s834, [#allocation12]
        $region44: #{tpu_custom_call.1} parent=11 // pred_fallthru
          _
        // Predicated region
        $region45: #{tpu_custom_call.1} parent=11 // pred_check
          %p837 = pneg %p327
        $region46: #{tpu_custom_call.1} parent=11 // pred_check_branch
          %839 = sbr.rel (%p837) target = $region48
        $region47: #{tpu_custom_call.1} parent=11 // pred_region
          _
        $region48: #{tpu_custom_call.1} parent=11 // pred_fallthru
          _
        // Predicated region
        $region49: #{tpu_custom_call.1} parent=11 // pred_check
          %p840 = pneg %p348
        $region50: #{tpu_custom_call.1} parent=11 // pred_check_branch
          %842 = sbr.rel (%p840) target = $region52
        $region51: #{tpu_custom_call.1} parent=11 // pred_region
          %s844 = ssub.s32 16, 16
          %845 = vsyncadd [#allocation15], %s844
          %s847 = sshll.u32 [#allocation14], 4
          %s848 = int_to_ptr.vmem [resolvable:$true] %s847
          %850 = dma.hbm_to_vmem [thread:$0]  %s23, 16, %s848, [#allocation15]
        $region52: #{tpu_custom_call.1} parent=11 // pred_fallthru
          _
        // Predicated region
        $region53: #{tpu_custom_call.1} parent=11 // pred_check
          %p851 = pneg %p369
        $region54: #{tpu_custom_call.1} parent=11 // pred_check_branch
          %853 = sbr.rel (%p851) target = $region56
        $region55: #{tpu_custom_call.1} parent=11 // pred_region
          %s855 = ssub.s32 1024, 1024
          %856 = vsyncadd [#allocation15], %s855
          %s857 = sshll.u32 [#allocation16], 4
          %s858 = int_to_ptr.vmem [resolvable:$true] %s857
          %863 = dma.hbm_to_vmem [thread:$0]  %s25, 1024, %s858, [#allocation15], 64, 64, 4
        $region56: #{tpu_custom_call.1} parent=11 // pred_fallthru
          _
        // Predicated region
        $region57: #{tpu_custom_call.1} parent=11 // pred_check
          %p864 = pneg %p390
        $region58: #{tpu_custom_call.1} parent=11 // pred_check_branch
          %866 = sbr.rel (%p864) target = $region60
        $region59: #{tpu_custom_call.1} parent=11 // pred_region
          %s868 = ssub.s32 1024, 1024
          %869 = vsyncadd [#allocation18], %s868
          %s870 = sshll.u32 [#allocation17], 4
          %s871 = int_to_ptr.vmem [resolvable:$true] %s870
          %876 = dma.hbm_to_vmem [thread:$0]  %s27, 1024, %s871, [#allocation18], 64, 64, 4
        $region60: #{tpu_custom_call.1} parent=11 // pred_fallthru
          _
        // Predicated region
        $region61: #{tpu_custom_call.1} parent=11 // pred_check
          %p877 = pneg %p411
        $region62: #{tpu_custom_call.1} parent=11 // pred_check_branch
          %879 = sbr.rel (%p877) target = $region64
        $region63: #{tpu_custom_call.1} parent=11 // pred_region
          %s881 = ssub.s32 16, 16
          %882 = vsyncadd [#allocation18], %s881
          %s884 = sshll.u32 [#allocation19], 4
          %s885 = int_to_ptr.vmem [resolvable:$true] %s884
          %887 = dma.hbm_to_vmem [thread:$0]  %s29, 16, %s885, [#allocation18]
        $region64: #{tpu_custom_call.1} parent=11 // pred_fallthru
          _
        // Predicated region
        $region65: #{tpu_custom_call.1} parent=11 // pred_check
          %p888 = pneg %p432
        $region66: #{tpu_custom_call.1} parent=11 // pred_check_branch
          %890 = sbr.rel (%p888) target = $region68
        $region67: #{tpu_custom_call.1} parent=11 // pred_region
          %s892 = ssub.s32 1024, 1024
          %893 = vsyncadd [#allocation21], %s892
          %s894 = sshll.u32 [#allocation20], 4
          %s895 = int_to_ptr.vmem [resolvable:$true] %s894
          %900 = dma.hbm_to_vmem [thread:$0]  %s31, 1024, %s895, [#allocation21], 64, 64, 4
        $region68: #{tpu_custom_call.1} parent=11 // pred_fallthru
          _
        // Predicated region
        $region69: #{tpu_custom_call.1} parent=11 // pred_check
          %p901 = pneg %p453
        $region70: #{tpu_custom_call.1} parent=11 // pred_check_branch
          %903 = sbr.rel (%p901) target = $region72
        $region71: #{tpu_custom_call.1} parent=11 // pred_region
          _
        $region72: #{tpu_custom_call.1} parent=11 // pred_fallthru
          _
        // Predicated region
        $region73: #{tpu_custom_call.1} parent=11 // pred_check
          %p904 = pneg %p474
        $region74: #{tpu_custom_call.1} parent=11 // pred_check_branch
          %906 = sbr.rel (%p904) target = $region76
        $region75: #{tpu_custom_call.1} parent=11 // pred_region
          %s908 = ssub.s32 1024, 1024
          %909 = vsyncadd [#allocation21], %s908
          %s910 = sshll.u32 [#allocation22], 4
          %s911 = int_to_ptr.vmem [resolvable:$true] %s910
          %916 = dma.hbm_to_vmem [thread:$0]  %s35, 1024, %s911, [#allocation21], 64, 64, 4
        $region76: #{tpu_custom_call.1} parent=11 // pred_fallthru
          _
        // Predicated region
        $region77: #{tpu_custom_call.1} parent=11 // pred_check
          %p917 = pneg %p495
        $region78: #{tpu_custom_call.1} parent=11 // pred_check_branch
          %919 = sbr.rel (%p917) target = $region80
        $region79: #{tpu_custom_call.1} parent=11 // pred_region
          %s921 = ssub.s32 1024, 1024
          %922 = vsyncadd [#allocation24], %s921
          %s923 = sshll.u32 [#allocation23], 4
          %s924 = int_to_ptr.vmem [resolvable:$true] %s923
          %929 = dma.hbm_to_vmem [thread:$0]  %s37, 1024, %s924, [#allocation24], 64, 64, 4
        $region80: #{tpu_custom_call.1} parent=11 // pred_fallthru
          _
        // Predicated region
        $region81: #{tpu_custom_call.1} parent=11 // pred_check
          %p930 = pneg %p516
        $region82: #{tpu_custom_call.1} parent=11 // pred_check_branch
          %932 = sbr.rel (%p930) target = $region84
        $region83: #{tpu_custom_call.1} parent=11 // pred_region
          _
        $region84: #{tpu_custom_call.1} parent=11 // pred_fallthru
          _
        // Predicated region
        $region85: #{tpu_custom_call.1} parent=11 // pred_check
          %p933 = pneg %p537
        $region86: #{tpu_custom_call.1} parent=11 // pred_check_branch
          %935 = sbr.rel (%p933) target = $region88
        $region87: #{tpu_custom_call.1} parent=11 // pred_region
          _
        $region88: #{tpu_custom_call.1} parent=11 // pred_fallthru
          _
        // Predicated region
        $region89: #{tpu_custom_call.1} parent=11 // pred_check
          %p936 = pneg %p558
        $region90: #{tpu_custom_call.1} parent=11 // pred_check_branch
          %938 = sbr.rel (%p936) target = $region92
        $region91: #{tpu_custom_call.1} parent=11 // pred_region
          %s940 = ssub.s32 16, 16
          %941 = vsyncadd [#allocation24], %s940
          %s943 = sshll.u32 [#allocation25], 4
          %s944 = int_to_ptr.vmem [resolvable:$true] %s943
          %946 = dma.hbm_to_vmem [thread:$0]  %s43, 16, %s944, [#allocation24]
        $region92: #{tpu_custom_call.1} parent=11 // pred_fallthru
          _
        // Predicated region
        $region93: #{tpu_custom_call.1} parent=11 // pred_check
          %p947 = pneg %p579
        $region94: #{tpu_custom_call.1} parent=11 // pred_check_branch
          %949 = sbr.rel (%p947) target = $region96
        $region95: #{tpu_custom_call.1} parent=11 // pred_region
          _
        $region96: #{tpu_custom_call.1} parent=11 // pred_fallthru
          _
        // Predicated region
        $region97: #{tpu_custom_call.1} parent=11 // pred_check
          %p950 = pneg %p600
        $region98: #{tpu_custom_call.1} parent=11 // pred_check_branch
          %952 = sbr.rel (%p950) target = $region100
        $region99: #{tpu_custom_call.1} parent=11 // pred_region
          %s954 = ssub.s32 16, 16
          %955 = vsyncadd [#allocation27], %s954
          %s957 = sshll.u32 [#allocation26], 4
          %s958 = int_to_ptr.vmem [resolvable:$true] %s957
          %960 = dma.hbm_to_vmem [thread:$0]  %s47, 16, %s958, [#allocation27]
        $region100: #{tpu_custom_call.1} parent=11 // pred_fallthru
          _
        // Predicated region
        $region101: #{tpu_custom_call.1} parent=11 // pred_check
          %p961 = pneg %p621
        $region102: #{tpu_custom_call.1} parent=11 // pred_check_branch
          %963 = sbr.rel (%p961) target = $region104
        $region103: #{tpu_custom_call.1} parent=11 // pred_region
          _
        $region104: #{tpu_custom_call.1} parent=11 // pred_fallthru
          _
        // Predicated region
        $region105: #{tpu_custom_call.1} parent=11 // pred_check
          %p964 = pneg %p642
        $region106: #{tpu_custom_call.1} parent=11 // pred_check_branch
          %966 = sbr.rel (%p964) target = $region108
        $region107: #{tpu_custom_call.1} parent=11 // pred_region
          %s968 = ssub.s32 16, 16
          %969 = vsyncadd [#allocation27], %s968
          %s971 = sshll.u32 [#allocation28], 4
          %s972 = int_to_ptr.vmem [resolvable:$true] %s971
          %974 = dma.hbm_to_vmem [thread:$0]  %s51, 16, %s972, [#allocation27]
        $region108: #{tpu_custom_call.1} parent=11 // pred_fallthru
          _
      $region12: #{tpu_custom_call.1} parent=5 // pred_fallthru
        _
      %p975 = scmp.lt.s32.totalorder %s86, 2
      // Predicated region
      $region109: #{tpu_custom_call.1} parent=5 // pred_check
        %p976 = pneg %p975
      $region110: #{tpu_custom_call.1} parent=5 // pred_check_branch
        %978 = sbr.rel (%p976) target = $region112
      $region111: #{tpu_custom_call.1} parent=5 // pred_region
        // Predicated region
        $region113: #{tpu_custom_call.1} parent=111 // pred_check
          %p979 = pneg %p106
        $region114: #{tpu_custom_call.1} parent=111 // pred_check_branch
          %981 = sbr.rel (%p979) target = $region116
        $region115: #{tpu_custom_call.1} parent=111 // pred_region
          %p982 = scmp.lt.s32.totalorder %s86, 1
          %s983 = scalar_select %p982, %s86, 1
          %s984 = smul.addr %s983, 4
          %s985 = smul.addr %s984, 8
          %s986 = scalar_lea.vmem %s1, %s985
        $region116: #{tpu_custom_call.1} parent=111 // pred_fallthru
          _
        // Predicated region
        $region117: #{tpu_custom_call.1} parent=111 // pred_check
          %p987 = pneg %p132
        $region118: #{tpu_custom_call.1} parent=111 // pred_check_branch
          %989 = sbr.rel (%p987) target = $region120
        $region119: #{tpu_custom_call.1} parent=111 // pred_region
          %s990 = sand.u32 %s122, 1
          %s991 = scalar_lea.sflag [#allocation3], %s990
          %s992 = sand.u32 %s122, 1
          %s993 = smul.addr %s992, 4
          %s994 = scalar_lea.vmem [#allocation2], %s993
          %s996 = ssub.s32 64, 64
          %997 = vsyncadd %s991, %s996
          %s998 = smul.addr %s86, 4
          %s999 = smul.addr %s998, 16
          %s1000 = scalar_lea.hbm %s3, %s999
          %s1002 = sshll.u32 %s994, 4
          %s1003 = int_to_ptr.vmem [resolvable:$true] %s1002
          %1005 = dma.hbm_to_vmem [thread:$0]  %s1000, 64, %s1003, %s991
        $region120: #{tpu_custom_call.1} parent=111 // pred_fallthru
          _
      $region112: #{tpu_custom_call.1} parent=5 // pred_fallthru
        _
      %p1006 = scmp.le.s32.totalorder 1, %s86
      %p1007 = scmp.lt.s32.totalorder %s86, 3
      %p1008 = pnand %p1006, %p1007
      %p1009 = pneg %p1008
      // Predicated region
      $region121: #{tpu_custom_call.1} parent=5 // pred_check
        _
      $region122: #{tpu_custom_call.1} parent=5 // pred_check_branch
        %1011 = sbr.rel (%p1008) target = $region124
      $region123: #{tpu_custom_call.1} parent=5 // pred_region
        %s1012 = ssub.s32 %s86, 1
        %s1013 = sand.u32 %s125, 1
        %s1014 = scalar_lea.sflag [#allocation3], %s1013
        %s1015 = sand.u32 %s125, 1
        %s1016 = smul.addr %s1015, 4
        %s1017 = scalar_lea.vmem [#allocation2], %s1016
        // Predicated region
        $region125: #{tpu_custom_call.1} parent=123 // pred_check
          %p1018 = pneg %p138
        $region126: #{tpu_custom_call.1} parent=123 // pred_check_branch
          %1020 = sbr.rel (%p1018) target = $region128
        $region127: #{tpu_custom_call.1} parent=123 // pred_region
          %1021 = dma.done %s1014, 64
        $region128: #{tpu_custom_call.1} parent=123 // pred_fallthru
          _
        // Predicated region
        $region129: #{tpu_custom_call.1} parent=123 // pred_check
          %p1022 = pneg %p159
        $region130: #{tpu_custom_call.1} parent=123 // pred_check_branch
          %1024 = sbr.rel (%p1022) target = $region132
        $region131: #{tpu_custom_call.1} parent=123 // pred_region
          %1025 = dma.done [#allocation6], 32
        $region132: #{tpu_custom_call.1} parent=123 // pred_fallthru
          _
        // Predicated region
        $region133: #{tpu_custom_call.1} parent=123 // pred_check
          %p1026 = pneg %p180
        $region134: #{tpu_custom_call.1} parent=123 // pred_check_branch
          %1028 = sbr.rel (%p1026) target = $region136
        $region135: #{tpu_custom_call.1} parent=123 // pred_region
          %1029 = dma.done [#allocation6], 16
        $region136: #{tpu_custom_call.1} parent=123 // pred_fallthru
          _
        // Predicated region
        $region137: #{tpu_custom_call.1} parent=123 // pred_check
          %p1030 = pneg %p201
        $region138: #{tpu_custom_call.1} parent=123 // pred_check_branch
          %1032 = sbr.rel (%p1030) target = $region140
        $region139: #{tpu_custom_call.1} parent=123 // pred_region
          %1033 = dma.done [#allocation9], 512
        $region140: #{tpu_custom_call.1} parent=123 // pred_fallthru
          _
        // Predicated region
        $region141: #{tpu_custom_call.1} parent=123 // pred_check
          %p1034 = pneg %p222
        $region142: #{tpu_custom_call.1} parent=123 // pred_check_branch
          %1036 = sbr.rel (%p1034) target = $region144
        $region143: #{tpu_custom_call.1} parent=123 // pred_region
          %1037 = dma.done [#allocation9], 16
        $region144: #{tpu_custom_call.1} parent=123 // pred_fallthru
          _
        // Predicated region
        $region145: #{tpu_custom_call.1} parent=123 // pred_check
          %p1038 = pneg %p285
        $region146: #{tpu_custom_call.1} parent=123 // pred_check_branch
          %1040 = sbr.rel (%p1038) target = $region148
        $region147: #{tpu_custom_call.1} parent=123 // pred_region
          %1041 = dma.done [#allocation12], 8192
        $region148: #{tpu_custom_call.1} parent=123 // pred_fallthru
          _
        // Predicated region
        $region149: #{tpu_custom_call.1} parent=123 // pred_check
          %p1042 = pneg %p306
        $region150: #{tpu_custom_call.1} parent=123 // pred_check_branch
          %1044 = sbr.rel (%p1042) target = $region152
        $region151: #{tpu_custom_call.1} parent=123 // pred_region
          %1045 = dma.done [#allocation12], 32
        $region152: #{tpu_custom_call.1} parent=123 // pred_fallthru
          _
        // Predicated region
        $region153: #{tpu_custom_call.1} parent=123 // pred_check
          %p1046 = pneg %p348
        $region154: #{tpu_custom_call.1} parent=123 // pred_check_branch
          %1048 = sbr.rel (%p1046) target = $region156
        $region155: #{tpu_custom_call.1} parent=123 // pred_region
          %1049 = dma.done [#allocation15], 16
        $region156: #{tpu_custom_call.1} parent=123 // pred_fallthru
          _
        // Predicated region
        $region157: #{tpu_custom_call.1} parent=123 // pred_check
          %p1050 = pneg %p369
        $region158: #{tpu_custom_call.1} parent=123 // pred_check_branch
          %1052 = sbr.rel (%p1050) target = $region160
        $region159: #{tpu_custom_call.1} parent=123 // pred_region
          %1053 = dma.done [#allocation15], 1024
        $region160: #{tpu_custom_call.1} parent=123 // pred_fallthru
          _
        // Predicated region
        $region161: #{tpu_custom_call.1} parent=123 // pred_check
          %p1054 = pneg %p390
        $region162: #{tpu_custom_call.1} parent=123 // pred_check_branch
          %1056 = sbr.rel (%p1054) target = $region164
        $region163: #{tpu_custom_call.1} parent=123 // pred_region
          %1057 = dma.done [#allocation18], 1024
        $region164: #{tpu_custom_call.1} parent=123 // pred_fallthru
          _
        // Predicated region
        $region165: #{tpu_custom_call.1} parent=123 // pred_check
          %p1058 = pneg %p411
        $region166: #{tpu_custom_call.1} parent=123 // pred_check_branch
          %1060 = sbr.rel (%p1058) target = $region168
        $region167: #{tpu_custom_call.1} parent=123 // pred_region
          %1061 = dma.done [#allocation18], 16
        $region168: #{tpu_custom_call.1} parent=123 // pred_fallthru
          _
        // Predicated region
        $region169: #{tpu_custom_call.1} parent=123 // pred_check
          %p1062 = pneg %p432
        $region170: #{tpu_custom_call.1} parent=123 // pred_check_branch
          %1064 = sbr.rel (%p1062) target = $region172
        $region171: #{tpu_custom_call.1} parent=123 // pred_region
          %1065 = dma.done [#allocation21], 1024
        $region172: #{tpu_custom_call.1} parent=123 // pred_fallthru
          _
        // Predicated region
        $region173: #{tpu_custom_call.1} parent=123 // pred_check
          %p1066 = pneg %p474
        $region174: #{tpu_custom_call.1} parent=123 // pred_check_branch
          %1068 = sbr.rel (%p1066) target = $region176
        $region175: #{tpu_custom_call.1} parent=123 // pred_region
          %1069 = dma.done [#allocation21], 1024
        $region176: #{tpu_custom_call.1} parent=123 // pred_fallthru
          _
        // Predicated region
        $region177: #{tpu_custom_call.1} parent=123 // pred_check
          %p1070 = pneg %p495
        $region178: #{tpu_custom_call.1} parent=123 // pred_check_branch
          %1072 = sbr.rel (%p1070) target = $region180
        $region179: #{tpu_custom_call.1} parent=123 // pred_region
          %1073 = dma.done [#allocation24], 1024
        $region180: #{tpu_custom_call.1} parent=123 // pred_fallthru
          _
        // Predicated region
        $region181: #{tpu_custom_call.1} parent=123 // pred_check
          %p1074 = pneg %p558
        $region182: #{tpu_custom_call.1} parent=123 // pred_check_branch
          %1076 = sbr.rel (%p1074) target = $region184
        $region183: #{tpu_custom_call.1} parent=123 // pred_region
          %1077 = dma.done [#allocation24], 16
        $region184: #{tpu_custom_call.1} parent=123 // pred_fallthru
          _
        // Predicated region
        $region185: #{tpu_custom_call.1} parent=123 // pred_check
          %p1078 = pneg %p600
        $region186: #{tpu_custom_call.1} parent=123 // pred_check_branch
          %1080 = sbr.rel (%p1078) target = $region188
        $region187: #{tpu_custom_call.1} parent=123 // pred_region
          %1081 = dma.done [#allocation27], 16
        $region188: #{tpu_custom_call.1} parent=123 // pred_fallthru
          _
        // Predicated region
        $region189: #{tpu_custom_call.1} parent=123 // pred_check
          %p1082 = pneg %p642
        $region190: #{tpu_custom_call.1} parent=123 // pred_check_branch
          %1084 = sbr.rel (%p1082) target = $region192
        $region191: #{tpu_custom_call.1} parent=123 // pred_region
          %1085 = dma.done [#allocation27], 16
        $region192: #{tpu_custom_call.1} parent=123 // pred_fallthru
          _
        %p1086 = scmp.lt.s32.totalorder %s91, 1
        %s1087 = scalar_select %p1086, %s91, 1
        %s1088 = smul.addr %s1087, 4
        %s1089 = smul.addr %s1088, 8
        %s1090 = scalar_lea.vmem %s1, %s1089
        %p1091 = pneg %p112
        %p1092 = pneg %p109
        %s1093 = sand.u32 %s125, 1
        %s1094 = scalar_lea.sflag [#allocation3], %s1093
        %s1095 = sand.u32 %s125, 1
        %s1096 = smul.addr %s1095, 4
        %s1097 = scalar_lea.vmem [#allocation2], %s1096
        %p1098 = pneg %p138
        %p1099 = pneg %p135
        %p1100 = pneg %p159
        %p1101 = pneg %p156
        %p1102 = pneg %p180
        %p1103 = pneg %p177
        %p1104 = pneg %p201
        %p1105 = pneg %p198
        %p1106 = pneg %p222
        %p1107 = pneg %p219
        %p1108 = pneg %p243
        %p1109 = pneg %p240
        %p1110 = pneg %p264
        %p1111 = pneg %p261
        %p1112 = pneg %p285
        %p1113 = pneg %p282
        %p1114 = pneg %p306
        %p1115 = pneg %p303
        %p1116 = pneg %p327
        %p1117 = pneg %p324
        %p1118 = pneg %p348
        %p1119 = pneg %p345
        %p1120 = pneg %p369
        %p1121 = pneg %p366
        %p1122 = pneg %p390
        %p1123 = pneg %p387
        %p1124 = pneg %p411
        %p1125 = pneg %p408
        %p1126 = pneg %p432
        %p1127 = pneg %p429
        %p1128 = pneg %p453
        %p1129 = pneg %p450
        %p1130 = pneg %p474
        %p1131 = pneg %p471
        %p1132 = pneg %p495
        %p1133 = pneg %p492
        %p1134 = pneg %p516
        %p1135 = pneg %p513
        %p1136 = pneg %p537
        %p1137 = pneg %p534
        %p1138 = pneg %p558
        %p1139 = pneg %p555
        %p1140 = pneg %p579
        %p1141 = pneg %p576
        %p1142 = pneg %p600
        %p1143 = pneg %p597
        %p1144 = pneg %p621
        %p1145 = pneg %p618
        %p1146 = pneg %p642
        %p1147 = pneg %p639
        %p1148 = pneg %p668
        %p1149 = pneg %p665
        %s1150 = sand.u32 %s655, 1
        %s1151 = scalar_lea.sflag [#allocation4], %s1150
        %s1152 = sand.u32 %s655, 1
        %s1153 = smul.addr %s1152, 32
        %s1154 = scalar_lea.vmem [#allocation29], %s1153
        %p1155 = pneg %p694
        %p1156 = pneg %p691
        %s1157 = sand.u32 %s91, 1
        %s1158 = scalar_lea.sflag [#allocation31], %s1157
        %s1159 = sand.u32 %s681, 1
        %s1160 = smul.addr %s1159, 32
        %s1161 = scalar_lea.vmem [#allocation30], %s1160
        %p1162 = pneg %p720
        %p1163 = pneg %p717
        %s1164 = sand.u32 %s91, 1
        %s1165 = scalar_lea.sflag [#allocation31], %s1164
        %s1166 = sand.u32 %s707, 1
        %s1167 = smul.addr %s1166, 32
        %s1168 = scalar_lea.vmem [#allocation32], %s1167
        %p1169 = pneg %p746
        %p1170 = pneg %p743
        %s1171 = sand.u32 %s733, 1
        %s1172 = scalar_lea.sflag [#allocation34], %s1171
        %s1173 = sand.u32 %s733, 1
        %s1174 = smul.addr %s1173, 32
        %s1175 = scalar_lea.vmem [#allocation33], %s1174
        %p1176 = scmp.lt.s32.totalorder %s91, 1
        %s1177 = scalar_select %p1176, %s91, 1
        %s1178 = smul.addr %s1177, 4
        %s1179 = smul.addr %s1178, 8
        %s1180 = scalar_lea.vmem %s1, %s1179
        %v1182 = vld [vmem:[%s1180] sm:$0xff]
        %v1183 = vld [vmem:[%s1180 + $0x8] sm:$0xff]
        %v1184 = vld [vmem:[%s1180 + $0x10] sm:$0xff]
        %v1185 = vld [vmem:[%s1180 + $0x18] sm:$0xff]
        %v1186 = vld [vmem:[%s1017] sm:$0xf]
        %v1187 = vld [vmem:[#allocation5] sm:$0x3]
        %v1188 = vpack.c.bf16 %v1183, %v1182
        %v1189 = vpack.c.bf16 %v1185, %v1184
        %v1190 = vld [vmem:[#allocation7] sm:$0x1]
        %v1192 = vlaneseq
        %v1193 = vshrl.u32 %v1192, 7
        %v1194 = vsub.s32 0, %v1193
        %v1195 = vrot.slane %v1190, %v1194
        %vm1197 = vcmask 31744
        %v1199 = vsel %vm1197, %v1188, 0
        %v1202 = vsel %vm1197, %v1189, 0
        %vm1204 = vcmask 1041408
        %v1206 = vsel %vm1204, %v1187, 0
        %1208 = vmatprep.subr.bf16.mxu0 0
        %1209 = vmatpush1.bf16.msra.mxu0 %v1206
        %1210 = vmatprep.subr.bf16.mxu0 0
        %1211 = vmatpush1.bf16.msra.mxu0 0
        %1212 = vmatprep.subr.bf16.mxu0 0
        %1213 = vmatpush1.bf16.msra.mxu0 0
        %1214 = vmatprep.subr.bf16.mxu0 0
        %1215 = vmatpush1.bf16.msra.mxu0 0
        %1216 = vmatprep.subr.bf16.mxu0 0
        %1217 = vmatpush1.bf16.msra.mxu0 0
        %1218 = vmatprep.subr.bf16.mxu0 0
        %1219 = vmatpush1.bf16.msra.mxu0 0
        %1220 = vmatprep.subr.bf16.mxu0 0
        %1221 = vmatpush1.bf16.msra.mxu0 0
        %1222 = vmatprep.subr.bf16.mxu0 0
        %1223 = vmatpush1.bf16.msra.mxu0 0
        %1224 = vmatprep.subr.bf16.mxu0 0
        %1225 = vmatpush1.bf16.msra.mxu0 0
        %1226 = vmatprep.subr.bf16.mxu0 0
        %1227 = vmatpush1.bf16.msra.mxu0 0
        %1228 = vmatprep.subr.bf16.mxu0 0
        %1229 = vmatpush1.bf16.msra.mxu0 0
        %1230 = vmatprep.subr.bf16.mxu0 0
        %1231 = vmatpush1.bf16.msra.mxu0 0
        %1232 = vmatprep.subr.bf16.mxu0 0
        %1233 = vmatpush1.bf16.msra.mxu0 0
        %1234 = vmatprep.subr.bf16.mxu0 0
        %1235 = vmatpush1.bf16.msra.mxu0 0
        %1236 = vmatprep.subr.bf16.mxu0 0
        %1237 = vmatpush1.bf16.msra.mxu0 0
        %1238 = vmatprep.subr.bf16.mxu0 0
        %1239 = vmatpush1.bf16.msra.mxu0 0
        %1240 = vmatprep.mubr.bf16.mxu0 0
        %1241 = vmatmul.mubr.bf16.gmra.mrb[0].mxu0 %v1199
        %v1242 = vpop.f32.mrb[0].mxu0
        %v1243 = vadd.f32 %v1195, %v1242
        %v1244 = vpop.f32.mrb[0].mxu0
        %v1245 = vpop.f32.mrb[0].mxu0
        %v1246 = vadd.f32 %v1195, %v1245
        %v1247 = vpop.f32.mrb[0].mxu0
        %1248 = vmatprep.mubr.bf16.mxu0 0
        %1249 = vmatmul.mubr.bf16.gmra.mrb[0].mxu0 %v1202
        %v1250 = vpop.f32.mrb[0].mxu0
        %v1251 = vadd.f32 %v1195, %v1250
        %v1252 = vpop.f32.mrb[0].mxu0
        %v1253 = vpop.f32.mrb[0].mxu0
        %v1254 = vadd.f32 %v1195, %v1253
        %v1255 = vpop.f32.mrb[0].mxu0
        %1256 = vdwg.mxu0
        %v1257 = vmax.f32 %v1243, 0.0
        %v1258 = vmax.f32 %v1246, 0.0
        %v1259 = vmax.f32 %v1251, 0.0
        %v1260 = vmax.f32 %v1254, 0.0
        %v1261 = vld [vmem:[#allocation8] sm:$0xf]
        %v1262 = vld [vmem:[#allocation8 + $0x4] sm:$0xf]
        %v1263 = vld [vmem:[#allocation8 + $0x8] sm:$0xf]
        %v1264 = vld [vmem:[#allocation8 + $0xc] sm:$0xf]
        %v1265 = vld [vmem:[#allocation8 + $0x10] sm:$0xf]
        %v1266 = vld [vmem:[#allocation8 + $0x14] sm:$0xf]
        %v1267 = vld [vmem:[#allocation8 + $0x18] sm:$0xf]
        %v1268 = vld [vmem:[#allocation8 + $0x1c] sm:$0xf]
        %v1269 = vpack.c.bf16 %v1258, %v1257
        %v1270 = vpack.c.bf16 %v1260, %v1259
        %v1271 = vld [vmem:[#allocation10] sm:$0x1]
        %v1273 = vlaneseq
        %v1274 = vshrl.u32 %v1273, 7
        %v1275 = vsub.s32 0, %v1274
        %v1276 = vrot.slane %v1271, %v1275
        %v1286 = vunpack.c.l.b16 %v1261
        %v1287 = vunpack.c.l.b16 %v1262
        %v1288 = vunpack.c.l.b16 %v1263
        %v1289 = vunpack.c.l.b16 %v1264
        %v1290 = vunpack.c.l.b16 %v1265
        %v1291 = vunpack.c.l.b16 %v1266
        %v1292 = vunpack.c.l.b16 %v1267
        %v1293 = vunpack.c.l.b16 %v1268
        %v1294 = vpack.c.b16 %v1287, %v1286
        %v1295 = vpack.c.b16 %v1289, %v1288
        %v1296 = vpack.c.b16 %v1291, %v1290
        %v1297 = vpack.c.b16 %v1293, %v1292
        %vm1302 = vcmask 523264
        %v1304 = vsel %vm1302, %v1269, 0
        %v1307 = vsel %vm1302, %v1270, 0
        %1309 = vmatprep.subr.bf16.mxu0 0
        %1310 = vmatpush1.bf16.msra.mxu0 %v1294
        %1311 = vmatprep.subr.bf16.mxu0 0
        %1312 = vmatpush1.bf16.msra.mxu0 %v1295
        %1313 = vmatprep.subr.bf16.mxu0 0
        %1314 = vmatpush1.bf16.msra.mxu0 %v1296
        %1315 = vmatprep.subr.bf16.mxu0 0
        %1316 = vmatpush1.bf16.msra.mxu0 %v1297
        %1317 = vmatprep.subr.bf16.mxu0 0
        %1318 = vmatpush1.bf16.msra.mxu0 0
        %1319 = vmatprep.subr.bf16.mxu0 0
        %1320 = vmatpush1.bf16.msra.mxu0 0
        %1321 = vmatprep.subr.bf16.mxu0 0
        %1322 = vmatpush1.bf16.msra.mxu0 0
        %1323 = vmatprep.subr.bf16.mxu0 0
        %1324 = vmatpush1.bf16.msra.mxu0 0
        %1325 = vmatprep.subr.bf16.mxu0 0
        %1326 = vmatpush1.bf16.msra.mxu0 0
        %1327 = vmatprep.subr.bf16.mxu0 0
        %1328 = vmatpush1.bf16.msra.mxu0 0
        %1329 = vmatprep.subr.bf16.mxu0 0
        %1330 = vmatpush1.bf16.msra.mxu0 0
        %1331 = vmatprep.subr.bf16.mxu0 0
        %1332 = vmatpush1.bf16.msra.mxu0 0
        %1333 = vmatprep.subr.bf16.mxu0 0
        %1334 = vmatpush1.bf16.msra.mxu0 0
        %1335 = vmatprep.subr.bf16.mxu0 0
        %1336 = vmatpush1.bf16.msra.mxu0 0
        %1337 = vmatprep.subr.bf16.mxu0 0
        %1338 = vmatpush1.bf16.msra.mxu0 0
        %1339 = vmatprep.subr.bf16.mxu0 0
        %1340 = vmatpush1.bf16.msra.mxu0 0
        %1341 = vmatprep.mubr.bf16.mxu0 0
        %1342 = vmatmul.mubr.bf16.gmra.mrb[0].mxu0 %v1304
        %v1343 = vpop.f32.mrb[0].mxu0
        %v1344 = vadd.f32 %v1276, %v1343
        %v1345 = vpop.f32.mrb[0].mxu0
        %v1346 = vpop.f32.mrb[0].mxu0
        %v1347 = vadd.f32 %v1276, %v1346
        %v1348 = vpop.f32.mrb[0].mxu0
        %1349 = vmatprep.mubr.bf16.mxu0 0
        %1350 = vmatmul.mubr.bf16.gmra.mrb[0].mxu0 %v1307
        %v1351 = vpop.f32.mrb[0].mxu0
        %v1352 = vadd.f32 %v1276, %v1351
        %v1353 = vpop.f32.mrb[0].mxu0
        %v1354 = vpop.f32.mrb[0].mxu0
        %v1355 = vadd.f32 %v1276, %v1354
        %v1356 = vpop.f32.mrb[0].mxu0
        %1357 = vdwg.mxu0
        %v1358 = vmax.f32 %v1344, %v1347
        %v1359 = vmax.f32 %v1352, %v1355
        %v1360 = vmax.f32 %v1358, %v1359
        %v1361 = vrot.slane %v1360, 4
        %v1362 = vmax.f32 %v1360, %v1361
        %v1363 = vrot.slane %v1362, 2
        %v1364 = vmax.f32 %v1362, %v1363
        %v1365 = vrot.slane %v1364, 1
        %v1366 = vmax.f32 %v1364, %v1365
        %v1367 = vld [vmem:[%s13] sm:$0xff]
        %v1368 = vld [vmem:[%s13 + $0x8] sm:$0xff]
        %v1369 = vld [vmem:[%s13 + $0x10] sm:$0xff]
        %v1370 = vld [vmem:[%s13 + $0x18] sm:$0xff]
        %v1371 = vld [vmem:[%s13 + $0x20] sm:$0xff]
        %v1372 = vld [vmem:[%s13 + $0x28] sm:$0xff]
        %v1373 = vld [vmem:[%s13 + $0x30] sm:$0xff]
        %v1374 = vld [vmem:[%s13 + $0x38] sm:$0xff]
        %v1375 = vld [vmem:[%s13 + $0x40] sm:$0xff]
        %v1376 = vld [vmem:[%s13 + $0x48] sm:$0xff]
        %v1377 = vld [vmem:[%s13 + $0x50] sm:$0xff]
        %v1378 = vld [vmem:[%s13 + $0x58] sm:$0xff]
        %v1379 = vld [vmem:[%s13 + $0x60] sm:$0xff]
        %v1380 = vld [vmem:[%s13 + $0x68] sm:$0xff]
        %v1381 = vld [vmem:[%s13 + $0x70] sm:$0xff]
        %v1382 = vld [vmem:[%s13 + $0x78] sm:$0xff]
        %v1383 = vpack.c.bf16 %v1347, %v1344
        %v1384 = vpack.c.bf16 %v1355, %v1352
        %v1385 = vld [vmem:[%s15] sm:$0xff]
        %v1386 = vld [vmem:[%s15 + $0x8] sm:$0xff]
        %v1387 = vld [vmem:[%s15 + $0x10] sm:$0xff]
        %v1388 = vld [vmem:[%s15 + $0x18] sm:$0xff]
        %v1389 = vld [vmem:[%s15 + $0x20] sm:$0xff]
        %v1390 = vld [vmem:[%s15 + $0x28] sm:$0xff]
        %v1391 = vld [vmem:[%s15 + $0x30] sm:$0xff]
        %v1392 = vld [vmem:[%s15 + $0x38] sm:$0xff]
        %v1393 = vld [vmem:[%s15 + $0x40] sm:$0xff]
        %v1394 = vld [vmem:[%s15 + $0x48] sm:$0xff]
        %v1395 = vld [vmem:[%s15 + $0x50] sm:$0xff]
        %v1396 = vld [vmem:[%s15 + $0x58] sm:$0xff]
        %v1397 = vld [vmem:[%s15 + $0x60] sm:$0xff]
        %v1398 = vld [vmem:[%s15 + $0x68] sm:$0xff]
        %v1399 = vld [vmem:[%s15 + $0x70] sm:$0xff]
        %v1400 = vld [vmem:[%s15 + $0x78] sm:$0xff]
        %v1401 = vpack.c.bf16 %v1366, %v1366
        %v1418 = vunpack.c.l.b16 %v1385
        %v1419 = vunpack.c.h.b16 %v1385
        %v1420 = vunpack.c.l.b16 %v1386
        %v1421 = vunpack.c.h.b16 %v1386
        %v1422 = vunpack.c.l.b16 %v1387
        %v1423 = vunpack.c.h.b16 %v1387
        %v1424 = vunpack.c.l.b16 %v1388
        %v1425 = vunpack.c.h.b16 %v1388
        %v1426 = vunpack.c.l.b16 %v1389
        %v1427 = vunpack.c.h.b16 %v1389
        %v1428 = vunpack.c.l.b16 %v1390
        %v1429 = vunpack.c.h.b16 %v1390
        %v1430 = vunpack.c.l.b16 %v1391
        %v1431 = vunpack.c.h.b16 %v1391
        %v1432 = vunpack.c.l.b16 %v1392
        %v1433 = vunpack.c.h.b16 %v1392
        %v1434 = vunpack.c.l.b16 %v1393
        %v1435 = vunpack.c.h.b16 %v1393
        %v1436 = vunpack.c.l.b16 %v1394
        %v1437 = vunpack.c.h.b16 %v1394
        %v1438 = vunpack.c.l.b16 %v1395
        %v1439 = vunpack.c.h.b16 %v1395
        %v1440 = vunpack.c.l.b16 %v1396
        %v1441 = vunpack.c.h.b16 %v1396
        %v1442 = vunpack.c.l.b16 %v1397
        %v1443 = vunpack.c.h.b16 %v1397
        %v1444 = vunpack.c.l.b16 %v1398
        %v1445 = vunpack.c.h.b16 %v1398
        %v1446 = vunpack.c.l.b16 %v1399
        %v1447 = vunpack.c.h.b16 %v1399
        %v1448 = vunpack.c.l.b16 %v1400
        %v1449 = vunpack.c.h.b16 %v1400
        %v1450 = vpack.c.b16 %v1420, %v1418
        %v1451 = vpack.c.b16 %v1421, %v1419
        %v1452 = vpack.c.b16 %v1424, %v1422
        %v1453 = vpack.c.b16 %v1425, %v1423
        %v1454 = vpack.c.b16 %v1428, %v1426
        %v1455 = vpack.c.b16 %v1429, %v1427
        %v1456 = vpack.c.b16 %v1432, %v1430
        %v1457 = vpack.c.b16 %v1433, %v1431
        %v1458 = vpack.c.b16 %v1436, %v1434
        %v1459 = vpack.c.b16 %v1437, %v1435
        %v1460 = vpack.c.b16 %v1440, %v1438
        %v1461 = vpack.c.b16 %v1441, %v1439
        %v1462 = vpack.c.b16 %v1444, %v1442
        %v1463 = vpack.c.b16 %v1445, %v1443
        %v1464 = vpack.c.b16 %v1448, %v1446
        %v1465 = vpack.c.b16 %v1449, %v1447
        %1482 = vmatprep.subr.bf16.mxu0 %v1451
        %1483 = vmatpush1.bf16.msra.mxu0 %v1450
        %1484 = vmatprep.subr.bf16.mxu0 %v1453
        %1485 = vmatpush1.bf16.msra.mxu0 %v1452
        %1486 = vmatprep.subr.bf16.mxu0 %v1455
        %1487 = vmatpush1.bf16.msra.mxu0 %v1454
        %1488 = vmatprep.subr.bf16.mxu0 %v1457
        %1489 = vmatpush1.bf16.msra.mxu0 %v1456
        %1490 = vmatprep.subr.bf16.mxu0 %v1459
        %1491 = vmatpush1.bf16.msra.mxu0 %v1458
        %1492 = vmatprep.subr.bf16.mxu0 %v1461
        %1493 = vmatpush1.bf16.msra.mxu0 %v1460
        %1494 = vmatprep.subr.bf16.mxu0 %v1463
        %1495 = vmatpush1.bf16.msra.mxu0 %v1462
        %1496 = vmatprep.subr.bf16.mxu0 %v1465
        %1497 = vmatpush1.bf16.msra.mxu0 %v1464
        %1498 = vmatprep.subr.bf16.mxu0 0
        %1499 = vmatpush1.bf16.msra.mxu0 0
        %1500 = vmatprep.subr.bf16.mxu0 0
        %1501 = vmatpush1.bf16.msra.mxu0 0
        %1502 = vmatprep.subr.bf16.mxu0 0
        %1503 = vmatpush1.bf16.msra.mxu0 0
        %1504 = vmatprep.subr.bf16.mxu0 0
        %1505 = vmatpush1.bf16.msra.mxu0 0
        %1506 = vmatprep.subr.bf16.mxu0 0
        %1507 = vmatpush1.bf16.msra.mxu0 0
        %1508 = vmatprep.subr.bf16.mxu0 0
        %1509 = vmatpush1.bf16.msra.mxu0 0
        %1510 = vmatprep.subr.bf16.mxu0 0
        %1511 = vmatpush1.bf16.msra.mxu0 0
        %1512 = vmatprep.subr.bf16.mxu0 0
        %1513 = vmatpush1.bf16.msra.mxu0 0
        %1514 = vmatprep.mubr.bf16.mxu0 0
        %1515 = vmatmul.mubr.bf16.gmra.mrb[0].mxu0 %v1401
        %v1516 = vpop.f32.mrb[0].mxu0
        %v1517 = vadd.f32 0.0, %v1516
        %v1518 = vpop.f32.mrb[0].mxu0
        %v1519 = vadd.f32 0.0, %v1518
        %v1520 = vpop.f32.mrb[0].mxu0
        %v1521 = vpop.f32.mrb[0].mxu0
        %1522 = vdwg.mxu0
        %v1523 = vlaneseq
        %v1524 = vshrl.u32 %v1523, 7
        %v1525 = vsub.s32 0, %v1524
        %v1526 = vrot.slane %v1517, %v1525
        %v1527 = vlaneseq
        %v1528 = vshrl.u32 %v1527, 7
        %v1529 = vsub.s32 0, %v1528
        %v1530 = vrot.slane %v1519, %v1529
        %v1547 = vunpack.c.l.b16 %v1367
        %v1548 = vunpack.c.h.b16 %v1367
        %v1549 = vunpack.c.l.b16 %v1368
        %v1550 = vunpack.c.h.b16 %v1368
        %v1551 = vunpack.c.l.b16 %v1369
        %v1552 = vunpack.c.h.b16 %v1369
        %v1553 = vunpack.c.l.b16 %v1370
        %v1554 = vunpack.c.h.b16 %v1370
        %v1555 = vunpack.c.l.b16 %v1371
        %v1556 = vunpack.c.h.b16 %v1371
        %v1557 = vunpack.c.l.b16 %v1372
        %v1558 = vunpack.c.h.b16 %v1372
        %v1559 = vunpack.c.l.b16 %v1373
        %v1560 = vunpack.c.h.b16 %v1373
        %v1561 = vunpack.c.l.b16 %v1374
        %v1562 = vunpack.c.h.b16 %v1374
        %v1563 = vunpack.c.l.b16 %v1375
        %v1564 = vunpack.c.h.b16 %v1375
        %v1565 = vunpack.c.l.b16 %v1376
        %v1566 = vunpack.c.h.b16 %v1376
        %v1567 = vunpack.c.l.b16 %v1377
        %v1568 = vunpack.c.h.b16 %v1377
        %v1569 = vunpack.c.l.b16 %v1378
        %v1570 = vunpack.c.h.b16 %v1378
        %v1571 = vunpack.c.l.b16 %v1379
        %v1572 = vunpack.c.h.b16 %v1379
        %v1573 = vunpack.c.l.b16 %v1380
        %v1574 = vunpack.c.h.b16 %v1380
        %v1575 = vunpack.c.l.b16 %v1381
        %v1576 = vunpack.c.h.b16 %v1381
        %v1577 = vunpack.c.l.b16 %v1382
        %v1578 = vunpack.c.h.b16 %v1382
        %v1579 = vpack.c.b16 %v1549, %v1547
        %v1580 = vpack.c.b16 %v1550, %v1548
        %v1581 = vpack.c.b16 %v1553, %v1551
        %v1582 = vpack.c.b16 %v1554, %v1552
        %v1583 = vpack.c.b16 %v1557, %v1555
        %v1584 = vpack.c.b16 %v1558, %v1556
        %v1585 = vpack.c.b16 %v1561, %v1559
        %v1586 = vpack.c.b16 %v1562, %v1560
        %v1587 = vpack.c.b16 %v1565, %v1563
        %v1588 = vpack.c.b16 %v1566, %v1564
        %v1589 = vpack.c.b16 %v1569, %v1567
        %v1590 = vpack.c.b16 %v1570, %v1568
        %v1591 = vpack.c.b16 %v1573, %v1571
        %v1592 = vpack.c.b16 %v1574, %v1572
        %v1593 = vpack.c.b16 %v1577, %v1575
        %v1594 = vpack.c.b16 %v1578, %v1576
        %1611 = vmatprep.subr.bf16.mxu0 %v1580
        %1612 = vmatpush1.bf16.msra.mxu0 %v1579
        %1613 = vmatprep.subr.bf16.mxu0 %v1582
        %1614 = vmatpush1.bf16.msra.mxu0 %v1581
        %1615 = vmatprep.subr.bf16.mxu0 %v1584
        %1616 = vmatpush1.bf16.msra.mxu0 %v1583
        %1617 = vmatprep.subr.bf16.mxu0 %v1586
        %1618 = vmatpush1.bf16.msra.mxu0 %v1585
        %1619 = vmatprep.subr.bf16.mxu0 %v1588
        %1620 = vmatpush1.bf16.msra.mxu0 %v1587
        %1621 = vmatprep.subr.bf16.mxu0 %v1590
        %1622 = vmatpush1.bf16.msra.mxu0 %v1589
        %1623 = vmatprep.subr.bf16.mxu0 %v1592
        %1624 = vmatpush1.bf16.msra.mxu0 %v1591
        %1625 = vmatprep.subr.bf16.mxu0 %v1594
        %1626 = vmatpush1.bf16.msra.mxu0 %v1593
        %1627 = vmatprep.subr.bf16.mxu0 0
        %1628 = vmatpush1.bf16.msra.mxu0 0
        %1629 = vmatprep.subr.bf16.mxu0 0
        %1630 = vmatpush1.bf16.msra.mxu0 0
        %1631 = vmatprep.subr.bf16.mxu0 0
        %1632 = vmatpush1.bf16.msra.mxu0 0
        %1633 = vmatprep.subr.bf16.mxu0 0
        %1634 = vmatpush1.bf16.msra.mxu0 0
        %1635 = vmatprep.subr.bf16.mxu0 0
        %1636 = vmatpush1.bf16.msra.mxu0 0
        %1637 = vmatprep.subr.bf16.mxu0 0
        %1638 = vmatpush1.bf16.msra.mxu0 0
        %1639 = vmatprep.subr.bf16.mxu0 0
        %1640 = vmatpush1.bf16.msra.mxu0 0
        %1641 = vmatprep.subr.bf16.mxu0 0
        %1642 = vmatpush1.bf16.msra.mxu0 0
        %1643 = vmatprep.mubr.bf16.mxu0 0
        %1644 = vmatmul.mubr.bf16.gmra.mrb[0].mxu0 %v1383
        %v1645 = vpop.f32.mrb[0].mxu0
        %v1646 = vadd.f32 %v1526, %v1645
        %v1647 = vpop.f32.mrb[0].mxu0
        %v1648 = vadd.f32 %v1530, %v1647
        %v1649 = vpop.f32.mrb[0].mxu0
        %v1650 = vadd.f32 %v1526, %v1649
        %v1651 = vpop.f32.mrb[0].mxu0
        %v1652 = vadd.f32 %v1530, %v1651
        %1653 = vmatprep.mubr.bf16.mxu0 0
        %1654 = vmatmul.mubr.bf16.gmra.mrb[0].mxu0 %v1384
        %v1655 = vpop.f32.mrb[0].mxu0
        %v1656 = vadd.f32 %v1526, %v1655
        %v1657 = vpop.f32.mrb[0].mxu0
        %v1658 = vadd.f32 %v1530, %v1657
        %v1659 = vpop.f32.mrb[0].mxu0
        %v1660 = vadd.f32 %v1526, %v1659
        %v1661 = vpop.f32.mrb[0].mxu0
        %v1662 = vadd.f32 %v1530, %v1661
        %1663 = vdwg.mxu0
        %v1664 = vld [vmem:[#allocation11] sm:$0xff]
        %v1665 = vld [vmem:[#allocation11 + $0x8] sm:$0xff]
        %v1666 = vld [vmem:[#allocation11 + $0x10] sm:$0xff]
        %v1667 = vld [vmem:[#allocation11 + $0x18] sm:$0xff]
        %v1668 = vld [vmem:[#allocation11 + $0x20] sm:$0xff]
        %v1669 = vld [vmem:[#allocation11 + $0x28] sm:$0xff]
        %v1670 = vld [vmem:[#allocation11 + $0x30] sm:$0xff]
        %v1671 = vld [vmem:[#allocation11 + $0x38] sm:$0xff]
        %v1672 = vld [vmem:[#allocation11 + $0x40] sm:$0xff]
        %v1673 = vld [vmem:[#allocation11 + $0x48] sm:$0xff]
        %v1674 = vld [vmem:[#allocation11 + $0x50] sm:$0xff]
        %v1675 = vld [vmem:[#allocation11 + $0x58] sm:$0xff]
        %v1676 = vld [vmem:[#allocation11 + $0x60] sm:$0xff]
        %v1677 = vld [vmem:[#allocation11 + $0x68] sm:$0xff]
        %v1678 = vld [vmem:[#allocation11 + $0x70] sm:$0xff]
        %v1679 = vld [vmem:[#allocation11 + $0x78] sm:$0xff]
        %v1680 = vld [vmem:[#allocation11 + $0x80] sm:$0xff]
        %v1681 = vld [vmem:[#allocation11 + $0x88] sm:$0xff]
        %v1682 = vld [vmem:[#allocation11 + $0x90] sm:$0xff]
        %v1683 = vld [vmem:[#allocation11 + $0x98] sm:$0xff]
        %v1684 = vld [vmem:[#allocation11 + $0xa0] sm:$0xff]
        %v1685 = vld [vmem:[#allocation11 + $0xa8] sm:$0xff]
        %v1686 = vld [vmem:[#allocation11 + $0xb0] sm:$0xff]
        %v1687 = vld [vmem:[#allocation11 + $0xb8] sm:$0xff]
        %v1688 = vld [vmem:[#allocation11 + $0xc0] sm:$0xff]
        %v1689 = vld [vmem:[#allocation11 + $0xc8] sm:$0xff]
        %v1690 = vld [vmem:[#allocation11 + $0xd0] sm:$0xff]
        %v1691 = vld [vmem:[#allocation11 + $0xd8] sm:$0xff]
        %v1692 = vld [vmem:[#allocation11 + $0xe0] sm:$0xff]
        %v1693 = vld [vmem:[#allocation11 + $0xe8] sm:$0xff]
        %v1694 = vld [vmem:[#allocation11 + $0xf0] sm:$0xff]
        %v1695 = vld [vmem:[#allocation11 + $0xf8] sm:$0xff]
        %v1696 = vld [vmem:[#allocation11 + $0x100] sm:$0xff]
        %v1697 = vld [vmem:[#allocation11 + $0x108] sm:$0xff]
        %v1698 = vld [vmem:[#allocation11 + $0x110] sm:$0xff]
        %v1699 = vld [vmem:[#allocation11 + $0x118] sm:$0xff]
        %v1700 = vld [vmem:[#allocation11 + $0x120] sm:$0xff]
        %v1701 = vld [vmem:[#allocation11 + $0x128] sm:$0xff]
        %v1702 = vld [vmem:[#allocation11 + $0x130] sm:$0xff]
        %v1703 = vld [vmem:[#allocation11 + $0x138] sm:$0xff]
        %v1704 = vld [vmem:[#allocation11 + $0x140] sm:$0xff]
        %v1705 = vld [vmem:[#allocation11 + $0x148] sm:$0xff]
        %v1706 = vld [vmem:[#allocation11 + $0x150] sm:$0xff]
        %v1707 = vld [vmem:[#allocation11 + $0x158] sm:$0xff]
        %v1708 = vld [vmem:[#allocation11 + $0x160] sm:$0xff]
        %v1709 = vld [vmem:[#allocation11 + $0x168] sm:$0xff]
        %v1710 = vld [vmem:[#allocation11 + $0x170] sm:$0xff]
        %v1711 = vld [vmem:[#allocation11 + $0x178] sm:$0xff]
        %v1712 = vld [vmem:[#allocation11 + $0x180] sm:$0xff]
        %v1713 = vld [vmem:[#allocation11 + $0x188] sm:$0xff]
        %v1714 = vld [vmem:[#allocation11 + $0x190] sm:$0xff]
        %v1715 = vld [vmem:[#allocation11 + $0x198] sm:$0xff]
        %v1716 = vld [vmem:[#allocation11 + $0x1a0] sm:$0xff]
        %v1717 = vld [vmem:[#allocation11 + $0x1a8] sm:$0xff]
        %v1718 = vld [vmem:[#allocation11 + $0x1b0] sm:$0xff]
        %v1719 = vld [vmem:[#allocation11 + $0x1b8] sm:$0xff]
        %v1720 = vld [vmem:[#allocation11 + $0x1c0] sm:$0xff]
        %v1721 = vld [vmem:[#allocation11 + $0x1c8] sm:$0xff]
        %v1722 = vld [vmem:[#allocation11 + $0x1d0] sm:$0xff]
        %v1723 = vld [vmem:[#allocation11 + $0x1d8] sm:$0xff]
        %v1724 = vld [vmem:[#allocation11 + $0x1e0] sm:$0xff]
        %v1725 = vld [vmem:[#allocation11 + $0x1e8] sm:$0xff]
        %v1726 = vld [vmem:[#allocation11 + $0x1f0] sm:$0xff]
        %v1727 = vld [vmem:[#allocation11 + $0x1f8] sm:$0xff]
        %v1729 = vlaneseq
        %v1730 = vshrl.u32 %v1729, 7
        %v1731 = vsub.s32 0, %v1730
        %v1732 = vrot.slane %v1186, %v1731
        %v1733 = vlaneseq
        %v1734 = vshrl.u32 %v1733, 7
        %v1735 = vsub.s32 1, %v1734
        %v1736 = vrot.slane %v1186, %v1735
        %v1737 = vlaneseq
        %v1738 = vshrl.u32 %v1737, 7
        %v1739 = vsub.s32 2, %v1738
        %v1740 = vrot.slane %v1186, %v1739
        %v1741 = vlaneseq
        %v1742 = vshrl.u32 %v1741, 7
        %v1743 = vsub.s32 3, %v1742
        %v1744 = vrot.slane %v1186, %v1743
        %v1749 = vpack.c.bf16 %v1732, %v1732
        %v1750 = vpack.c.bf16 %v1736, %v1736
        %v1751 = vpack.c.bf16 %v1740, %v1740
        %v1752 = vpack.c.bf16 %v1744, %v1744
        %v1817 = vunpack.c.l.b16 %v1664
        %v1818 = vunpack.c.h.b16 %v1664
        %v1819 = vunpack.c.l.b16 %v1665
        %v1820 = vunpack.c.h.b16 %v1665
        %v1821 = vunpack.c.l.b16 %v1666
        %v1822 = vunpack.c.h.b16 %v1666
        %v1823 = vunpack.c.l.b16 %v1667
        %v1824 = vunpack.c.h.b16 %v1667
        %v1825 = vunpack.c.l.b16 %v1668
        %v1826 = vunpack.c.h.b16 %v1668
        %v1827 = vunpack.c.l.b16 %v1669
        %v1828 = vunpack.c.h.b16 %v1669
        %v1829 = vunpack.c.l.b16 %v1670
        %v1830 = vunpack.c.h.b16 %v1670
        %v1831 = vunpack.c.l.b16 %v1671
        %v1832 = vunpack.c.h.b16 %v1671
        %v1833 = vunpack.c.l.b16 %v1672
        %v1834 = vunpack.c.h.b16 %v1672
        %v1835 = vunpack.c.l.b16 %v1673
        %v1836 = vunpack.c.h.b16 %v1673
        %v1837 = vunpack.c.l.b16 %v1674
        %v1838 = vunpack.c.h.b16 %v1674
        %v1839 = vunpack.c.l.b16 %v1675
        %v1840 = vunpack.c.h.b16 %v1675
        %v1841 = vunpack.c.l.b16 %v1676
        %v1842 = vunpack.c.h.b16 %v1676
        %v1843 = vunpack.c.l.b16 %v1677
        %v1844 = vunpack.c.h.b16 %v1677
        %v1845 = vunpack.c.l.b16 %v1678
        %v1846 = vunpack.c.h.b16 %v1678
        %v1847 = vunpack.c.l.b16 %v1679
        %v1848 = vunpack.c.h.b16 %v1679
        %v1849 = vunpack.c.l.b16 %v1680
        %v1850 = vunpack.c.h.b16 %v1680
        %v1851 = vunpack.c.l.b16 %v1681
        %v1852 = vunpack.c.h.b16 %v1681
        %v1853 = vunpack.c.l.b16 %v1682
        %v1854 = vunpack.c.h.b16 %v1682
        %v1855 = vunpack.c.l.b16 %v1683
        %v1856 = vunpack.c.h.b16 %v1683
        %v1857 = vunpack.c.l.b16 %v1684
        %v1858 = vunpack.c.h.b16 %v1684
        %v1859 = vunpack.c.l.b16 %v1685
        %v1860 = vunpack.c.h.b16 %v1685
        %v1861 = vunpack.c.l.b16 %v1686
        %v1862 = vunpack.c.h.b16 %v1686
        %v1863 = vunpack.c.l.b16 %v1687
        %v1864 = vunpack.c.h.b16 %v1687
        %v1865 = vunpack.c.l.b16 %v1688
        %v1866 = vunpack.c.h.b16 %v1688
        %v1867 = vunpack.c.l.b16 %v1689
        %v1868 = vunpack.c.h.b16 %v1689
        %v1869 = vunpack.c.l.b16 %v1690
        %v1870 = vunpack.c.h.b16 %v1690
        %v1871 = vunpack.c.l.b16 %v1691
        %v1872 = vunpack.c.h.b16 %v1691
        %v1873 = vunpack.c.l.b16 %v1692
        %v1874 = vunpack.c.h.b16 %v1692
        %v1875 = vunpack.c.l.b16 %v1693
        %v1876 = vunpack.c.h.b16 %v1693
        %v1877 = vunpack.c.l.b16 %v1694
        %v1878 = vunpack.c.h.b16 %v1694
        %v1879 = vunpack.c.l.b16 %v1695
        %v1880 = vunpack.c.h.b16 %v1695
        %v1881 = vunpack.c.l.b16 %v1696
        %v1882 = vunpack.c.h.b16 %v1696
        %v1883 = vunpack.c.l.b16 %v1697
        %v1884 = vunpack.c.h.b16 %v1697
        %v1885 = vunpack.c.l.b16 %v1698
        %v1886 = vunpack.c.h.b16 %v1698
        %v1887 = vunpack.c.l.b16 %v1699
        %v1888 = vunpack.c.h.b16 %v1699
        %v1889 = vunpack.c.l.b16 %v1700
        %v1890 = vunpack.c.h.b16 %v1700
        %v1891 = vunpack.c.l.b16 %v1701
        %v1892 = vunpack.c.h.b16 %v1701
        %v1893 = vunpack.c.l.b16 %v1702
        %v1894 = vunpack.c.h.b16 %v1702
        %v1895 = vunpack.c.l.b16 %v1703
        %v1896 = vunpack.c.h.b16 %v1703
        %v1897 = vunpack.c.l.b16 %v1704
        %v1898 = vunpack.c.h.b16 %v1704
        %v1899 = vunpack.c.l.b16 %v1705
        %v1900 = vunpack.c.h.b16 %v1705
        %v1901 = vunpack.c.l.b16 %v1706
        %v1902 = vunpack.c.h.b16 %v1706
        %v1903 = vunpack.c.l.b16 %v1707
        %v1904 = vunpack.c.h.b16 %v1707
        %v1905 = vunpack.c.l.b16 %v1708
        %v1906 = vunpack.c.h.b16 %v1708
        %v1907 = vunpack.c.l.b16 %v1709
        %v1908 = vunpack.c.h.b16 %v1709
        %v1909 = vunpack.c.l.b16 %v1710
        %v1910 = vunpack.c.h.b16 %v1710
        %v1911 = vunpack.c.l.b16 %v1711
        %v1912 = vunpack.c.h.b16 %v1711
        %v1913 = vunpack.c.l.b16 %v1712
        %v1914 = vunpack.c.h.b16 %v1712
        %v1915 = vunpack.c.l.b16 %v1713
        %v1916 = vunpack.c.h.b16 %v1713
        %v1917 = vunpack.c.l.b16 %v1714
        %v1918 = vunpack.c.h.b16 %v1714
        %v1919 = vunpack.c.l.b16 %v1715
        %v1920 = vunpack.c.h.b16 %v1715
        %v1921 = vunpack.c.l.b16 %v1716
        %v1922 = vunpack.c.h.b16 %v1716
        %v1923 = vunpack.c.l.b16 %v1717
        %v1924 = vunpack.c.h.b16 %v1717
        %v1925 = vunpack.c.l.b16 %v1718
        %v1926 = vunpack.c.h.b16 %v1718
        %v1927 = vunpack.c.l.b16 %v1719
        %v1928 = vunpack.c.h.b16 %v1719
        %v1929 = vunpack.c.l.b16 %v1720
        %v1930 = vunpack.c.h.b16 %v1720
        %v1931 = vunpack.c.l.b16 %v1721
        %v1932 = vunpack.c.h.b16 %v1721
        %v1933 = vunpack.c.l.b16 %v1722
        %v1934 = vunpack.c.h.b16 %v1722
        %v1935 = vunpack.c.l.b16 %v1723
        %v1936 = vunpack.c.h.b16 %v1723
        %v1937 = vunpack.c.l.b16 %v1724
        %v1938 = vunpack.c.h.b16 %v1724
        %v1939 = vunpack.c.l.b16 %v1725
        %v1940 = vunpack.c.h.b16 %v1725
        %v1941 = vunpack.c.l.b16 %v1726
        %v1942 = vunpack.c.h.b16 %v1726
        %v1943 = vunpack.c.l.b16 %v1727
        %v1944 = vunpack.c.h.b16 %v1727
        %v1945 = vpack.c.b16 %v1819, %v1817
        %v1946 = vpack.c.b16 %v1820, %v1818
        %v1947 = vpack.c.b16 %v1823, %v1821
        %v1948 = vpack.c.b16 %v1824, %v1822
        %v1949 = vpack.c.b16 %v1827, %v1825
        %v1950 = vpack.c.b16 %v1828, %v1826
        %v1951 = vpack.c.b16 %v1831, %v1829
        %v1952 = vpack.c.b16 %v1832, %v1830
        %v1953 = vpack.c.b16 %v1835, %v1833
        %v1954 = vpack.c.b16 %v1836, %v1834
        %v1955 = vpack.c.b16 %v1839, %v1837
        %v1956 = vpack.c.b16 %v1840, %v1838
        %v1957 = vpack.c.b16 %v1843, %v1841
        %v1958 = vpack.c.b16 %v1844, %v1842
        %v1959 = vpack.c.b16 %v1847, %v1845
        %v1960 = vpack.c.b16 %v1848, %v1846
        %v1961 = vpack.c.b16 %v1851, %v1849
        %v1962 = vpack.c.b16 %v1852, %v1850
        %v1963 = vpack.c.b16 %v1855, %v1853
        %v1964 = vpack.c.b16 %v1856, %v1854
        %v1965 = vpack.c.b16 %v1859, %v1857
        %v1966 = vpack.c.b16 %v1860, %v1858
        %v1967 = vpack.c.b16 %v1863, %v1861
        %v1968 = vpack.c.b16 %v1864, %v1862
        %v1969 = vpack.c.b16 %v1867, %v1865
        %v1970 = vpack.c.b16 %v1868, %v1866
        %v1971 = vpack.c.b16 %v1871, %v1869
        %v1972 = vpack.c.b16 %v1872, %v1870
        %v1973 = vpack.c.b16 %v1875, %v1873
        %v1974 = vpack.c.b16 %v1876, %v1874
        %v1975 = vpack.c.b16 %v1879, %v1877
        %v1976 = vpack.c.b16 %v1880, %v1878
        %v1977 = vpack.c.b16 %v1883, %v1881
        %v1978 = vpack.c.b16 %v1884, %v1882
        %v1979 = vpack.c.b16 %v1887, %v1885
        %v1980 = vpack.c.b16 %v1888, %v1886
        %v1981 = vpack.c.b16 %v1891, %v1889
        %v1982 = vpack.c.b16 %v1892, %v1890
        %v1983 = vpack.c.b16 %v1895, %v1893
        %v1984 = vpack.c.b16 %v1896, %v1894
        %v1985 = vpack.c.b16 %v1899, %v1897
        %v1986 = vpack.c.b16 %v1900, %v1898
        %v1987 = vpack.c.b16 %v1903, %v1901
        %v1988 = vpack.c.b16 %v1904, %v1902
        %v1989 = vpack.c.b16 %v1907, %v1905
        %v1990 = vpack.c.b16 %v1908, %v1906
        %v1991 = vpack.c.b16 %v1911, %v1909
        %v1992 = vpack.c.b16 %v1912, %v1910
        %v1993 = vpack.c.b16 %v1915, %v1913
        %v1994 = vpack.c.b16 %v1916, %v1914
        %v1995 = vpack.c.b16 %v1919, %v1917
        %v1996 = vpack.c.b16 %v1920, %v1918
        %v1997 = vpack.c.b16 %v1923, %v1921
        %v1998 = vpack.c.b16 %v1924, %v1922
        %v1999 = vpack.c.b16 %v1927, %v1925
        %v2000 = vpack.c.b16 %v1928, %v1926
        %v2001 = vpack.c.b16 %v1931, %v1929
        %v2002 = vpack.c.b16 %v1932, %v1930
        %v2003 = vpack.c.b16 %v1935, %v1933
        %v2004 = vpack.c.b16 %v1936, %v1934
        %v2005 = vpack.c.b16 %v1939, %v1937
        %v2006 = vpack.c.b16 %v1940, %v1938
        %v2007 = vpack.c.b16 %v1943, %v1941
        %v2008 = vpack.c.b16 %v1944, %v1942
        %2073 = vmatprep.subr.bf16.mxu0 %v1946
        %2074 = vmatpush1.bf16.msra.mxu0 %v1945
        %2075 = vmatprep.subr.bf16.mxu0 %v1948
        %2076 = vmatpush1.bf16.msra.mxu0 %v1947
        %2077 = vmatprep.subr.bf16.mxu0 %v1950
        %2078 = vmatpush1.bf16.msra.mxu0 %v1949
        %2079 = vmatprep.subr.bf16.mxu0 %v1952
        %2080 = vmatpush1.bf16.msra.mxu0 %v1951
        %2081 = vmatprep.subr.bf16.mxu0 %v1954
        %2082 = vmatpush1.bf16.msra.mxu0 %v1953
        %2083 = vmatprep.subr.bf16.mxu0 %v1956
        %2084 = vmatpush1.bf16.msra.mxu0 %v1955
        %2085 = vmatprep.subr.bf16.mxu0 %v1958
        %2086 = vmatpush1.bf16.msra.mxu0 %v1957
        %2087 = vmatprep.subr.bf16.mxu0 %v1960
        %2088 = vmatpush1.bf16.msra.mxu0 %v1959
        %2089 = vmatprep.subr.bf16.mxu0 %v1962
        %2090 = vmatpush1.bf16.msra.mxu0 %v1961
        %2091 = vmatprep.subr.bf16.mxu0 %v1964
        %2092 = vmatpush1.bf16.msra.mxu0 %v1963
        %2093 = vmatprep.subr.bf16.mxu0 %v1966
        %2094 = vmatpush1.bf16.msra.mxu0 %v1965
        %2095 = vmatprep.subr.bf16.mxu0 %v1968
        %2096 = vmatpush1.bf16.msra.mxu0 %v1967
        %2097 = vmatprep.subr.bf16.mxu0 %v1970
        %2098 = vmatpush1.bf16.msra.mxu0 %v1969
        %2099 = vmatprep.subr.bf16.mxu0 %v1972
        %2100 = vmatpush1.bf16.msra.mxu0 %v1971
        %2101 = vmatprep.subr.bf16.mxu0 %v1974
        %2102 = vmatpush1.bf16.msra.mxu0 %v1973
        %2103 = vmatprep.subr.bf16.mxu0 %v1976
        %2104 = vmatpush1.bf16.msra.mxu0 %v1975
        %2105 = vmatprep.mubr.bf16.mxu0 %v1750
        %2106 = vmatmul.mubr.bf16.gmra.mrb[0].mxu0 %v1749
        %v2107 = vpop.f32.mrb[0].mxu0
        %v2108 = vadd.f32 0.0, %v2107
        %v2109 = vpop.f32.mrb[0].mxu0
        %v2110 = vadd.f32 0.0, %v2109
        %v2111 = vpop.f32.mrb[0].mxu0
        %v2112 = vpop.f32.mrb[0].mxu0
        %2113 = vdwg.mxu0
        %2114 = vmatprep.subr.bf16.mxu0 %v1978
        %2115 = vmatpush1.bf16.msra.mxu0 %v1977
        %2116 = vmatprep.subr.bf16.mxu0 %v1980
        %2117 = vmatpush1.bf16.msra.mxu0 %v1979
        %2118 = vmatprep.subr.bf16.mxu0 %v1982
        %2119 = vmatpush1.bf16.msra.mxu0 %v1981
        %2120 = vmatprep.subr.bf16.mxu0 %v1984
        %2121 = vmatpush1.bf16.msra.mxu0 %v1983
        %2122 = vmatprep.subr.bf16.mxu0 %v1986
        %2123 = vmatpush1.bf16.msra.mxu0 %v1985
        %2124 = vmatprep.subr.bf16.mxu0 %v1988
        %2125 = vmatpush1.bf16.msra.mxu0 %v1987
        %2126 = vmatprep.subr.bf16.mxu0 %v1990
        %2127 = vmatpush1.bf16.msra.mxu0 %v1989
        %2128 = vmatprep.subr.bf16.mxu0 %v1992
        %2129 = vmatpush1.bf16.msra.mxu0 %v1991
        %2130 = vmatprep.subr.bf16.mxu0 %v1994
        %2131 = vmatpush1.bf16.msra.mxu0 %v1993
        %2132 = vmatprep.subr.bf16.mxu0 %v1996
        %2133 = vmatpush1.bf16.msra.mxu0 %v1995
        %2134 = vmatprep.subr.bf16.mxu0 %v1998
        %2135 = vmatpush1.bf16.msra.mxu0 %v1997
        %2136 = vmatprep.subr.bf16.mxu0 %v2000
        %2137 = vmatpush1.bf16.msra.mxu0 %v1999
        %2138 = vmatprep.subr.bf16.mxu0 %v2002
        %2139 = vmatpush1.bf16.msra.mxu0 %v2001
        %2140 = vmatprep.subr.bf16.mxu0 %v2004
        %2141 = vmatpush1.bf16.msra.mxu0 %v2003
        %2142 = vmatprep.subr.bf16.mxu0 %v2006
        %2143 = vmatpush1.bf16.msra.mxu0 %v2005
        %2144 = vmatprep.subr.bf16.mxu0 %v2008
        %2145 = vmatpush1.bf16.msra.mxu0 %v2007
        %2146 = vmatprep.mubr.bf16.mxu0 %v1752
        %2147 = vmatmul.mubr.bf16.gmra.mrb[0].mxu0 %v1751
        %v2148 = vpop.f32.mrb[0].mxu0
        %v2149 = vadd.f32 %v2108, %v2148
        %v2150 = vpop.f32.mrb[0].mxu0
        %v2151 = vadd.f32 %v2110, %v2150
        %v2152 = vpop.f32.mrb[0].mxu0
        %v2153 = vpop.f32.mrb[0].mxu0
        %2154 = vdwg.mxu0
        %v2155 = vlaneseq
        %v2156 = vshrl.u32 %v2155, 7
        %v2157 = vsub.s32 0, %v2156
        %v2158 = vrot.slane %v2149, %v2157
        %v2159 = vlaneseq
        %v2160 = vshrl.u32 %v2159, 7
        %v2161 = vsub.s32 0, %v2160
        %v2162 = vrot.slane %v2151, %v2161
        %v2163 = vadd.f32 %v1646, %v2158
        %v2164 = vadd.f32 %v1648, %v2162
        %v2165 = vadd.f32 %v1650, %v2158
        %v2166 = vadd.f32 %v1652, %v2162
        %v2167 = vadd.f32 %v1656, %v2158
        %v2168 = vadd.f32 %v1658, %v2162
        %v2169 = vadd.f32 %v1660, %v2158
        %v2170 = vadd.f32 %v1662, %v2162
        %v2171 = vld [vmem:[#allocation13] sm:$0x3]
        %v2173 = vlaneseq
        %v2174 = vshrl.u32 %v2173, 7
        %v2175 = vsub.s32 0, %v2174
        %v2176 = vrot.slane %v2171, %v2175
        %v2177 = vlaneseq
        %v2178 = vshrl.u32 %v2177, 7
        %v2179 = vsub.s32 1, %v2178
        %v2180 = vrot.slane %v2171, %v2179
        %v2183 = vadd.f32 %v2163, %v2176
        %v2184 = vadd.f32 %v2164, %v2180
        %v2185 = vadd.f32 %v2165, %v2176
        %v2186 = vadd.f32 %v2166, %v2180
        %v2187 = vadd.f32 %v2167, %v2176
        %v2188 = vadd.f32 %v2168, %v2180
        %v2189 = vadd.f32 %v2169, %v2176
        %v2190 = vadd.f32 %v2170, %v2180
        %v2191 = vmax.f32 %v2183, 0.0
        %v2192 = vmax.f32 %v2184, 0.0
        %v2193 = vmax.f32 %v2185, 0.0
        %v2194 = vmax.f32 %v2186, 0.0
        %v2195 = vmax.f32 %v2187, 0.0
        %v2196 = vmax.f32 %v2188, 0.0
        %v2197 = vmax.f32 %v2189, 0.0
        %v2198 = vmax.f32 %v2190, 0.0
        %v2199 = vld [vmem:[%s21] sm:$0xf]
        %v2200 = vld [vmem:[%s21 + $0x4] sm:$0xf]
        %v2201 = vld [vmem:[%s21 + $0x8] sm:$0xf]
        %v2202 = vld [vmem:[%s21 + $0xc] sm:$0xf]
        %v2203 = vld [vmem:[%s21 + $0x10] sm:$0xf]
        %v2204 = vld [vmem:[%s21 + $0x14] sm:$0xf]
        %v2205 = vld [vmem:[%s21 + $0x18] sm:$0xf]
        %v2206 = vld [vmem:[%s21 + $0x1c] sm:$0xf]
        %v2207 = vld [vmem:[%s21 + $0x20] sm:$0xf]
        %v2208 = vld [vmem:[%s21 + $0x24] sm:$0xf]
        %v2209 = vld [vmem:[%s21 + $0x28] sm:$0xf]
        %v2210 = vld [vmem:[%s21 + $0x2c] sm:$0xf]
        %v2211 = vld [vmem:[%s21 + $0x30] sm:$0xf]
        %v2212 = vld [vmem:[%s21 + $0x34] sm:$0xf]
        %v2213 = vld [vmem:[%s21 + $0x38] sm:$0xf]
        %v2214 = vld [vmem:[%s21 + $0x3c] sm:$0xf]
        %v2215 = vld [vmem:[%s21 + $0x40] sm:$0xf]
        %v2216 = vld [vmem:[%s21 + $0x44] sm:$0xf]
        %v2217 = vld [vmem:[%s21 + $0x48] sm:$0xf]
        %v2218 = vld [vmem:[%s21 + $0x4c] sm:$0xf]
        %v2219 = vld [vmem:[%s21 + $0x50] sm:$0xf]
        %v2220 = vld [vmem:[%s21 + $0x54] sm:$0xf]
        %v2221 = vld [vmem:[%s21 + $0x58] sm:$0xf]
        %v2222 = vld [vmem:[%s21 + $0x5c] sm:$0xf]
        %v2223 = vld [vmem:[%s21 + $0x60] sm:$0xf]
        %v2224 = vld [vmem:[%s21 + $0x64] sm:$0xf]
        %v2225 = vld [vmem:[%s21 + $0x68] sm:$0xf]
        %v2226 = vld [vmem:[%s21 + $0x6c] sm:$0xf]
        %v2227 = vld [vmem:[%s21 + $0x70] sm:$0xf]
        %v2228 = vld [vmem:[%s21 + $0x74] sm:$0xf]
        %v2229 = vld [vmem:[%s21 + $0x78] sm:$0xf]
        %v2230 = vld [vmem:[%s21 + $0x7c] sm:$0xf]
        %v2231 = vpack.c.bf16 %v2193, %v2191
        %v2232 = vpack.c.bf16 %v2194, %v2192
        %v2233 = vpack.c.bf16 %v2197, %v2195
        %v2234 = vpack.c.bf16 %v2198, %v2196
        %v2235 = vld [vmem:[#allocation14] sm:$0x1]
        %v2237 = vlaneseq
        %v2238 = vshrl.u32 %v2237, 7
        %v2239 = vsub.s32 0, %v2238
        %v2240 = vrot.slane %v2235, %v2239
        %v2274 = vunpack.c.l.b16 %v2199
        %v2275 = vunpack.c.l.b16 %v2200
        %v2276 = vunpack.c.l.b16 %v2201
        %v2277 = vunpack.c.l.b16 %v2202
        %v2278 = vunpack.c.l.b16 %v2203
        %v2279 = vunpack.c.l.b16 %v2204
        %v2280 = vunpack.c.l.b16 %v2205
        %v2281 = vunpack.c.l.b16 %v2206
        %v2282 = vunpack.c.l.b16 %v2207
        %v2283 = vunpack.c.l.b16 %v2208
        %v2284 = vunpack.c.l.b16 %v2209
        %v2285 = vunpack.c.l.b16 %v2210
        %v2286 = vunpack.c.l.b16 %v2211
        %v2287 = vunpack.c.l.b16 %v2212
        %v2288 = vunpack.c.l.b16 %v2213
        %v2289 = vunpack.c.l.b16 %v2214
        %v2290 = vunpack.c.l.b16 %v2215
        %v2291 = vunpack.c.l.b16 %v2216
        %v2292 = vunpack.c.l.b16 %v2217
        %v2293 = vunpack.c.l.b16 %v2218
        %v2294 = vunpack.c.l.b16 %v2219
        %v2295 = vunpack.c.l.b16 %v2220
        %v2296 = vunpack.c.l.b16 %v2221
        %v2297 = vunpack.c.l.b16 %v2222
        %v2298 = vunpack.c.l.b16 %v2223
        %v2299 = vunpack.c.l.b16 %v2224
        %v2300 = vunpack.c.l.b16 %v2225
        %v2301 = vunpack.c.l.b16 %v2226
        %v2302 = vunpack.c.l.b16 %v2227
        %v2303 = vunpack.c.l.b16 %v2228
        %v2304 = vunpack.c.l.b16 %v2229
        %v2305 = vunpack.c.l.b16 %v2230
        %v2306 = vpack.c.b16 %v2275, %v2274
        %v2307 = vpack.c.b16 %v2277, %v2276
        %v2308 = vpack.c.b16 %v2279, %v2278
        %v2309 = vpack.c.b16 %v2281, %v2280
        %v2310 = vpack.c.b16 %v2283, %v2282
        %v2311 = vpack.c.b16 %v2285, %v2284
        %v2312 = vpack.c.b16 %v2287, %v2286
        %v2313 = vpack.c.b16 %v2289, %v2288
        %v2314 = vpack.c.b16 %v2291, %v2290
        %v2315 = vpack.c.b16 %v2293, %v2292
        %v2316 = vpack.c.b16 %v2295, %v2294
        %v2317 = vpack.c.b16 %v2297, %v2296
        %v2318 = vpack.c.b16 %v2299, %v2298
        %v2319 = vpack.c.b16 %v2301, %v2300
        %v2320 = vpack.c.b16 %v2303, %v2302
        %v2321 = vpack.c.b16 %v2305, %v2304
        %2338 = vmatprep.subr.bf16.mxu0 0
        %2339 = vmatpush1.bf16.msra.mxu0 %v2306
        %2340 = vmatprep.subr.bf16.mxu0 0
        %2341 = vmatpush1.bf16.msra.mxu0 %v2307
        %2342 = vmatprep.subr.bf16.mxu0 0
        %2343 = vmatpush1.bf16.msra.mxu0 %v2308
        %2344 = vmatprep.subr.bf16.mxu0 0
        %2345 = vmatpush1.bf16.msra.mxu0 %v2309
        %2346 = vmatprep.subr.bf16.mxu0 0
        %2347 = vmatpush1.bf16.msra.mxu0 %v2310
        %2348 = vmatprep.subr.bf16.mxu0 0
        %2349 = vmatpush1.bf16.msra.mxu0 %v2311
        %2350 = vmatprep.subr.bf16.mxu0 0
        %2351 = vmatpush1.bf16.msra.mxu0 %v2312
        %2352 = vmatprep.subr.bf16.mxu0 0
        %2353 = vmatpush1.bf16.msra.mxu0 %v2313
        %2354 = vmatprep.subr.bf16.mxu0 0
        %2355 = vmatpush1.bf16.msra.mxu0 %v2314
        %2356 = vmatprep.subr.bf16.mxu0 0
        %2357 = vmatpush1.bf16.msra.mxu0 %v2315
        %2358 = vmatprep.subr.bf16.mxu0 0
        %2359 = vmatpush1.bf16.msra.mxu0 %v2316
        %2360 = vmatprep.subr.bf16.mxu0 0
        %2361 = vmatpush1.bf16.msra.mxu0 %v2317
        %2362 = vmatprep.subr.bf16.mxu0 0
        %2363 = vmatpush1.bf16.msra.mxu0 %v2318
        %2364 = vmatprep.subr.bf16.mxu0 0
        %2365 = vmatpush1.bf16.msra.mxu0 %v2319
        %2366 = vmatprep.subr.bf16.mxu0 0
        %2367 = vmatpush1.bf16.msra.mxu0 %v2320
        %2368 = vmatprep.subr.bf16.mxu0 0
        %2369 = vmatpush1.bf16.msra.mxu0 %v2321
        %2370 = vmatprep.mubr.bf16.mxu0 %v2232
        %2371 = vmatmul.mubr.bf16.gmra.mrb[0].mxu0 %v2231
        %v2372 = vpop.f32.mrb[0].mxu0
        %v2373 = vadd.f32 %v2240, %v2372
        %v2374 = vpop.f32.mrb[0].mxu0
        %v2375 = vpop.f32.mrb[0].mxu0
        %v2376 = vadd.f32 %v2240, %v2375
        %v2377 = vpop.f32.mrb[0].mxu0
        %2378 = vmatprep.mubr.bf16.mxu0 %v2234
        %2379 = vmatmul.mubr.bf16.gmra.mrb[0].mxu0 %v2233
        %v2380 = vpop.f32.mrb[0].mxu0
        %v2381 = vadd.f32 %v2240, %v2380
        %v2382 = vpop.f32.mrb[0].mxu0
        %v2383 = vpop.f32.mrb[0].mxu0
        %v2384 = vadd.f32 %v2240, %v2383
        %v2385 = vpop.f32.mrb[0].mxu0
        %2386 = vdwg.mxu0
        %v2387 = vld [vmem:[#allocation16] sm:$0xf]
        %v2388 = vld [vmem:[#allocation16 + $0x4] sm:$0xf]
        %v2389 = vld [vmem:[#allocation16 + $0x8] sm:$0xf]
        %v2390 = vld [vmem:[#allocation16 + $0xc] sm:$0xf]
        %v2391 = vld [vmem:[#allocation16 + $0x10] sm:$0xf]
        %v2392 = vld [vmem:[#allocation16 + $0x14] sm:$0xf]
        %v2393 = vld [vmem:[#allocation16 + $0x18] sm:$0xf]
        %v2394 = vld [vmem:[#allocation16 + $0x1c] sm:$0xf]
        %v2395 = vld [vmem:[#allocation16 + $0x20] sm:$0xf]
        %v2396 = vld [vmem:[#allocation16 + $0x24] sm:$0xf]
        %v2397 = vld [vmem:[#allocation16 + $0x28] sm:$0xf]
        %v2398 = vld [vmem:[#allocation16 + $0x2c] sm:$0xf]
        %v2399 = vld [vmem:[#allocation16 + $0x30] sm:$0xf]
        %v2400 = vld [vmem:[#allocation16 + $0x34] sm:$0xf]
        %v2401 = vld [vmem:[#allocation16 + $0x38] sm:$0xf]
        %v2402 = vld [vmem:[#allocation16 + $0x3c] sm:$0xf]
        %v2403 = vpack.c.bf16 %v2376, %v2373
        %v2404 = vpack.c.bf16 %v2384, %v2381
        %v2405 = vld [vmem:[#allocation17] sm:$0xf]
        %v2406 = vld [vmem:[#allocation17 + $0x4] sm:$0xf]
        %v2407 = vld [vmem:[#allocation17 + $0x8] sm:$0xf]
        %v2408 = vld [vmem:[#allocation17 + $0xc] sm:$0xf]
        %v2409 = vld [vmem:[#allocation17 + $0x10] sm:$0xf]
        %v2410 = vld [vmem:[#allocation17 + $0x14] sm:$0xf]
        %v2411 = vld [vmem:[#allocation17 + $0x18] sm:$0xf]
        %v2412 = vld [vmem:[#allocation17 + $0x1c] sm:$0xf]
        %v2413 = vld [vmem:[#allocation17 + $0x20] sm:$0xf]
        %v2414 = vld [vmem:[#allocation17 + $0x24] sm:$0xf]
        %v2415 = vld [vmem:[#allocation17 + $0x28] sm:$0xf]
        %v2416 = vld [vmem:[#allocation17 + $0x2c] sm:$0xf]
        %v2417 = vld [vmem:[#allocation17 + $0x30] sm:$0xf]
        %v2418 = vld [vmem:[#allocation17 + $0x34] sm:$0xf]
        %v2419 = vld [vmem:[#allocation17 + $0x38] sm:$0xf]
        %v2420 = vld [vmem:[#allocation17 + $0x3c] sm:$0xf]
        %v2437 = vunpack.c.l.b16 %v2405
        %v2438 = vunpack.c.l.b16 %v2406
        %v2439 = vunpack.c.l.b16 %v2407
        %v2440 = vunpack.c.l.b16 %v2408
        %v2441 = vunpack.c.l.b16 %v2409
        %v2442 = vunpack.c.l.b16 %v2410
        %v2443 = vunpack.c.l.b16 %v2411
        %v2444 = vunpack.c.l.b16 %v2412
        %v2445 = vunpack.c.l.b16 %v2413
        %v2446 = vunpack.c.l.b16 %v2414
        %v2447 = vunpack.c.l.b16 %v2415
        %v2448 = vunpack.c.l.b16 %v2416
        %v2449 = vunpack.c.l.b16 %v2417
        %v2450 = vunpack.c.l.b16 %v2418
        %v2451 = vunpack.c.l.b16 %v2419
        %v2452 = vunpack.c.l.b16 %v2420
        %v2453 = vpack.c.b16 %v2438, %v2437
        %v2454 = vpack.c.b16 %v2440, %v2439
        %v2455 = vpack.c.b16 %v2442, %v2441
        %v2456 = vpack.c.b16 %v2444, %v2443
        %v2457 = vpack.c.b16 %v2446, %v2445
        %v2458 = vpack.c.b16 %v2448, %v2447
        %v2459 = vpack.c.b16 %v2450, %v2449
        %v2460 = vpack.c.b16 %v2452, %v2451
        %2469 = vmatprep.subr.bf16.mxu0 0
        %2470 = vmatpush1.bf16.msra.mxu0 %v2453
        %2471 = vmatprep.subr.bf16.mxu0 0
        %2472 = vmatpush1.bf16.msra.mxu0 %v2454
        %2473 = vmatprep.subr.bf16.mxu0 0
        %2474 = vmatpush1.bf16.msra.mxu0 %v2455
        %2475 = vmatprep.subr.bf16.mxu0 0
        %2476 = vmatpush1.bf16.msra.mxu0 %v2456
        %2477 = vmatprep.subr.bf16.mxu0 0
        %2478 = vmatpush1.bf16.msra.mxu0 %v2457
        %2479 = vmatprep.subr.bf16.mxu0 0
        %2480 = vmatpush1.bf16.msra.mxu0 %v2458
        %2481 = vmatprep.subr.bf16.mxu0 0
        %2482 = vmatpush1.bf16.msra.mxu0 %v2459
        %2483 = vmatprep.subr.bf16.mxu0 0
        %2484 = vmatpush1.bf16.msra.mxu0 %v2460
        %2485 = vmatprep.subr.bf16.mxu0 0
        %2486 = vmatpush1.bf16.msra.mxu0 0
        %2487 = vmatprep.subr.bf16.mxu0 0
        %2488 = vmatpush1.bf16.msra.mxu0 0
        %2489 = vmatprep.subr.bf16.mxu0 0
        %2490 = vmatpush1.bf16.msra.mxu0 0
        %2491 = vmatprep.subr.bf16.mxu0 0
        %2492 = vmatpush1.bf16.msra.mxu0 0
        %2493 = vmatprep.subr.bf16.mxu0 0
        %2494 = vmatpush1.bf16.msra.mxu0 0
        %2495 = vmatprep.subr.bf16.mxu0 0
        %2496 = vmatpush1.bf16.msra.mxu0 0
        %2497 = vmatprep.subr.bf16.mxu0 0
        %2498 = vmatpush1.bf16.msra.mxu0 0
        %2499 = vmatprep.subr.bf16.mxu0 0
        %2500 = vmatpush1.bf16.msra.mxu0 0
        %2501 = vmatprep.mubr.bf16.mxu0 0
        %2502 = vmatmul.mubr.bf16.gmra.mrb[0].mxu0 %v2403
        %v2503 = vpop.f32.mrb[0].mxu0
        %v2504 = vadd.f32 0.0, %v2503
        %v2505 = vpop.f32.mrb[0].mxu0
        %v2506 = vpop.f32.mrb[0].mxu0
        %v2507 = vadd.f32 0.0, %v2506
        %v2508 = vpop.f32.mrb[0].mxu0
        %2509 = vmatprep.mubr.bf16.mxu0 0
        %2510 = vmatmul.mubr.bf16.gmra.mrb[0].mxu0 %v2404
        %v2511 = vpop.f32.mrb[0].mxu0
        %v2512 = vadd.f32 0.0, %v2511
        %v2513 = vpop.f32.mrb[0].mxu0
        %v2514 = vpop.f32.mrb[0].mxu0
        %v2515 = vadd.f32 0.0, %v2514
        %v2516 = vpop.f32.mrb[0].mxu0
        %2517 = vdwg.mxu0
        %v2534 = vunpack.c.l.b16 %v2387
        %v2535 = vunpack.c.l.b16 %v2388
        %v2536 = vunpack.c.l.b16 %v2389
        %v2537 = vunpack.c.l.b16 %v2390
        %v2538 = vunpack.c.l.b16 %v2391
        %v2539 = vunpack.c.l.b16 %v2392
        %v2540 = vunpack.c.l.b16 %v2393
        %v2541 = vunpack.c.l.b16 %v2394
        %v2542 = vunpack.c.l.b16 %v2395
        %v2543 = vunpack.c.l.b16 %v2396
        %v2544 = vunpack.c.l.b16 %v2397
        %v2545 = vunpack.c.l.b16 %v2398
        %v2546 = vunpack.c.l.b16 %v2399
        %v2547 = vunpack.c.l.b16 %v2400
        %v2548 = vunpack.c.l.b16 %v2401
        %v2549 = vunpack.c.l.b16 %v2402
        %v2550 = vpack.c.b16 %v2535, %v2534
        %v2551 = vpack.c.b16 %v2537, %v2536
        %v2552 = vpack.c.b16 %v2539, %v2538
        %v2553 = vpack.c.b16 %v2541, %v2540
        %v2554 = vpack.c.b16 %v2543, %v2542
        %v2555 = vpack.c.b16 %v2545, %v2544
        %v2556 = vpack.c.b16 %v2547, %v2546
        %v2557 = vpack.c.b16 %v2549, %v2548
        %2566 = vmatprep.subr.bf16.mxu0 0
        %2567 = vmatpush1.bf16.msra.mxu0 %v2550
        %2568 = vmatprep.subr.bf16.mxu0 0
        %2569 = vmatpush1.bf16.msra.mxu0 %v2551
        %2570 = vmatprep.subr.bf16.mxu0 0
        %2571 = vmatpush1.bf16.msra.mxu0 %v2552
        %2572 = vmatprep.subr.bf16.mxu0 0
        %2573 = vmatpush1.bf16.msra.mxu0 %v2553
        %2574 = vmatprep.subr.bf16.mxu0 0
        %2575 = vmatpush1.bf16.msra.mxu0 %v2554
        %2576 = vmatprep.subr.bf16.mxu0 0
        %2577 = vmatpush1.bf16.msra.mxu0 %v2555
        %2578 = vmatprep.subr.bf16.mxu0 0
        %2579 = vmatpush1.bf16.msra.mxu0 %v2556
        %2580 = vmatprep.subr.bf16.mxu0 0
        %2581 = vmatpush1.bf16.msra.mxu0 %v2557
        %2582 = vmatprep.subr.bf16.mxu0 0
        %2583 = vmatpush1.bf16.msra.mxu0 0
        %2584 = vmatprep.subr.bf16.mxu0 0
        %2585 = vmatpush1.bf16.msra.mxu0 0
        %2586 = vmatprep.subr.bf16.mxu0 0
        %2587 = vmatpush1.bf16.msra.mxu0 0
        %2588 = vmatprep.subr.bf16.mxu0 0
        %2589 = vmatpush1.bf16.msra.mxu0 0
        %2590 = vmatprep.subr.bf16.mxu0 0
        %2591 = vmatpush1.bf16.msra.mxu0 0
        %2592 = vmatprep.subr.bf16.mxu0 0
        %2593 = vmatpush1.bf16.msra.mxu0 0
        %2594 = vmatprep.subr.bf16.mxu0 0
        %2595 = vmatpush1.bf16.msra.mxu0 0
        %2596 = vmatprep.subr.bf16.mxu0 0
        %2597 = vmatpush1.bf16.msra.mxu0 0
        %2598 = vmatprep.mubr.bf16.mxu0 0
        %2599 = vmatmul.mubr.bf16.gmra.mrb[0].mxu0 %v2403
        %v2600 = vpop.f32.mrb[0].mxu0
        %v2601 = vadd.f32 %v2504, %v2600
        %v2602 = vpop.f32.mrb[0].mxu0
        %v2603 = vpop.f32.mrb[0].mxu0
        %v2604 = vadd.f32 %v2507, %v2603
        %v2605 = vpop.f32.mrb[0].mxu0
        %2606 = vmatprep.mubr.bf16.mxu0 0
        %2607 = vmatmul.mubr.bf16.gmra.mrb[0].mxu0 %v2404
        %v2608 = vpop.f32.mrb[0].mxu0
        %v2609 = vadd.f32 %v2512, %v2608
        %v2610 = vpop.f32.mrb[0].mxu0
        %v2611 = vpop.f32.mrb[0].mxu0
        %v2612 = vadd.f32 %v2515, %v2611
        %v2613 = vpop.f32.mrb[0].mxu0
        %2614 = vdwg.mxu0
        %v2615 = vld [vmem:[#allocation19] sm:$0x1]
        %v2617 = vlaneseq
        %v2618 = vshrl.u32 %v2617, 7
        %v2619 = vsub.s32 0, %v2618
        %v2620 = vrot.slane %v2615, %v2619
        %v2622 = vadd.f32 %v2601, %v2620
        %v2623 = vadd.f32 %v2604, %v2620
        %v2624 = vadd.f32 %v2609, %v2620
        %v2625 = vadd.f32 %v2612, %v2620
        %v2626 = vmax.f32 %v2622, 0.0
        %v2627 = vmax.f32 %v2623, 0.0
        %v2628 = vmax.f32 %v2624, 0.0
        %v2629 = vmax.f32 %v2625, 0.0
        %v2630 = vld [vmem:[#allocation20] sm:$0xf]
        %v2631 = vld [vmem:[#allocation20 + $0x4] sm:$0xf]
        %v2632 = vld [vmem:[#allocation20 + $0x8] sm:$0xf]
        %v2633 = vld [vmem:[#allocation20 + $0xc] sm:$0xf]
        %v2634 = vld [vmem:[#allocation20 + $0x10] sm:$0xf]
        %v2635 = vld [vmem:[#allocation20 + $0x14] sm:$0xf]
        %v2636 = vld [vmem:[#allocation20 + $0x18] sm:$0xf]
        %v2637 = vld [vmem:[#allocation20 + $0x1c] sm:$0xf]
        %v2638 = vld [vmem:[#allocation20 + $0x20] sm:$0xf]
        %v2639 = vld [vmem:[#allocation20 + $0x24] sm:$0xf]
        %v2640 = vld [vmem:[#allocation20 + $0x28] sm:$0xf]
        %v2641 = vld [vmem:[#allocation20 + $0x2c] sm:$0xf]
        %v2642 = vld [vmem:[#allocation20 + $0x30] sm:$0xf]
        %v2643 = vld [vmem:[#allocation20 + $0x34] sm:$0xf]
        %v2644 = vld [vmem:[#allocation20 + $0x38] sm:$0xf]
        %v2645 = vld [vmem:[#allocation20 + $0x3c] sm:$0xf]
        %v2646 = vpack.c.bf16 %v2627, %v2626
        %v2647 = vpack.c.bf16 %v2629, %v2628
        %v2648 = vld [vmem:[%s33] sm:$0x1]
        %v2650 = vlaneseq
        %v2651 = vshrl.u32 %v2650, 7
        %v2652 = vsub.s32 0, %v2651
        %v2653 = vrot.slane %v2648, %v2652
        %v2671 = vunpack.c.l.b16 %v2630
        %v2672 = vunpack.c.l.b16 %v2631
        %v2673 = vunpack.c.l.b16 %v2632
        %v2674 = vunpack.c.l.b16 %v2633
        %v2675 = vunpack.c.l.b16 %v2634
        %v2676 = vunpack.c.l.b16 %v2635
        %v2677 = vunpack.c.l.b16 %v2636
        %v2678 = vunpack.c.l.b16 %v2637
        %v2679 = vunpack.c.l.b16 %v2638
        %v2680 = vunpack.c.l.b16 %v2639
        %v2681 = vunpack.c.l.b16 %v2640
        %v2682 = vunpack.c.l.b16 %v2641
        %v2683 = vunpack.c.l.b16 %v2642
        %v2684 = vunpack.c.l.b16 %v2643
        %v2685 = vunpack.c.l.b16 %v2644
        %v2686 = vunpack.c.l.b16 %v2645
        %v2687 = vpack.c.b16 %v2672, %v2671
        %v2688 = vpack.c.b16 %v2674, %v2673
        %v2689 = vpack.c.b16 %v2676, %v2675
        %v2690 = vpack.c.b16 %v2678, %v2677
        %v2691 = vpack.c.b16 %v2680, %v2679
        %v2692 = vpack.c.b16 %v2682, %v2681
        %v2693 = vpack.c.b16 %v2684, %v2683
        %v2694 = vpack.c.b16 %v2686, %v2685
        %2703 = vmatprep.subr.bf16.mxu0 0
        %2704 = vmatpush1.bf16.msra.mxu0 %v2687
        %2705 = vmatprep.subr.bf16.mxu0 0
        %2706 = vmatpush1.bf16.msra.mxu0 %v2688
        %2707 = vmatprep.subr.bf16.mxu0 0
        %2708 = vmatpush1.bf16.msra.mxu0 %v2689
        %2709 = vmatprep.subr.bf16.mxu0 0
        %2710 = vmatpush1.bf16.msra.mxu0 %v2690
        %2711 = vmatprep.subr.bf16.mxu0 0
        %2712 = vmatpush1.bf16.msra.mxu0 %v2691
        %2713 = vmatprep.subr.bf16.mxu0 0
        %2714 = vmatpush1.bf16.msra.mxu0 %v2692
        %2715 = vmatprep.subr.bf16.mxu0 0
        %2716 = vmatpush1.bf16.msra.mxu0 %v2693
        %2717 = vmatprep.subr.bf16.mxu0 0
        %2718 = vmatpush1.bf16.msra.mxu0 %v2694
        %2719 = vmatprep.subr.bf16.mxu0 0
        %2720 = vmatpush1.bf16.msra.mxu0 0
        %2721 = vmatprep.subr.bf16.mxu0 0
        %2722 = vmatpush1.bf16.msra.mxu0 0
        %2723 = vmatprep.subr.bf16.mxu0 0
        %2724 = vmatpush1.bf16.msra.mxu0 0
        %2725 = vmatprep.subr.bf16.mxu0 0
        %2726 = vmatpush1.bf16.msra.mxu0 0
        %2727 = vmatprep.subr.bf16.mxu0 0
        %2728 = vmatpush1.bf16.msra.mxu0 0
        %2729 = vmatprep.subr.bf16.mxu0 0
        %2730 = vmatpush1.bf16.msra.mxu0 0
        %2731 = vmatprep.subr.bf16.mxu0 0
        %2732 = vmatpush1.bf16.msra.mxu0 0
        %2733 = vmatprep.subr.bf16.mxu0 0
        %2734 = vmatpush1.bf16.msra.mxu0 0
        %2735 = vmatprep.mubr.bf16.mxu0 0
        %2736 = vmatmul.mubr.bf16.gmra.mrb[0].mxu0 %v2646
        %v2737 = vpop.f32.mrb[0].mxu0
        %v2738 = vadd.f32 %v2653, %v2737
        %v2739 = vpop.f32.mrb[0].mxu0
        %v2740 = vpop.f32.mrb[0].mxu0
        %v2741 = vadd.f32 %v2653, %v2740
        %v2742 = vpop.f32.mrb[0].mxu0
        %2743 = vmatprep.mubr.bf16.mxu0 0
        %2744 = vmatmul.mubr.bf16.gmra.mrb[0].mxu0 %v2647
        %v2745 = vpop.f32.mrb[0].mxu0
        %v2746 = vadd.f32 %v2653, %v2745
        %v2747 = vpop.f32.mrb[0].mxu0
        %v2748 = vpop.f32.mrb[0].mxu0
        %v2749 = vadd.f32 %v2653, %v2748
        %v2750 = vpop.f32.mrb[0].mxu0
        %2751 = vdwg.mxu0
        %v2752 = vld [vmem:[#allocation22] sm:$0xf]
        %v2753 = vld [vmem:[#allocation22 + $0x4] sm:$0xf]
        %v2754 = vld [vmem:[#allocation22 + $0x8] sm:$0xf]
        %v2755 = vld [vmem:[#allocation22 + $0xc] sm:$0xf]
        %v2756 = vld [vmem:[#allocation22 + $0x10] sm:$0xf]
        %v2757 = vld [vmem:[#allocation22 + $0x14] sm:$0xf]
        %v2758 = vld [vmem:[#allocation22 + $0x18] sm:$0xf]
        %v2759 = vld [vmem:[#allocation22 + $0x1c] sm:$0xf]
        %v2760 = vld [vmem:[#allocation22 + $0x20] sm:$0xf]
        %v2761 = vld [vmem:[#allocation22 + $0x24] sm:$0xf]
        %v2762 = vld [vmem:[#allocation22 + $0x28] sm:$0xf]
        %v2763 = vld [vmem:[#allocation22 + $0x2c] sm:$0xf]
        %v2764 = vld [vmem:[#allocation22 + $0x30] sm:$0xf]
        %v2765 = vld [vmem:[#allocation22 + $0x34] sm:$0xf]
        %v2766 = vld [vmem:[#allocation22 + $0x38] sm:$0xf]
        %v2767 = vld [vmem:[#allocation22 + $0x3c] sm:$0xf]
        %v2784 = vunpack.c.l.b16 %v2752
        %v2785 = vunpack.c.l.b16 %v2753
        %v2786 = vunpack.c.l.b16 %v2754
        %v2787 = vunpack.c.l.b16 %v2755
        %v2788 = vunpack.c.l.b16 %v2756
        %v2789 = vunpack.c.l.b16 %v2757
        %v2790 = vunpack.c.l.b16 %v2758
        %v2791 = vunpack.c.l.b16 %v2759
        %v2792 = vunpack.c.l.b16 %v2760
        %v2793 = vunpack.c.l.b16 %v2761
        %v2794 = vunpack.c.l.b16 %v2762
        %v2795 = vunpack.c.l.b16 %v2763
        %v2796 = vunpack.c.l.b16 %v2764
        %v2797 = vunpack.c.l.b16 %v2765
        %v2798 = vunpack.c.l.b16 %v2766
        %v2799 = vunpack.c.l.b16 %v2767
        %v2800 = vpack.c.b16 %v2785, %v2784
        %v2801 = vpack.c.b16 %v2787, %v2786
        %v2802 = vpack.c.b16 %v2789, %v2788
        %v2803 = vpack.c.b16 %v2791, %v2790
        %v2804 = vpack.c.b16 %v2793, %v2792
        %v2805 = vpack.c.b16 %v2795, %v2794
        %v2806 = vpack.c.b16 %v2797, %v2796
        %v2807 = vpack.c.b16 %v2799, %v2798
        %2816 = vmatprep.subr.bf16.mxu0 0
        %2817 = vmatpush1.bf16.msra.mxu0 %v2800
        %2818 = vmatprep.subr.bf16.mxu0 0
        %2819 = vmatpush1.bf16.msra.mxu0 %v2801
        %2820 = vmatprep.subr.bf16.mxu0 0
        %2821 = vmatpush1.bf16.msra.mxu0 %v2802
        %2822 = vmatprep.subr.bf16.mxu0 0
        %2823 = vmatpush1.bf16.msra.mxu0 %v2803
        %2824 = vmatprep.subr.bf16.mxu0 0
        %2825 = vmatpush1.bf16.msra.mxu0 %v2804
        %2826 = vmatprep.subr.bf16.mxu0 0
        %2827 = vmatpush1.bf16.msra.mxu0 %v2805
        %2828 = vmatprep.subr.bf16.mxu0 0
        %2829 = vmatpush1.bf16.msra.mxu0 %v2806
        %2830 = vmatprep.subr.bf16.mxu0 0
        %2831 = vmatpush1.bf16.msra.mxu0 %v2807
        %2832 = vmatprep.subr.bf16.mxu0 0
        %2833 = vmatpush1.bf16.msra.mxu0 0
        %2834 = vmatprep.subr.bf16.mxu0 0
        %2835 = vmatpush1.bf16.msra.mxu0 0
        %2836 = vmatprep.subr.bf16.mxu0 0
        %2837 = vmatpush1.bf16.msra.mxu0 0
        %2838 = vmatprep.subr.bf16.mxu0 0
        %2839 = vmatpush1.bf16.msra.mxu0 0
        %2840 = vmatprep.subr.bf16.mxu0 0
        %2841 = vmatpush1.bf16.msra.mxu0 0
        %2842 = vmatprep.subr.bf16.mxu0 0
        %2843 = vmatpush1.bf16.msra.mxu0 0
        %2844 = vmatprep.subr.bf16.mxu0 0
        %2845 = vmatpush1.bf16.msra.mxu0 0
        %2846 = vmatprep.subr.bf16.mxu0 0
        %2847 = vmatpush1.bf16.msra.mxu0 0
        %2848 = vmatprep.mubr.bf16.mxu0 0
        %2849 = vmatmul.mubr.bf16.gmra.mrb[0].mxu0 %v2403
        %v2850 = vpop.f32.mrb[0].mxu0
        %v2851 = vadd.f32 0.0, %v2850
        %v2852 = vpop.f32.mrb[0].mxu0
        %v2853 = vpop.f32.mrb[0].mxu0
        %v2854 = vadd.f32 0.0, %v2853
        %v2855 = vpop.f32.mrb[0].mxu0
        %2856 = vmatprep.mubr.bf16.mxu0 0
        %2857 = vmatmul.mubr.bf16.gmra.mrb[0].mxu0 %v2404
        %v2858 = vpop.f32.mrb[0].mxu0
        %v2859 = vadd.f32 0.0, %v2858
        %v2860 = vpop.f32.mrb[0].mxu0
        %v2861 = vpop.f32.mrb[0].mxu0
        %v2862 = vadd.f32 0.0, %v2861
        %v2863 = vpop.f32.mrb[0].mxu0
        %2864 = vdwg.mxu0
        %v2865 = vadd.f32 %v2738, %v2851
        %v2866 = vadd.f32 %v2741, %v2854
        %v2867 = vadd.f32 %v2746, %v2859
        %v2868 = vadd.f32 %v2749, %v2862
        %v2869 = vld [vmem:[#allocation23] sm:$0xf]
        %v2870 = vld [vmem:[#allocation23 + $0x4] sm:$0xf]
        %v2871 = vld [vmem:[#allocation23 + $0x8] sm:$0xf]
        %v2872 = vld [vmem:[#allocation23 + $0xc] sm:$0xf]
        %v2873 = vld [vmem:[#allocation23 + $0x10] sm:$0xf]
        %v2874 = vld [vmem:[#allocation23 + $0x14] sm:$0xf]
        %v2875 = vld [vmem:[#allocation23 + $0x18] sm:$0xf]
        %v2876 = vld [vmem:[#allocation23 + $0x1c] sm:$0xf]
        %v2877 = vld [vmem:[#allocation23 + $0x20] sm:$0xf]
        %v2878 = vld [vmem:[#allocation23 + $0x24] sm:$0xf]
        %v2879 = vld [vmem:[#allocation23 + $0x28] sm:$0xf]
        %v2880 = vld [vmem:[#allocation23 + $0x2c] sm:$0xf]
        %v2881 = vld [vmem:[#allocation23 + $0x30] sm:$0xf]
        %v2882 = vld [vmem:[#allocation23 + $0x34] sm:$0xf]
        %v2883 = vld [vmem:[#allocation23 + $0x38] sm:$0xf]
        %v2884 = vld [vmem:[#allocation23 + $0x3c] sm:$0xf]
        %v2901 = vunpack.c.l.b16 %v2869
        %v2902 = vunpack.c.l.b16 %v2870
        %v2903 = vunpack.c.l.b16 %v2871
        %v2904 = vunpack.c.l.b16 %v2872
        %v2905 = vunpack.c.l.b16 %v2873
        %v2906 = vunpack.c.l.b16 %v2874
        %v2907 = vunpack.c.l.b16 %v2875
        %v2908 = vunpack.c.l.b16 %v2876
        %v2909 = vunpack.c.l.b16 %v2877
        %v2910 = vunpack.c.l.b16 %v2878
        %v2911 = vunpack.c.l.b16 %v2879
        %v2912 = vunpack.c.l.b16 %v2880
        %v2913 = vunpack.c.l.b16 %v2881
        %v2914 = vunpack.c.l.b16 %v2882
        %v2915 = vunpack.c.l.b16 %v2883
        %v2916 = vunpack.c.l.b16 %v2884
        %v2917 = vpack.c.b16 %v2902, %v2901
        %v2918 = vpack.c.b16 %v2904, %v2903
        %v2919 = vpack.c.b16 %v2906, %v2905
        %v2920 = vpack.c.b16 %v2908, %v2907
        %v2921 = vpack.c.b16 %v2910, %v2909
        %v2922 = vpack.c.b16 %v2912, %v2911
        %v2923 = vpack.c.b16 %v2914, %v2913
        %v2924 = vpack.c.b16 %v2916, %v2915
        %2933 = vmatprep.subr.bf16.mxu0 0
        %2934 = vmatpush1.bf16.msra.mxu0 %v2917
        %2935 = vmatprep.subr.bf16.mxu0 0
        %2936 = vmatpush1.bf16.msra.mxu0 %v2918
        %2937 = vmatprep.subr.bf16.mxu0 0
        %2938 = vmatpush1.bf16.msra.mxu0 %v2919
        %2939 = vmatprep.subr.bf16.mxu0 0
        %2940 = vmatpush1.bf16.msra.mxu0 %v2920
        %2941 = vmatprep.subr.bf16.mxu0 0
        %2942 = vmatpush1.bf16.msra.mxu0 %v2921
        %2943 = vmatprep.subr.bf16.mxu0 0
        %2944 = vmatpush1.bf16.msra.mxu0 %v2922
        %2945 = vmatprep.subr.bf16.mxu0 0
        %2946 = vmatpush1.bf16.msra.mxu0 %v2923
        %2947 = vmatprep.subr.bf16.mxu0 0
        %2948 = vmatpush1.bf16.msra.mxu0 %v2924
        %2949 = vmatprep.subr.bf16.mxu0 0
        %2950 = vmatpush1.bf16.msra.mxu0 0
        %2951 = vmatprep.subr.bf16.mxu0 0
        %2952 = vmatpush1.bf16.msra.mxu0 0
        %2953 = vmatprep.subr.bf16.mxu0 0
        %2954 = vmatpush1.bf16.msra.mxu0 0
        %2955 = vmatprep.subr.bf16.mxu0 0
        %2956 = vmatpush1.bf16.msra.mxu0 0
        %2957 = vmatprep.subr.bf16.mxu0 0
        %2958 = vmatpush1.bf16.msra.mxu0 0
        %2959 = vmatprep.subr.bf16.mxu0 0
        %2960 = vmatpush1.bf16.msra.mxu0 0
        %2961 = vmatprep.subr.bf16.mxu0 0
        %2962 = vmatpush1.bf16.msra.mxu0 0
        %2963 = vmatprep.subr.bf16.mxu0 0
        %2964 = vmatpush1.bf16.msra.mxu0 0
        %2965 = vmatprep.mubr.bf16.mxu0 0
        %2966 = vmatmul.mubr.bf16.gmra.mrb[0].mxu0 %v2403
        %v2967 = vpop.f32.mrb[0].mxu0
        %v2968 = vadd.f32 0.0, %v2967
        %v2969 = vpop.f32.mrb[0].mxu0
        %v2970 = vpop.f32.mrb[0].mxu0
        %v2971 = vadd.f32 0.0, %v2970
        %v2972 = vpop.f32.mrb[0].mxu0
        %2973 = vmatprep.mubr.bf16.mxu0 0
        %2974 = vmatmul.mubr.bf16.gmra.mrb[0].mxu0 %v2404
        %v2975 = vpop.f32.mrb[0].mxu0
        %v2976 = vadd.f32 0.0, %v2975
        %v2977 = vpop.f32.mrb[0].mxu0
        %v2978 = vpop.f32.mrb[0].mxu0
        %v2979 = vadd.f32 0.0, %v2978
        %v2980 = vpop.f32.mrb[0].mxu0
        %2981 = vdwg.mxu0
        %v2982 = vadd.f32 %v2865, %v2968
        %v2983 = vadd.f32 %v2866, %v2971
        %v2984 = vadd.f32 %v2867, %v2976
        %v2985 = vadd.f32 %v2868, %v2979
        %v2986 = vld [vmem:[%s39] sm:$0x1]
        %v2988 = vlaneseq
        %v2989 = vshrl.u32 %v2988, 7
        %v2990 = vsub.s32 0, %v2989
        %v2991 = vrot.slane %v2986, %v2990
        %v2993 = vadd.f32 %v2982, %v2991
        %v2994 = vadd.f32 %v2983, %v2991
        %v2995 = vadd.f32 %v2984, %v2991
        %v2996 = vadd.f32 %v2985, %v2991
        %2997 = vst [vmem:[%s1154] sm:$0xff] %v2993
        %2998 = vst [vmem:[%s1154 + $0x8] sm:$0xff] %v2994
        %2999 = vst [vmem:[%s1154 + $0x10] sm:$0xff] %v2995
        %3000 = vst [vmem:[%s1154 + $0x18] sm:$0xff] %v2996
        %v3001 = vld [vmem:[%s41] sm:$0xf]
        %v3002 = vld [vmem:[%s41 + $0x4] sm:$0xf]
        %v3003 = vld [vmem:[%s41 + $0x8] sm:$0xf]
        %v3004 = vld [vmem:[%s41 + $0xc] sm:$0xf]
        %v3005 = vld [vmem:[%s41 + $0x10] sm:$0xf]
        %v3006 = vld [vmem:[%s41 + $0x14] sm:$0xf]
        %v3007 = vld [vmem:[%s41 + $0x18] sm:$0xf]
        %v3008 = vld [vmem:[%s41 + $0x1c] sm:$0xf]
        %v3009 = vld [vmem:[%s41 + $0x20] sm:$0xf]
        %v3010 = vld [vmem:[%s41 + $0x24] sm:$0xf]
        %v3011 = vld [vmem:[%s41 + $0x28] sm:$0xf]
        %v3012 = vld [vmem:[%s41 + $0x2c] sm:$0xf]
        %v3013 = vld [vmem:[%s41 + $0x30] sm:$0xf]
        %v3014 = vld [vmem:[%s41 + $0x34] sm:$0xf]
        %v3015 = vld [vmem:[%s41 + $0x38] sm:$0xf]
        %v3016 = vld [vmem:[%s41 + $0x3c] sm:$0xf]
        %v3017 = vld [vmem:[#allocation25] sm:$0x1]
        %v3019 = vlaneseq
        %v3020 = vshrl.u32 %v3019, 7
        %v3021 = vsub.s32 0, %v3020
        %v3022 = vrot.slane %v3017, %v3021
        %v3040 = vunpack.c.l.b16 %v3001
        %v3041 = vunpack.c.l.b16 %v3002
        %v3042 = vunpack.c.l.b16 %v3003
        %v3043 = vunpack.c.l.b16 %v3004
        %v3044 = vunpack.c.l.b16 %v3005
        %v3045 = vunpack.c.l.b16 %v3006
        %v3046 = vunpack.c.l.b16 %v3007
        %v3047 = vunpack.c.l.b16 %v3008
        %v3048 = vunpack.c.l.b16 %v3009
        %v3049 = vunpack.c.l.b16 %v3010
        %v3050 = vunpack.c.l.b16 %v3011
        %v3051 = vunpack.c.l.b16 %v3012
        %v3052 = vunpack.c.l.b16 %v3013
        %v3053 = vunpack.c.l.b16 %v3014
        %v3054 = vunpack.c.l.b16 %v3015
        %v3055 = vunpack.c.l.b16 %v3016
        %v3056 = vpack.c.b16 %v3041, %v3040
        %v3057 = vpack.c.b16 %v3043, %v3042
        %v3058 = vpack.c.b16 %v3045, %v3044
        %v3059 = vpack.c.b16 %v3047, %v3046
        %v3060 = vpack.c.b16 %v3049, %v3048
        %v3061 = vpack.c.b16 %v3051, %v3050
        %v3062 = vpack.c.b16 %v3053, %v3052
        %v3063 = vpack.c.b16 %v3055, %v3054
        %3072 = vmatprep.subr.bf16.mxu0 0
        %3073 = vmatpush1.bf16.msra.mxu0 %v3056
        %3074 = vmatprep.subr.bf16.mxu0 0
        %3075 = vmatpush1.bf16.msra.mxu0 %v3057
        %3076 = vmatprep.subr.bf16.mxu0 0
        %3077 = vmatpush1.bf16.msra.mxu0 %v3058
        %3078 = vmatprep.subr.bf16.mxu0 0
        %3079 = vmatpush1.bf16.msra.mxu0 %v3059
        %3080 = vmatprep.subr.bf16.mxu0 0
        %3081 = vmatpush1.bf16.msra.mxu0 %v3060
        %3082 = vmatprep.subr.bf16.mxu0 0
        %3083 = vmatpush1.bf16.msra.mxu0 %v3061
        %3084 = vmatprep.subr.bf16.mxu0 0
        %3085 = vmatpush1.bf16.msra.mxu0 %v3062
        %3086 = vmatprep.subr.bf16.mxu0 0
        %3087 = vmatpush1.bf16.msra.mxu0 %v3063
        %3088 = vmatprep.subr.bf16.mxu0 0
        %3089 = vmatpush1.bf16.msra.mxu0 0
        %3090 = vmatprep.subr.bf16.mxu0 0
        %3091 = vmatpush1.bf16.msra.mxu0 0
        %3092 = vmatprep.subr.bf16.mxu0 0
        %3093 = vmatpush1.bf16.msra.mxu0 0
        %3094 = vmatprep.subr.bf16.mxu0 0
        %3095 = vmatpush1.bf16.msra.mxu0 0
        %3096 = vmatprep.subr.bf16.mxu0 0
        %3097 = vmatpush1.bf16.msra.mxu0 0
        %3098 = vmatprep.subr.bf16.mxu0 0
        %3099 = vmatpush1.bf16.msra.mxu0 0
        %3100 = vmatprep.subr.bf16.mxu0 0
        %3101 = vmatpush1.bf16.msra.mxu0 0
        %3102 = vmatprep.subr.bf16.mxu0 0
        %3103 = vmatpush1.bf16.msra.mxu0 0
        %3104 = vmatprep.mubr.bf16.mxu0 0
        %3105 = vmatmul.mubr.bf16.gmra.mrb[0].mxu0 %v2403
        %v3106 = vpop.f32.mrb[0].mxu0
        %v3107 = vadd.f32 %v3022, %v3106
        %v3108 = vpop.f32.mrb[0].mxu0
        %v3109 = vpop.f32.mrb[0].mxu0
        %v3110 = vadd.f32 %v3022, %v3109
        %v3111 = vpop.f32.mrb[0].mxu0
        %3112 = vmatprep.mubr.bf16.mxu0 0
        %3113 = vmatmul.mubr.bf16.gmra.mrb[0].mxu0 %v2404
        %v3114 = vpop.f32.mrb[0].mxu0
        %v3115 = vadd.f32 %v3022, %v3114
        %v3116 = vpop.f32.mrb[0].mxu0
        %v3117 = vpop.f32.mrb[0].mxu0
        %v3118 = vadd.f32 %v3022, %v3117
        %v3119 = vpop.f32.mrb[0].mxu0
        %3120 = vdwg.mxu0
        %3121 = vst.msk [vmem:[%s1161] sm:$0xff] %vm1302, %v3107
        %3122 = vst.msk [vmem:[%s1161 + $0x8] sm:$0xff] %vm1302, %v3110
        %3123 = vst.msk [vmem:[%s1161 + $0x10] sm:$0xff] %vm1302, %v3115
        %3124 = vst.msk [vmem:[%s1161 + $0x18] sm:$0xff] %vm1302, %v3118
        %v3125 = vld [vmem:[%s45] sm:$0xf]
        %v3126 = vld [vmem:[%s45 + $0x4] sm:$0xf]
        %v3127 = vld [vmem:[%s45 + $0x8] sm:$0xf]
        %v3128 = vld [vmem:[%s45 + $0xc] sm:$0xf]
        %v3129 = vld [vmem:[%s45 + $0x10] sm:$0xf]
        %v3130 = vld [vmem:[%s45 + $0x14] sm:$0xf]
        %v3131 = vld [vmem:[%s45 + $0x18] sm:$0xf]
        %v3132 = vld [vmem:[%s45 + $0x1c] sm:$0xf]
        %v3133 = vld [vmem:[%s45 + $0x20] sm:$0xf]
        %v3134 = vld [vmem:[%s45 + $0x24] sm:$0xf]
        %v3135 = vld [vmem:[%s45 + $0x28] sm:$0xf]
        %v3136 = vld [vmem:[%s45 + $0x2c] sm:$0xf]
        %v3137 = vld [vmem:[%s45 + $0x30] sm:$0xf]
        %v3138 = vld [vmem:[%s45 + $0x34] sm:$0xf]
        %v3139 = vld [vmem:[%s45 + $0x38] sm:$0xf]
        %v3140 = vld [vmem:[%s45 + $0x3c] sm:$0xf]
        %v3141 = vld [vmem:[#allocation26] sm:$0x1]
        %v3143 = vlaneseq
        %v3144 = vshrl.u32 %v3143, 7
        %v3145 = vsub.s32 0, %v3144
        %v3146 = vrot.slane %v3141, %v3145
        %v3164 = vunpack.c.l.b16 %v3125
        %v3165 = vunpack.c.l.b16 %v3126
        %v3166 = vunpack.c.l.b16 %v3127
        %v3167 = vunpack.c.l.b16 %v3128
        %v3168 = vunpack.c.l.b16 %v3129
        %v3169 = vunpack.c.l.b16 %v3130
        %v3170 = vunpack.c.l.b16 %v3131
        %v3171 = vunpack.c.l.b16 %v3132
        %v3172 = vunpack.c.l.b16 %v3133
        %v3173 = vunpack.c.l.b16 %v3134
        %v3174 = vunpack.c.l.b16 %v3135
        %v3175 = vunpack.c.l.b16 %v3136
        %v3176 = vunpack.c.l.b16 %v3137
        %v3177 = vunpack.c.l.b16 %v3138
        %v3178 = vunpack.c.l.b16 %v3139
        %v3179 = vunpack.c.l.b16 %v3140
        %v3180 = vpack.c.b16 %v3165, %v3164
        %v3181 = vpack.c.b16 %v3167, %v3166
        %v3182 = vpack.c.b16 %v3169, %v3168
        %v3183 = vpack.c.b16 %v3171, %v3170
        %v3184 = vpack.c.b16 %v3173, %v3172
        %v3185 = vpack.c.b16 %v3175, %v3174
        %v3186 = vpack.c.b16 %v3177, %v3176
        %v3187 = vpack.c.b16 %v3179, %v3178
        %3196 = vmatprep.subr.bf16.mxu0 0
        %3197 = vmatpush1.bf16.msra.mxu0 %v3180
        %3198 = vmatprep.subr.bf16.mxu0 0
        %3199 = vmatpush1.bf16.msra.mxu0 %v3181
        %3200 = vmatprep.subr.bf16.mxu0 0
        %3201 = vmatpush1.bf16.msra.mxu0 %v3182
        %3202 = vmatprep.subr.bf16.mxu0 0
        %3203 = vmatpush1.bf16.msra.mxu0 %v3183
        %3204 = vmatprep.subr.bf16.mxu0 0
        %3205 = vmatpush1.bf16.msra.mxu0 %v3184
        %3206 = vmatprep.subr.bf16.mxu0 0
        %3207 = vmatpush1.bf16.msra.mxu0 %v3185
        %3208 = vmatprep.subr.bf16.mxu0 0
        %3209 = vmatpush1.bf16.msra.mxu0 %v3186
        %3210 = vmatprep.subr.bf16.mxu0 0
        %3211 = vmatpush1.bf16.msra.mxu0 %v3187
        %3212 = vmatprep.subr.bf16.mxu0 0
        %3213 = vmatpush1.bf16.msra.mxu0 0
        %3214 = vmatprep.subr.bf16.mxu0 0
        %3215 = vmatpush1.bf16.msra.mxu0 0
        %3216 = vmatprep.subr.bf16.mxu0 0
        %3217 = vmatpush1.bf16.msra.mxu0 0
        %3218 = vmatprep.subr.bf16.mxu0 0
        %3219 = vmatpush1.bf16.msra.mxu0 0
        %3220 = vmatprep.subr.bf16.mxu0 0
        %3221 = vmatpush1.bf16.msra.mxu0 0
        %3222 = vmatprep.subr.bf16.mxu0 0
        %3223 = vmatpush1.bf16.msra.mxu0 0
        %3224 = vmatprep.subr.bf16.mxu0 0
        %3225 = vmatpush1.bf16.msra.mxu0 0
        %3226 = vmatprep.subr.bf16.mxu0 0
        %3227 = vmatpush1.bf16.msra.mxu0 0
        %3228 = vmatprep.mubr.bf16.mxu0 0
        %3229 = vmatmul.mubr.bf16.gmra.mrb[0].mxu0 %v2403
        %v3230 = vpop.f32.mrb[0].mxu0
        %v3231 = vadd.f32 %v3146, %v3230
        %v3232 = vpop.f32.mrb[0].mxu0
        %v3233 = vpop.f32.mrb[0].mxu0
        %v3234 = vadd.f32 %v3146, %v3233
        %v3235 = vpop.f32.mrb[0].mxu0
        %3236 = vmatprep.mubr.bf16.mxu0 0
        %3237 = vmatmul.mubr.bf16.gmra.mrb[0].mxu0 %v2404
        %v3238 = vpop.f32.mrb[0].mxu0
        %v3239 = vadd.f32 %v3146, %v3238
        %v3240 = vpop.f32.mrb[0].mxu0
        %v3241 = vpop.f32.mrb[0].mxu0
        %v3242 = vadd.f32 %v3146, %v3241
        %v3243 = vpop.f32.mrb[0].mxu0
        %3244 = vdwg.mxu0
        %3245 = vst.msk [vmem:[%s1168] sm:$0xff] %vm1302, %v3231
        %3246 = vst.msk [vmem:[%s1168 + $0x8] sm:$0xff] %vm1302, %v3234
        %3247 = vst.msk [vmem:[%s1168 + $0x10] sm:$0xff] %vm1302, %v3239
        %3248 = vst.msk [vmem:[%s1168 + $0x18] sm:$0xff] %vm1302, %v3242
        %v3249 = vld [vmem:[%s49] sm:$0xf]
        %v3250 = vld [vmem:[%s49 + $0x4] sm:$0xf]
        %v3251 = vld [vmem:[%s49 + $0x8] sm:$0xf]
        %v3252 = vld [vmem:[%s49 + $0xc] sm:$0xf]
        %v3253 = vld [vmem:[%s49 + $0x10] sm:$0xf]
        %v3254 = vld [vmem:[%s49 + $0x14] sm:$0xf]
        %v3255 = vld [vmem:[%s49 + $0x18] sm:$0xf]
        %v3256 = vld [vmem:[%s49 + $0x1c] sm:$0xf]
        %v3257 = vld [vmem:[%s49 + $0x20] sm:$0xf]
        %v3258 = vld [vmem:[%s49 + $0x24] sm:$0xf]
        %v3259 = vld [vmem:[%s49 + $0x28] sm:$0xf]
        %v3260 = vld [vmem:[%s49 + $0x2c] sm:$0xf]
        %v3261 = vld [vmem:[%s49 + $0x30] sm:$0xf]
        %v3262 = vld [vmem:[%s49 + $0x34] sm:$0xf]
        %v3263 = vld [vmem:[%s49 + $0x38] sm:$0xf]
        %v3264 = vld [vmem:[%s49 + $0x3c] sm:$0xf]
        %v3265 = vpack.c.bf16 %v2994, %v2993
        %v3266 = vpack.c.bf16 %v2996, %v2995
        %v3267 = vld [vmem:[#allocation28] sm:$0x1]
        %v3269 = vlaneseq
        %v3270 = vshrl.u32 %v3269, 7
        %v3271 = vsub.s32 0, %v3270
        %v3272 = vrot.slane %v3267, %v3271
        %v3290 = vunpack.c.l.b16 %v3249
        %v3291 = vunpack.c.l.b16 %v3250
        %v3292 = vunpack.c.l.b16 %v3251
        %v3293 = vunpack.c.l.b16 %v3252
        %v3294 = vunpack.c.l.b16 %v3253
        %v3295 = vunpack.c.l.b16 %v3254
        %v3296 = vunpack.c.l.b16 %v3255
        %v3297 = vunpack.c.l.b16 %v3256
        %v3298 = vunpack.c.l.b16 %v3257
        %v3299 = vunpack.c.l.b16 %v3258
        %v3300 = vunpack.c.l.b16 %v3259
        %v3301 = vunpack.c.l.b16 %v3260
        %v3302 = vunpack.c.l.b16 %v3261
        %v3303 = vunpack.c.l.b16 %v3262
        %v3304 = vunpack.c.l.b16 %v3263
        %v3305 = vunpack.c.l.b16 %v3264
        %v3306 = vpack.c.b16 %v3291, %v3290
        %v3307 = vpack.c.b16 %v3293, %v3292
        %v3308 = vpack.c.b16 %v3295, %v3294
        %v3309 = vpack.c.b16 %v3297, %v3296
        %v3310 = vpack.c.b16 %v3299, %v3298
        %v3311 = vpack.c.b16 %v3301, %v3300
        %v3312 = vpack.c.b16 %v3303, %v3302
        %v3313 = vpack.c.b16 %v3305, %v3304
        %3322 = vmatprep.subr.bf16.mxu0 0
        %3323 = vmatpush1.bf16.msra.mxu0 %v3306
        %3324 = vmatprep.subr.bf16.mxu0 0
        %3325 = vmatpush1.bf16.msra.mxu0 %v3307
        %3326 = vmatprep.subr.bf16.mxu0 0
        %3327 = vmatpush1.bf16.msra.mxu0 %v3308
        %3328 = vmatprep.subr.bf16.mxu0 0
        %3329 = vmatpush1.bf16.msra.mxu0 %v3309
        %3330 = vmatprep.subr.bf16.mxu0 0
        %3331 = vmatpush1.bf16.msra.mxu0 %v3310
        %3332 = vmatprep.subr.bf16.mxu0 0
        %3333 = vmatpush1.bf16.msra.mxu0 %v3311
        %3334 = vmatprep.subr.bf16.mxu0 0
        %3335 = vmatpush1.bf16.msra.mxu0 %v3312
        %3336 = vmatprep.subr.bf16.mxu0 0
        %3337 = vmatpush1.bf16.msra.mxu0 %v3313
        %3338 = vmatprep.subr.bf16.mxu0 0
        %3339 = vmatpush1.bf16.msra.mxu0 0
        %3340 = vmatprep.subr.bf16.mxu0 0
        %3341 = vmatpush1.bf16.msra.mxu0 0
        %3342 = vmatprep.subr.bf16.mxu0 0
        %3343 = vmatpush1.bf16.msra.mxu0 0
        %3344 = vmatprep.subr.bf16.mxu0 0
        %3345 = vmatpush1.bf16.msra.mxu0 0
        %3346 = vmatprep.subr.bf16.mxu0 0
        %3347 = vmatpush1.bf16.msra.mxu0 0
        %3348 = vmatprep.subr.bf16.mxu0 0
        %3349 = vmatpush1.bf16.msra.mxu0 0
        %3350 = vmatprep.subr.bf16.mxu0 0
        %3351 = vmatpush1.bf16.msra.mxu0 0
        %3352 = vmatprep.subr.bf16.mxu0 0
        %3353 = vmatpush1.bf16.msra.mxu0 0
        %3354 = vmatprep.mubr.bf16.mxu0 0
        %3355 = vmatmul.mubr.bf16.gmra.mrb[0].mxu0 %v3265
        %v3356 = vpop.f32.mrb[0].mxu0
        %v3357 = vadd.f32 %v3272, %v3356
        %v3358 = vpop.f32.mrb[0].mxu0
        %v3359 = vpop.f32.mrb[0].mxu0
        %v3360 = vadd.f32 %v3272, %v3359
        %v3361 = vpop.f32.mrb[0].mxu0
        %3362 = vmatprep.mubr.bf16.mxu0 0
        %3363 = vmatmul.mubr.bf16.gmra.mrb[0].mxu0 %v3266
        %v3364 = vpop.f32.mrb[0].mxu0
        %v3365 = vadd.f32 %v3272, %v3364
        %v3366 = vpop.f32.mrb[0].mxu0
        %v3367 = vpop.f32.mrb[0].mxu0
        %v3368 = vadd.f32 %v3272, %v3367
        %v3369 = vpop.f32.mrb[0].mxu0
        %3370 = vdwg.mxu0
        %3371 = vst.msk [vmem:[%s1175] sm:$0xff] %vm1302, %v3357
        %3372 = vst.msk [vmem:[%s1175 + $0x8] sm:$0xff] %vm1302, %v3360
        %3373 = vst.msk [vmem:[%s1175 + $0x10] sm:$0xff] %vm1302, %v3365
        %3374 = vst.msk [vmem:[%s1175 + $0x18] sm:$0xff] %vm1302, %v3368
        %s3375 = sand.u32 %s655, 1
        %s3376 = scalar_lea.sflag [#allocation4], %s3375
        %s3377 = sand.u32 %s655, 1
        %s3378 = smul.addr %s3377, 32
        %s3379 = scalar_lea.vmem [#allocation29], %s3378
        %s3380 = sand.u32 %s91, 1
        %s3381 = scalar_lea.sflag [#allocation31], %s3380
        %s3382 = sand.u32 %s681, 1
        %s3383 = smul.addr %s3382, 32
        %s3384 = scalar_lea.vmem [#allocation30], %s3383
        %s3385 = sand.u32 %s91, 1
        %s3386 = scalar_lea.sflag [#allocation31], %s3385
        %s3387 = sand.u32 %s707, 1
        %s3388 = smul.addr %s3387, 32
        %s3389 = scalar_lea.vmem [#allocation32], %s3388
        %s3390 = sand.u32 %s733, 1
        %s3391 = scalar_lea.sflag [#allocation34], %s3390
        %s3392 = sand.u32 %s733, 1
        %s3393 = smul.addr %s3392, 32
        %s3394 = scalar_lea.vmem [#allocation33], %s3393
        // Predicated region
        $region193: #{tpu_custom_call.1} parent=123 // pred_check
          %p3395 = pneg %p665
        $region194: #{tpu_custom_call.1} parent=123 // pred_check_branch
          %3397 = sbr.rel (%p3395) target = $region196
        $region195: #{tpu_custom_call.1} parent=123 // pred_region
          %s3399 = ssub.s32 512, 512
          %3400 = vsyncadd %s3376, %s3399
          %s3401 = smul.addr %s91, 4
          %s3402 = smul.addr %s3401, 128
          %s3403 = scalar_lea.hbm %s53, %s3402
          %s3404 = sshll.u32 %s3379, 4
          %s3405 = int_to_ptr.vmem [resolvable:$true] %s3404
          %3410 = dma.vmem_to_hbm [thread:$0]  %s3405, 512, %s3403, %s3376, 128, 128, 8
        $region196: #{tpu_custom_call.1} parent=123 // pred_fallthru
          _
        // Predicated region
        $region197: #{tpu_custom_call.1} parent=123 // pred_check
          %p3411 = pneg %p691
        $region198: #{tpu_custom_call.1} parent=123 // pred_check_branch
          %3413 = sbr.rel (%p3411) target = $region200
        $region199: #{tpu_custom_call.1} parent=123 // pred_region
          %s3415 = ssub.s32 512, 512
          %3416 = vsyncadd %s3381, %s3415
          %s3417 = smul.addr %s91, 4
          %s3418 = smul.addr %s3417, 128
          %s3419 = scalar_lea.hbm %s55, %s3418
          %s3420 = sshll.u32 %s3384, 4
          %s3421 = int_to_ptr.vmem [resolvable:$true] %s3420
          %3426 = dma.vmem_to_hbm [thread:$0]  %s3421, 512, %s3419, %s3381, 128, 128, 8
        $region200: #{tpu_custom_call.1} parent=123 // pred_fallthru
          _
        // Predicated region
        $region201: #{tpu_custom_call.1} parent=123 // pred_check
          %p3427 = pneg %p717
        $region202: #{tpu_custom_call.1} parent=123 // pred_check_branch
          %3429 = sbr.rel (%p3427) target = $region204
        $region203: #{tpu_custom_call.1} parent=123 // pred_region
          %s3431 = ssub.s32 512, 512
          %3432 = vsyncadd %s3386, %s3431
          %s3433 = smul.addr %s91, 4
          %s3434 = smul.addr %s3433, 128
          %s3435 = scalar_lea.hbm %s57, %s3434
          %s3436 = sshll.u32 %s3389, 4
          %s3437 = int_to_ptr.vmem [resolvable:$true] %s3436
          %3442 = dma.vmem_to_hbm [thread:$0]  %s3437, 512, %s3435, %s3386, 128, 128, 8
        $region204: #{tpu_custom_call.1} parent=123 // pred_fallthru
          _
        // Predicated region
        $region205: #{tpu_custom_call.1} parent=123 // pred_check
          %p3443 = pneg %p743
        $region206: #{tpu_custom_call.1} parent=123 // pred_check_branch
          %3445 = sbr.rel (%p3443) target = $region208
        $region207: #{tpu_custom_call.1} parent=123 // pred_region
          %s3447 = ssub.s32 512, 512
          %3448 = vsyncadd %s3391, %s3447
          %s3449 = smul.addr %s91, 4
          %s3450 = smul.addr %s3449, 128
          %s3451 = scalar_lea.hbm %s59, %s3450
          %s3452 = sshll.u32 %s3394, 4
          %s3453 = int_to_ptr.vmem [resolvable:$true] %s3452
          %3458 = dma.vmem_to_hbm [thread:$0]  %s3453, 512, %s3451, %s3391, 128, 128, 8
        $region208: #{tpu_custom_call.1} parent=123 // pred_fallthru
          _
      $region124: #{tpu_custom_call.1} parent=5 // pred_fallthru
        _
      %p3459 = scmp.le.s32.totalorder 2, %s86
      // Predicated region
      $region209: #{tpu_custom_call.1} parent=5 // pred_check
        %p3460 = pneg %p3459
      $region210: #{tpu_custom_call.1} parent=5 // pred_check_branch
        %3462 = sbr.rel (%p3460) target = $region212
      $region211: #{tpu_custom_call.1} parent=5 // pred_region
        %s3463 = ssub.s32 %s86, 2
        // Predicated region
        $region213: #{tpu_custom_call.1} parent=211 // pred_check
          %p3464 = pneg %p671
        $region214: #{tpu_custom_call.1} parent=211 // pred_check_branch
          %3466 = sbr.rel (%p3464) target = $region216
        $region215: #{tpu_custom_call.1} parent=211 // pred_region
          %s3467 = sand.u32 %s656, 1
          %s3468 = scalar_lea.sflag [#allocation4], %s3467
          %s3469 = sand.u32 %s656, 1
          %s3470 = smul.addr %s3469, 32
          %s3471 = scalar_lea.vmem [#allocation29], %s3470
          %3472 = dma.done %s3468, 512
        $region216: #{tpu_custom_call.1} parent=211 // pred_fallthru
          _
        // Predicated region
        $region217: #{tpu_custom_call.1} parent=211 // pred_check
          %p3473 = pneg %p697
        $region218: #{tpu_custom_call.1} parent=211 // pred_check_branch
          %3475 = sbr.rel (%p3473) target = $region220
        $region219: #{tpu_custom_call.1} parent=211 // pred_region
          %s3476 = sand.u32 %s92, 1
          %s3477 = scalar_lea.sflag [#allocation31], %s3476
          %s3478 = sand.u32 %s682, 1
          %s3479 = smul.addr %s3478, 32
          %s3480 = scalar_lea.vmem [#allocation30], %s3479
          %3481 = dma.done %s3477, 512
        $region220: #{tpu_custom_call.1} parent=211 // pred_fallthru
          _
        // Predicated region
        $region221: #{tpu_custom_call.1} parent=211 // pred_check
          %p3482 = pneg %p723
        $region222: #{tpu_custom_call.1} parent=211 // pred_check_branch
          %3484 = sbr.rel (%p3482) target = $region224
        $region223: #{tpu_custom_call.1} parent=211 // pred_region
          %s3485 = sand.u32 %s92, 1
          %s3486 = scalar_lea.sflag [#allocation31], %s3485
          %s3487 = sand.u32 %s708, 1
          %s3488 = smul.addr %s3487, 32
          %s3489 = scalar_lea.vmem [#allocation32], %s3488
          %3490 = dma.done %s3486, 512
        $region224: #{tpu_custom_call.1} parent=211 // pred_fallthru
          _
        // Predicated region
        $region225: #{tpu_custom_call.1} parent=211 // pred_check
          %p3491 = pneg %p749
        $region226: #{tpu_custom_call.1} parent=211 // pred_check_branch
          %3493 = sbr.rel (%p3491) target = $region228
        $region227: #{tpu_custom_call.1} parent=211 // pred_region
          %s3494 = sand.u32 %s734, 1
          %s3495 = scalar_lea.sflag [#allocation34], %s3494
          %s3496 = sand.u32 %s734, 1
          %s3497 = smul.addr %s3496, 32
          %s3498 = scalar_lea.vmem [#allocation33], %s3497
          %3499 = dma.done %s3495, 512
        $region228: #{tpu_custom_call.1} parent=211 // pred_fallthru
          _
      $region212: #{tpu_custom_call.1} parent=5 // pred_fallthru
        _
    $region6: #{tpu_custom_call.1} parent=1 // loop_footer
      %s90 = sadd.s32 1, %s86
    $region7: #{tpu_custom_call.1} parent=1 // loop_footer_branch
      %85 = sbr.rel target = $region3
    $region8: #{tpu_custom_call.1} parent=1 // loop_exit
      _
    %3500 = vsyncpa [#allocation3], 1
    %s3501 = scalar_lea.sflag [#allocation3], 1
    %3502 = vsyncpa %s3501, 1
    %3503 = vsyncpa [#allocation6], 1
    %3504 = vsyncpa [#allocation9], 1
    %3505 = vsyncpa [#allocation12], 1
    %3506 = vsyncpa [#allocation15], 1
    %3507 = vsyncpa [#allocation18], 1
    %3508 = vsyncpa [#allocation21], 1
    %3509 = vsyncpa [#allocation24], 1
    %3510 = vsyncpa [#allocation27], 1
    %3511 = vsyncpa [#allocation4], 1
    %s3512 = scalar_lea.sflag [#allocation4], 1
    %3513 = vsyncpa %s3512, 1
    %3514 = vsyncpa [#allocation31], 1
    %s3515 = scalar_lea.sflag [#allocation31], 1
    %3516 = vsyncpa %s3515, 1
    %3517 = vsyncpa [#allocation34], 1
    %s3518 = scalar_lea.sflag [#allocation34], 1
    %3519 = vsyncpa %s3518, 1

</llo_original>
